<compile_context>
chip_gen: v6e
topology: v6e:2x2x1
jax: 0.10.0
libtpu: 0.0.40
codegen_flags: <defaults>
</compile_context>

<pallas_src>
import functools

import jax
import jax.numpy as jnp
from jax.experimental import pallas as pl
from jax.experimental.pallas import tpu as pltpu

# ---------------- config (small synthetic BERT) ----------------
SEQ = 8         # sequence length
HID = 32        # hidden size
NH = 4          # attention heads
DH = HID // NH  # head dim
FFN = 64        # FFN intermediate size
LAYERS = 2      # encoder layers
VOCAB = 64      # synthetic vocab size
EPS = 1e-12


# ---------------- fused Pallas kernel ----------------
def fused_reader_kernel(x_ref, wqkv_ref, wo_ref, wf1_ref, wf2_ref,
                        bqkv_ref, vech_ref, bf1_ref, wqa_ref, bqa_ref,
                        score_ref, idx_ref):
    """All encoder layers + QA head + per-pair span reduction for one grid step.

    x_ref:    (B*SEQ, HID) f32 activations for B = n_contexts pairs of one question
    wqkv_ref: (LAYERS, HID, 3*HID) bf16   fused Q|K|V projection
    wo_ref:   (LAYERS, NH, DH, HID) bf16  output projection, pre-split per head
    wf1_ref:  (LAYERS, HID, FFN) bf16
    wf2_ref:  (LAYERS, FFN, HID) bf16
    bqkv_ref: (LAYERS, 1, 3*HID) f32
    vech_ref: (LAYERS, 6, HID) f32        rows: bo, g1, be1, b2, g2, be2
    bf1_ref:  (LAYERS, 1, FFN) f32
    wqa_ref:  (HID, 2) bf16,  bqa_ref: (1, 2) f32
    score_ref/idx_ref: (B, 1, 1) f32/int32 best span prob + flat span index
    """
    BS = x_ref.shape[0]
    B = BS // SEQ
    scale = 1.0 / (DH ** 0.5)

    h = x_ref[...]                                            # (BS, HID) f32

    # ---------------- encoder layers (static unroll; weights stay in VMEM) ---
    for li in range(LAYERS):
        wqkv = wqkv_ref[li]                                   # (HID, 3*HID) bf16
        wo_h = wo_ref[li]                                     # (NH, DH, HID) bf16
        wf1 = wf1_ref[li]                                     # (HID, FFN) bf16
        wf2 = wf2_ref[li]                                     # (FFN, HID) bf16
        bqkv = bqkv_ref[li]                                   # (1, 3*HID) f32
        vecs = vech_ref[li]                                   # (6, HID) f32
        b1 = bf1_ref[li]                                      # (1, FFN) f32
        bo, g1, be1 = vecs[0:1], vecs[1:2], vecs[2:3]
        b2, g2, be2 = vecs[3:4], vecs[4:5], vecs[5:6]

        # fused QKV projection: one (BS, HID) @ (HID, 3*HID) bf16 MXU matmul
        qkv = jnp.dot(h.astype(jnp.bfloat16), wqkv,
                      preferred_element_type=jnp.float32) + bqkv
        q = qkv[:, 0:HID]
        k = qkv[:, HID:2 * HID]
        v = qkv[:, 2 * HID:3 * HID]

        # multi-head attention, batched over the B pairs of this grid step.
        # No concat: each head is accumulated straight through its W_o slice.
        # TODO(synk): no padding/[SEP] attention mask (synthetic tokens).
        attn = jnp.zeros((BS, HID), jnp.float32)
        for hh in range(NH):                                  # static unroll, NH=4
            sl = slice(hh * DH, (hh + 1) * DH)
            qh = q[:, sl].reshape(B, SEQ, DH).astype(jnp.bfloat16)
            kh = k[:, sl].reshape(B, SEQ, DH).astype(jnp.bfloat16)
            vh = v[:, sl].reshape(B, SEQ, DH).astype(jnp.bfloat16)
            s = jnp.einsum('bqd,bkd->bqk', qh, kh,
                           preferred_element_type=jnp.float32) * scale  # (B,S,S)
            s = s - jnp.max(s, axis=-1, keepdims=True)        # f32 softmax
            p = jnp.exp(s)
            # denominator reciprocal on the EUP (approx) -> frees VALU slots
            p = p * pl.reciprocal(jnp.sum(p, axis=-1, keepdims=True), approx=True)
            ctx = jnp.einsum('bqk,bkd->bqd', p.astype(jnp.bfloat16), vh,
                             preferred_element_type=jnp.float32)        # (B,S,DH)
            attn = attn + jnp.dot(ctx.reshape(BS, DH).astype(jnp.bfloat16),
                                  wo_h[hh], preferred_element_type=jnp.float32)
        attn = attn + bo

        # residual + LayerNorm 1 (f32 elementwise)
        h1 = h + attn
        mu = jnp.mean(h1, axis=-1, keepdims=True)
        var = jnp.mean((h1 - mu) ** 2, axis=-1, keepdims=True)
        h1 = (h1 - mu) * jax.lax.rsqrt(var + EPS) * g1 + be1

        # FFN  TODO(synk): tanh-approx GELU (BERT reference uses exact erf GELU)
        f = jnp.dot(h1.astype(jnp.bfloat16), wf1,
                    preferred_element_type=jnp.float32) + b1
        f = jax.nn.gelu(f, approximate=True)
        f = jnp.dot(f.astype(jnp.bfloat16), wf2,
                    preferred_element_type=jnp.float32) + b2

        # residual + LayerNorm 2
        h2 = h1 + f
        mu2 = jnp.mean(h2, axis=-1, keepdims=True)
        var2 = jnp.mean((h2 - mu2) ** 2, axis=-1, keepdims=True)
        h = (h2 - mu2) * jax.lax.rsqrt(var2 + EPS) * g2 + be2

    # ---------------- QA head + in-kernel span reduction ---------------------
    logits = jnp.dot(h.astype(jnp.bfloat16), wqa_ref[...],
                     preferred_element_type=jnp.float32) + bqa_ref[...]  # (BS, 2)
    logits3 = logits.reshape(B, SEQ, 2)
    start = logits3[:, :, 0:1]                                # (B, S, 1)
    end = logits3[:, :, 1:2]                                  # (B, S, 1)

    def softmax_seq(z):   # exact softmax over the sequence (user-visible probs)
        m = jnp.max(z, axis=1, keepdims=True)
        e = jnp.exp(z - m)
        return e / jnp.sum(e, axis=1, keepdims=True)

    ps = softmax_seq(start)                                   # (B, S, 1)
    pe = softmax_seq(end)                                     # (B, S, 1)

    # span[b,i,j] = p_start[b,i] * p_end[b,j]; keep only valid spans j >= i
    span = jnp.einsum('bik,bjk->bij', ps, pe,
                      preferred_element_type=jnp.float32)     # (B, S, S)
    ri = jax.lax.broadcasted_iota(jnp.int32, (B, SEQ, SEQ), 1)
    ci = jax.lax.broadcasted_iota(jnp.int32, (B, SEQ, SEQ), 2)
    span = jnp.where(ci >= ri, span, 0.0)

    # per-pair best span probability and its first (row-major) flat index
    best = jnp.max(jnp.max(span, axis=2, keepdims=True), axis=1, keepdims=True)
    flat_idx = ri * SEQ + ci
    cand = jnp.where(span >= best, flat_idx, SEQ * SEQ)
    best_idx = jnp.min(jnp.min(cand, axis=2, keepdims=True), axis=1, keepdims=True)

    score_ref[...] = best                                     # (B, 1, 1) f32
    idx_ref[...] = best_idx.astype(jnp.int32)                 # (B, 1, 1) i32


# ---------------- pallas_call wrapper (jitted end-to-end) ----------------
def _full_spec(a):
    zeros = (0,) * a.ndim
    return pl.BlockSpec(a.shape, lambda i: zeros)   # whole array, resident in VMEM


@functools.partial(jax.jit, static_argnames=("nq", "nc"))
def _device_forward(params, token_ids, *, nq, nc):
    # embeddings (glue)
    x = params["tok_emb"][token_ids] + params["pos_emb"][None, :, :]  # (B, S, H)
    b_total = nq * nc
    x_flat = x.reshape(b_total * SEQ, HID).astype(jnp.float32)

    weight_args = (params["w_qkv"], params["w_o"], params["w_f1"], params["w_f2"],
                   params["b_qkv"], params["vec_h"], params["b_f1"],
                   params["qa_w"], params["qa_b"])

    in_specs = [pl.BlockSpec((nc * SEQ, HID), lambda i: (i, 0))]
    in_specs += [_full_spec(w) for w in weight_args]

    score, span_idx = pl.pallas_call(
        fused_reader_kernel,
        out_shape=(jax.ShapeDtypeStruct((b_total, 1, 1), jnp.float32),
                   jax.ShapeDtypeStruct((b_total, 1, 1), jnp.int32)),
        grid=(nq,),                                   # one step per question
        in_specs=in_specs,
        out_specs=(pl.BlockSpec((nc, 1, 1), lambda i: (i, 0, 0)),
                   pl.BlockSpec((nc, 1, 1), lambda i: (i, 0, 0))),
        compiler_params=pltpu.CompilerParams(
            dimension_semantics=("parallel",)),       # lets v7x use both TCs
    )(x_flat, *weight_args)

    # per-question argmax over contexts (tiny, on device)
    pair_score = score.reshape(nq, nc)
    pair_span = span_idx.reshape(nq, nc)
    best_ctx = jnp.argmax(pair_score, axis=-1)                              # (nq,)
    best_prob = jnp.take_along_axis(pair_score, best_ctx[:, None], axis=-1)[:, 0]
    best_span = jnp.take_along_axis(pair_span, best_ctx[:, None], axis=-1)[:, 0]
    return best_ctx, best_prob, best_span


# ---------------- synthetic "Reader" model ----------------
def init_params(key):
    def nrm(k, shape, scale=0.02):
        return scale * jax.random.normal(k, shape, dtype=jnp.float32)

    keys = jax.random.split(key, 8)
    zeros_h = jnp.zeros((LAYERS, HID), jnp.float32)
    ones_h = jnp.ones((LAYERS, HID), jnp.float32)
    params = {
        "tok_emb": nrm(keys[0], (VOCAB, HID)),
        "pos_emb": nrm(keys[1], (SEQ, HID)),
        # packed per-layer weight slabs; bf16 for the MXU (f32 accumulation in-kernel)
        "w_qkv": nrm(keys[2], (LAYERS, HID, 3 * HID)).astype(jnp.bfloat16),
        "w_o": nrm(keys[3], (LAYERS, HID, HID)).reshape(
            LAYERS, NH, DH, HID).astype(jnp.bfloat16),          # pre-split per head
        "w_f1": nrm(keys[4], (LAYERS, HID, FFN)).astype(jnp.bfloat16),
        "w_f2": nrm(keys[5], (LAYERS, FFN, HID)).astype(jnp.bfloat16),
        # packed bias / LayerNorm slabs (f32, elementwise path)
        "b_qkv": jnp.zeros((LAYERS, 1, 3 * HID), jnp.float32),
        "vec_h": jnp.stack([zeros_h, ones_h, zeros_h,            # bo, g1, be1
                            zeros_h, ones_h, zeros_h], axis=1),  # b2, g2, be2
        "b_f1": jnp.zeros((LAYERS, 1, FFN), jnp.float32),
        # QA head
        "qa_w": nrm(keys[6], (HID, 2)).astype(jnp.bfloat16),
        "qa_b": jnp.zeros((1, 2), jnp.float32),
    }
    return params


def tokenize_pair(question, context):
    """Deterministic hash 'tokenizer' (no checkpoint / HF tokenizer available)."""
    text = question + " [SEP] " + context
    ids = []
    for i in range(SEQ):
        acc = 0
        for j, c in enumerate(text):
            acc = (acc * 31 + ord(c) * (i + 1) + j) % 100003
        ids.append(acc % VOCAB)
    return ids


def reader_forward(params, batch_questions, contexts):
    """Equivalent of Reader.forward: returns (answers, answers_prob, answers_arg)."""
    nq, nc = len(batch_questions), len(contexts)
    token_ids = jnp.array(
        [tokenize_pair(q, c) for q in batch_questions for c in contexts],
        dtype=jnp.int32)                                        # (nq*nc, SEQ)

    best_ctx, best_prob, best_span = _device_forward(
        params, token_ids, nq=nq, nc=nc)

    # single device sync + single host transfer at the very end
    best_ctx, best_prob, best_span = jax.block_until_ready(
        (best_ctx, best_prob, best_span))
    best_ctx, best_prob, best_span = jax.device_get(
        (best_ctx, best_prob, best_span))

    answers, answers_prob, answers_arg = [], [], []
    for qi in range(nq):
        ci = int(best_ctx[qi])
        si = int(best_span[qi])
        answers.append((ci, si // SEQ, si % SEQ))   # surrogate for answer text
        answers_prob.append(float(best_prob[qi]))
        answers_arg.append(ci)
    return answers, answers_prob, answers_arg


if __name__ == "__main__":
    key = jax.random.PRNGKey(0)
    params = init_params(key)

    batch_questions = ["quem descobriu o brasil", "qual a capital do brasil"]
    contexts = [
        "o brasil foi descoberto por pedro alvares cabral em 1500",
        "brasilia e a capital do brasil desde 1960",
        "o rio amazonas e o maior rio do mundo em volume de agua",
    ]

    answers, answers_prob, answers_arg = reader_forward(
        params, batch_questions, contexts)

    # sanity checks
    assert len(answers) == len(batch_questions)
    assert all(0 <= a < len(contexts) for a in answers_arg)
    assert all(0.0 <= p <= 1.0 for p in answers_prob)
    print("KERNEL_OK")
</pallas_src>

<mosaic_0001>
module attributes {stable_mosaic.version = 11 : i64} {
  func.func @fused_reader_kernel(%arg0: i32, %arg1: memref<24x32xf32, #tpu.memory_space<vmem>>, %arg2: memref<2x32x96xbf16, #tpu.memory_space<vmem>>, %arg3: memref<2x4x8x32xbf16, #tpu.memory_space<vmem>>, %arg4: memref<2x32x64xbf16, #tpu.memory_space<vmem>>, %arg5: memref<2x64x32xbf16, #tpu.memory_space<vmem>>, %arg6: memref<2x1x96xf32, #tpu.memory_space<vmem>>, %arg7: memref<2x6x32xf32, #tpu.memory_space<vmem>>, %arg8: memref<2x1x64xf32, #tpu.memory_space<vmem>>, %arg9: memref<32x2xbf16, #tpu.memory_space<vmem>>, %arg10: memref<1x2xf32, #tpu.memory_space<vmem>>, %arg11: memref<3x1x1xf32, #tpu.memory_space<vmem>>, %arg12: memref<3x1x1xi32, #tpu.memory_space<vmem>>) attributes {dimension_semantics = [#tpu.dimension_semantics<parallel>], iteration_bounds = array<i64: 2>, scalar_prefetch = 0 : i64, scratch_operands = 0 : i64, tpu.core_type = #tpu.core_type<tc>, window_params = [{transform_indices = @transform_0, window_bounds = array<i64: 24, 32>}, {pipeline_mode = #tpu.pipeline_mode<synchronous>, transform_indices = @transform_1, window_bounds = array<i64: 2, 32, 96>}, {pipeline_mode = #tpu.pipeline_mode<synchronous>, transform_indices = @transform_2, window_bounds = array<i64: 2, 4, 8, 32>}, {pipeline_mode = #tpu.pipeline_mode<synchronous>, transform_indices = @transform_3, window_bounds = array<i64: 2, 32, 64>}, {pipeline_mode = #tpu.pipeline_mode<synchronous>, transform_indices = @transform_4, window_bounds = array<i64: 2, 64, 32>}, {pipeline_mode = #tpu.pipeline_mode<synchronous>, transform_indices = @transform_5, window_bounds = array<i64: 2, 1, 96>}, {pipeline_mode = #tpu.pipeline_mode<synchronous>, transform_indices = @transform_6, window_bounds = array<i64: 2, 6, 32>}, {pipeline_mode = #tpu.pipeline_mode<synchronous>, transform_indices = @transform_7, window_bounds = array<i64: 2, 1, 64>}, {pipeline_mode = #tpu.pipeline_mode<synchronous>, transform_indices = @transform_8, window_bounds = array<i64: 32, 2>}, {pipeline_mode = #tpu.pipeline_mode<synchronous>, transform_indices = @transform_9, window_bounds = array<i64: 1, 2>}, {transform_indices = @transform_10, window_bounds = array<i64: 3, 1, 1>}, {transform_indices = @transform_11, window_bounds = array<i64: 3, 1, 1>}]} {
    %c0 = arith.constant 0 : index
    %c0_0 = arith.constant 0 : index
    %0 = vector.load %arg1[%c0, %c0_0] : memref<24x32xf32, #tpu.memory_space<vmem>>, vector<24x32xf32>
    %c0_1 = arith.constant 0 : index
    %c0_2 = arith.constant 0 : index
    %c0_3 = arith.constant 0 : index
    %1 = vector.load %arg2[%c0_1, %c0_2, %c0_3] : memref<2x32x96xbf16, #tpu.memory_space<vmem>>, vector<1x32x96xbf16>
    %2 = vector.shape_cast %1 : vector<1x32x96xbf16> to vector<32x96xbf16>
    %c0_4 = arith.constant 0 : index
    %c0_5 = arith.constant 0 : index
    %c0_6 = arith.constant 0 : index
    %c0_7 = arith.constant 0 : index
    %3 = vector.load %arg3[%c0_4, %c0_5, %c0_6, %c0_7] : memref<2x4x8x32xbf16, #tpu.memory_space<vmem>>, vector<1x4x8x32xbf16>
    %4 = vector.shape_cast %3 : vector<1x4x8x32xbf16> to vector<4x8x32xbf16>
    %c0_8 = arith.constant 0 : index
    %c0_9 = arith.constant 0 : index
    %c0_10 = arith.constant 0 : index
    %5 = vector.load %arg4[%c0_8, %c0_9, %c0_10] : memref<2x32x64xbf16, #tpu.memory_space<vmem>>, vector<1x32x64xbf16>
    %6 = vector.shape_cast %5 : vector<1x32x64xbf16> to vector<32x64xbf16>
    %c0_11 = arith.constant 0 : index
    %c0_12 = arith.constant 0 : index
    %c0_13 = arith.constant 0 : index
    %7 = vector.load %arg5[%c0_11, %c0_12, %c0_13] : memref<2x64x32xbf16, #tpu.memory_space<vmem>>, vector<1x64x32xbf16>
    %8 = vector.shape_cast %7 : vector<1x64x32xbf16> to vector<64x32xbf16>
    %c0_14 = arith.constant 0 : index
    %c0_15 = arith.constant 0 : index
    %c0_16 = arith.constant 0 : index
    %9 = vector.load %arg6[%c0_14, %c0_15, %c0_16] : memref<2x1x96xf32, #tpu.memory_space<vmem>>, vector<1x1x96xf32>
    %10 = vector.shape_cast %9 : vector<1x1x96xf32> to vector<1x96xf32>
    %c0_17 = arith.constant 0 : index
    %c0_18 = arith.constant 0 : index
    %c0_19 = arith.constant 0 : index
    %11 = vector.load %arg7[%c0_17, %c0_18, %c0_19] : memref<2x6x32xf32, #tpu.memory_space<vmem>>, vector<1x6x32xf32>
    %12 = vector.shape_cast %11 : vector<1x6x32xf32> to vector<6x32xf32>
    %c0_20 = arith.constant 0 : index
    %c0_21 = arith.constant 0 : index
    %c0_22 = arith.constant 0 : index
    %13 = vector.load %arg8[%c0_20, %c0_21, %c0_22] : memref<2x1x64xf32, #tpu.memory_space<vmem>>, vector<1x1x64xf32>
    %14 = vector.shape_cast %13 : vector<1x1x64xf32> to vector<1x64xf32>
    %15 = vector.extract_strided_slice %12 {offsets = [0, 0], sizes = [1, 32], strides = [1, 1]} : vector<6x32xf32> to vector<1x32xf32>
    %16 = vector.extract_strided_slice %12 {offsets = [1, 0], sizes = [1, 32], strides = [1, 1]} : vector<6x32xf32> to vector<1x32xf32>
    %17 = vector.extract_strided_slice %12 {offsets = [2, 0], sizes = [1, 32], strides = [1, 1]} : vector<6x32xf32> to vector<1x32xf32>
    %18 = vector.extract_strided_slice %12 {offsets = [3, 0], sizes = [1, 32], strides = [1, 1]} : vector<6x32xf32> to vector<1x32xf32>
    %19 = vector.extract_strided_slice %12 {offsets = [4, 0], sizes = [1, 32], strides = [1, 1]} : vector<6x32xf32> to vector<1x32xf32>
    %20 = vector.extract_strided_slice %12 {offsets = [5, 0], sizes = [1, 32], strides = [1, 1]} : vector<6x32xf32> to vector<1x32xf32>
    %21 = arith.truncf %0 : vector<24x32xf32> to vector<24x32xbf16>
    %cst = arith.constant dense<0.000000e+00> : vector<24x96xf32>
    %22 = tpu.matmul %21, %2, %cst {dimension_numbers = #tpu.dot_dimension_numbers<[1], [0], [0], [1], [0, 0, 1, 1], [], []>} : vector<24x32xbf16>, vector<32x96xbf16>, vector<24x96xf32> -> vector<24x96xf32>
    %23 = vector.broadcast %10 : vector<1x96xf32> to vector<24x96xf32>
    %24 = arith.addf %22, %23 : vector<24x96xf32>
    %25 = vector.extract_strided_slice %24 {offsets = [0, 0], sizes = [24, 32], strides = [1, 1]} : vector<24x96xf32> to vector<24x32xf32>
    %26 = vector.extract_strided_slice %24 {offsets = [0, 32], sizes = [24, 32], strides = [1, 1]} : vector<24x96xf32> to vector<24x32xf32>
    %27 = vector.extract_strided_slice %24 {offsets = [0, 64], sizes = [24, 32], strides = [1, 1]} : vector<24x96xf32> to vector<24x32xf32>
    %cst_23 = arith.constant 0.000000e+00 : f32
    %28 = vector.broadcast %cst_23 : f32 to vector<24x32xf32>
    %29 = vector.extract_strided_slice %25 {offsets = [0, 0], sizes = [24, 8], strides = [1, 1]} : vector<24x32xf32> to vector<24x8xf32>
    %30 = vector.shape_cast %29 : vector<24x8xf32> to vector<3x8x8xf32>
    %31 = arith.truncf %30 : vector<3x8x8xf32> to vector<3x8x8xbf16>
    %32 = vector.extract_strided_slice %26 {offsets = [0, 0], sizes = [24, 8], strides = [1, 1]} : vector<24x32xf32> to vector<24x8xf32>
    %33 = vector.shape_cast %32 : vector<24x8xf32> to vector<3x8x8xf32>
    %34 = arith.truncf %33 : vector<3x8x8xf32> to vector<3x8x8xbf16>
    %35 = vector.extract_strided_slice %27 {offsets = [0, 0], sizes = [24, 8], strides = [1, 1]} : vector<24x32xf32> to vector<24x8xf32>
    %36 = vector.shape_cast %35 : vector<24x8xf32> to vector<3x8x8xf32>
    %37 = arith.truncf %36 : vector<3x8x8xf32> to vector<3x8x8xbf16>
    "tpu.trace_start"() <{level = 10 : i32, message = "bqd,bkd->bqk"}> : () -> ()
    %cst_24 = arith.constant dense<0.000000e+00> : vector<3x8x8xf32>
    %38 = tpu.matmul %31, %34, %cst_24 {dimension_numbers = #tpu.dot_dimension_numbers<[2], [2], [1], [1], [0, 0, 0, 1, 1, 1], [0], [0]>} : vector<3x8x8xbf16>, vector<3x8x8xbf16>, vector<3x8x8xf32> -> vector<3x8x8xf32>
    "tpu.trace_stop"() : () -> ()
    %cst_25 = arith.constant 0.353553385 : f32
    %39 = vector.broadcast %cst_25 : f32 to vector<3x8x8xf32>
    %40 = arith.mulf %38, %39 : vector<3x8x8xf32>
    %cst_26 = arith.constant dense<0xFF800000> : vector<3x8xf32>
    %41 = vector.multi_reduction <maximumf>, %40, %cst_26 [2] : vector<3x8x8xf32> to vector<3x8xf32>
    %42 = vector.shape_cast %41 : vector<3x8xf32> to vector<3x8x1xf32>
    %43 = vector.broadcast %42 : vector<3x8x1xf32> to vector<3x8x8xf32>
    %44 = arith.subf %40, %43 : vector<3x8x8xf32>
    %45 = math.exp %44 : vector<3x8x8xf32>
    %cst_27 = arith.constant dense<0.000000e+00> : vector<3x8xf32>
    %46 = vector.multi_reduction <add>, %45, %cst_27 [2] : vector<3x8x8xf32> to vector<3x8xf32>
    %47 = vector.shape_cast %46 : vector<3x8xf32> to vector<3x8x1xf32>
    %48 = tpu.reciprocal %47 {approx = true} : vector<3x8x1xf32> -> vector<3x8x1xf32>
    %49 = vector.broadcast %48 : vector<3x8x1xf32> to vector<3x8x8xf32>
    %50 = arith.mulf %45, %49 : vector<3x8x8xf32>
    %51 = arith.truncf %50 : vector<3x8x8xf32> to vector<3x8x8xbf16>
    "tpu.trace_start"() <{level = 10 : i32, message = "bqk,bkd->bqd"}> : () -> ()
    %cst_28 = arith.constant dense<0.000000e+00> : vector<3x8x8xf32>
    %52 = tpu.matmul %51, %37, %cst_28 {dimension_numbers = #tpu.dot_dimension_numbers<[2], [1], [1], [2], [0, 0, 0, 1, 1, 2], [0], [0]>} : vector<3x8x8xbf16>, vector<3x8x8xbf16>, vector<3x8x8xf32> -> vector<3x8x8xf32>
    "tpu.trace_stop"() : () -> ()
    %53 = vector.shape_cast %52 : vector<3x8x8xf32> to vector<24x8xf32>
    %54 = arith.truncf %53 : vector<24x8xf32> to vector<24x8xbf16>
    %55 = vector.extract_strided_slice %4 {offsets = [0, 0, 0], sizes = [1, 8, 32], strides = [1, 1, 1]} : vector<4x8x32xbf16> to vector<1x8x32xbf16>
    %56 = vector.shape_cast %55 : vector<1x8x32xbf16> to vector<8x32xbf16>
    %cst_29 = arith.constant dense<0.000000e+00> : vector<24x32xf32>
    %57 = tpu.matmul %54, %56, %cst_29 {dimension_numbers = #tpu.dot_dimension_numbers<[1], [0], [0], [1], [0, 0, 1, 1], [], []>} : vector<24x8xbf16>, vector<8x32xbf16>, vector<24x32xf32> -> vector<24x32xf32>
    %58 = arith.addf %28, %57 : vector<24x32xf32>
    %59 = vector.extract_strided_slice %25 {offsets = [0, 8], sizes = [24, 8], strides = [1, 1]} : vector<24x32xf32> to vector<24x8xf32>
    %60 = vector.shape_cast %59 : vector<24x8xf32> to vector<3x8x8xf32>
    %61 = arith.truncf %60 : vector<3x8x8xf32> to vector<3x8x8xbf16>
    %62 = vector.extract_strided_slice %26 {offsets = [0, 8], sizes = [24, 8], strides = [1, 1]} : vector<24x32xf32> to vector<24x8xf32>
    %63 = vector.shape_cast %62 : vector<24x8xf32> to vector<3x8x8xf32>
    %64 = arith.truncf %63 : vector<3x8x8xf32> to vector<3x8x8xbf16>
    %65 = vector.extract_strided_slice %27 {offsets = [0, 8], sizes = [24, 8], strides = [1, 1]} : vector<24x32xf32> to vector<24x8xf32>
    %66 = vector.shape_cast %65 : vector<24x8xf32> to vector<3x8x8xf32>
    %67 = arith.truncf %66 : vector<3x8x8xf32> to vector<3x8x8xbf16>
    "tpu.trace_start"() <{level = 10 : i32, message = "bqd,bkd->bqk"}> : () -> ()
    %cst_30 = arith.constant dense<0.000000e+00> : vector<3x8x8xf32>
    %68 = tpu.matmul %61, %64, %cst_30 {dimension_numbers = #tpu.dot_dimension_numbers<[2], [2], [1], [1], [0, 0, 0, 1, 1, 1], [0], [0]>} : vector<3x8x8xbf16>, vector<3x8x8xbf16>, vector<3x8x8xf32> -> vector<3x8x8xf32>
    "tpu.trace_stop"() : () -> ()
    %cst_31 = arith.constant 0.353553385 : f32
    %69 = vector.broadcast %cst_31 : f32 to vector<3x8x8xf32>
    %70 = arith.mulf %68, %69 : vector<3x8x8xf32>
    %cst_32 = arith.constant dense<0xFF800000> : vector<3x8xf32>
    %71 = vector.multi_reduction <maximumf>, %70, %cst_32 [2] : vector<3x8x8xf32> to vector<3x8xf32>
    %72 = vector.shape_cast %71 : vector<3x8xf32> to vector<3x8x1xf32>
    %73 = vector.broadcast %72 : vector<3x8x1xf32> to vector<3x8x8xf32>
    %74 = arith.subf %70, %73 : vector<3x8x8xf32>
    %75 = math.exp %74 : vector<3x8x8xf32>
    %cst_33 = arith.constant dense<0.000000e+00> : vector<3x8xf32>
    %76 = vector.multi_reduction <add>, %75, %cst_33 [2] : vector<3x8x8xf32> to vector<3x8xf32>
    %77 = vector.shape_cast %76 : vector<3x8xf32> to vector<3x8x1xf32>
    %78 = tpu.reciprocal %77 {approx = true} : vector<3x8x1xf32> -> vector<3x8x1xf32>
    %79 = vector.broadcast %78 : vector<3x8x1xf32> to vector<3x8x8xf32>
    %80 = arith.mulf %75, %79 : vector<3x8x8xf32>
    %81 = arith.truncf %80 : vector<3x8x8xf32> to vector<3x8x8xbf16>
    "tpu.trace_start"() <{level = 10 : i32, message = "bqk,bkd->bqd"}> : () -> ()
    %cst_34 = arith.constant dense<0.000000e+00> : vector<3x8x8xf32>
    %82 = tpu.matmul %81, %67, %cst_34 {dimension_numbers = #tpu.dot_dimension_numbers<[2], [1], [1], [2], [0, 0, 0, 1, 1, 2], [0], [0]>} : vector<3x8x8xbf16>, vector<3x8x8xbf16>, vector<3x8x8xf32> -> vector<3x8x8xf32>
    "tpu.trace_stop"() : () -> ()
    %83 = vector.shape_cast %82 : vector<3x8x8xf32> to vector<24x8xf32>
    %84 = arith.truncf %83 : vector<24x8xf32> to vector<24x8xbf16>
    %85 = vector.extract_strided_slice %4 {offsets = [1, 0, 0], sizes = [1, 8, 32], strides = [1, 1, 1]} : vector<4x8x32xbf16> to vector<1x8x32xbf16>
    %86 = vector.shape_cast %85 : vector<1x8x32xbf16> to vector<8x32xbf16>
    %cst_35 = arith.constant dense<0.000000e+00> : vector<24x32xf32>
    %87 = tpu.matmul %84, %86, %cst_35 {dimension_numbers = #tpu.dot_dimension_numbers<[1], [0], [0], [1], [0, 0, 1, 1], [], []>} : vector<24x8xbf16>, vector<8x32xbf16>, vector<24x32xf32> -> vector<24x32xf32>
    %88 = arith.addf %58, %87 : vector<24x32xf32>
    %89 = vector.extract_strided_slice %25 {offsets = [0, 16], sizes = [24, 8], strides = [1, 1]} : vector<24x32xf32> to vector<24x8xf32>
    %90 = vector.shape_cast %89 : vector<24x8xf32> to vector<3x8x8xf32>
    %91 = arith.truncf %90 : vector<3x8x8xf32> to vector<3x8x8xbf16>
    %92 = vector.extract_strided_slice %26 {offsets = [0, 16], sizes = [24, 8], strides = [1, 1]} : vector<24x32xf32> to vector<24x8xf32>
    %93 = vector.shape_cast %92 : vector<24x8xf32> to vector<3x8x8xf32>
    %94 = arith.truncf %93 : vector<3x8x8xf32> to vector<3x8x8xbf16>
    %95 = vector.extract_strided_slice %27 {offsets = [0, 16], sizes = [24, 8], strides = [1, 1]} : vector<24x32xf32> to vector<24x8xf32>
    %96 = vector.shape_cast %95 : vector<24x8xf32> to vector<3x8x8xf32>
    %97 = arith.truncf %96 : vector<3x8x8xf32> to vector<3x8x8xbf16>
    "tpu.trace_start"() <{level = 10 : i32, message = "bqd,bkd->bqk"}> : () -> ()
    %cst_36 = arith.constant dense<0.000000e+00> : vector<3x8x8xf32>
    %98 = tpu.matmul %91, %94, %cst_36 {dimension_numbers = #tpu.dot_dimension_numbers<[2], [2], [1], [1], [0, 0, 0, 1, 1, 1], [0], [0]>} : vector<3x8x8xbf16>, vector<3x8x8xbf16>, vector<3x8x8xf32> -> vector<3x8x8xf32>
    "tpu.trace_stop"() : () -> ()
    %cst_37 = arith.constant 0.353553385 : f32
    %99 = vector.broadcast %cst_37 : f32 to vector<3x8x8xf32>
    %100 = arith.mulf %98, %99 : vector<3x8x8xf32>
    %cst_38 = arith.constant dense<0xFF800000> : vector<3x8xf32>
    %101 = vector.multi_reduction <maximumf>, %100, %cst_38 [2] : vector<3x8x8xf32> to vector<3x8xf32>
    %102 = vector.shape_cast %101 : vector<3x8xf32> to vector<3x8x1xf32>
    %103 = vector.broadcast %102 : vector<3x8x1xf32> to vector<3x8x8xf32>
    %104 = arith.subf %100, %103 : vector<3x8x8xf32>
    %105 = math.exp %104 : vector<3x8x8xf32>
    %cst_39 = arith.constant dense<0.000000e+00> : vector<3x8xf32>
    %106 = vector.multi_reduction <add>, %105, %cst_39 [2] : vector<3x8x8xf32> to vector<3x8xf32>
    %107 = vector.shape_cast %106 : vector<3x8xf32> to vector<3x8x1xf32>
    %108 = tpu.reciprocal %107 {approx = true} : vector<3x8x1xf32> -> vector<3x8x1xf32>
    %109 = vector.broadcast %108 : vector<3x8x1xf32> to vector<3x8x8xf32>
    %110 = arith.mulf %105, %109 : vector<3x8x8xf32>
    %111 = arith.truncf %110 : vector<3x8x8xf32> to vector<3x8x8xbf16>
    "tpu.trace_start"() <{level = 10 : i32, message = "bqk,bkd->bqd"}> : () -> ()
    %cst_40 = arith.constant dense<0.000000e+00> : vector<3x8x8xf32>
    %112 = tpu.matmul %111, %97, %cst_40 {dimension_numbers = #tpu.dot_dimension_numbers<[2], [1], [1], [2], [0, 0, 0, 1, 1, 2], [0], [0]>} : vector<3x8x8xbf16>, vector<3x8x8xbf16>, vector<3x8x8xf32> -> vector<3x8x8xf32>
    "tpu.trace_stop"() : () -> ()
    %113 = vector.shape_cast %112 : vector<3x8x8xf32> to vector<24x8xf32>
    %114 = arith.truncf %113 : vector<24x8xf32> to vector<24x8xbf16>
    %115 = vector.extract_strided_slice %4 {offsets = [2, 0, 0], sizes = [1, 8, 32], strides = [1, 1, 1]} : vector<4x8x32xbf16> to vector<1x8x32xbf16>
    %116 = vector.shape_cast %115 : vector<1x8x32xbf16> to vector<8x32xbf16>
    %cst_41 = arith.constant dense<0.000000e+00> : vector<24x32xf32>
    %117 = tpu.matmul %114, %116, %cst_41 {dimension_numbers = #tpu.dot_dimension_numbers<[1], [0], [0], [1], [0, 0, 1, 1], [], []>} : vector<24x8xbf16>, vector<8x32xbf16>, vector<24x32xf32> -> vector<24x32xf32>
    %118 = arith.addf %88, %117 : vector<24x32xf32>
    %119 = vector.extract_strided_slice %25 {offsets = [0, 24], sizes = [24, 8], strides = [1, 1]} : vector<24x32xf32> to vector<24x8xf32>
    %120 = vector.shape_cast %119 : vector<24x8xf32> to vector<3x8x8xf32>
    %121 = arith.truncf %120 : vector<3x8x8xf32> to vector<3x8x8xbf16>
    %122 = vector.extract_strided_slice %26 {offsets = [0, 24], sizes = [24, 8], strides = [1, 1]} : vector<24x32xf32> to vector<24x8xf32>
    %123 = vector.shape_cast %122 : vector<24x8xf32> to vector<3x8x8xf32>
    %124 = arith.truncf %123 : vector<3x8x8xf32> to vector<3x8x8xbf16>
    %125 = vector.extract_strided_slice %27 {offsets = [0, 24], sizes = [24, 8], strides = [1, 1]} : vector<24x32xf32> to vector<24x8xf32>
    %126 = vector.shape_cast %125 : vector<24x8xf32> to vector<3x8x8xf32>
    %127 = arith.truncf %126 : vector<3x8x8xf32> to vector<3x8x8xbf16>
    "tpu.trace_start"() <{level = 10 : i32, message = "bqd,bkd->bqk"}> : () -> ()
    %cst_42 = arith.constant dense<0.000000e+00> : vector<3x8x8xf32>
    %128 = tpu.matmul %121, %124, %cst_42 {dimension_numbers = #tpu.dot_dimension_numbers<[2], [2], [1], [1], [0, 0, 0, 1, 1, 1], [0], [0]>} : vector<3x8x8xbf16>, vector<3x8x8xbf16>, vector<3x8x8xf32> -> vector<3x8x8xf32>
    "tpu.trace_stop"() : () -> ()
    %cst_43 = arith.constant 0.353553385 : f32
    %129 = vector.broadcast %cst_43 : f32 to vector<3x8x8xf32>
    %130 = arith.mulf %128, %129 : vector<3x8x8xf32>
    %cst_44 = arith.constant dense<0xFF800000> : vector<3x8xf32>
    %131 = vector.multi_reduction <maximumf>, %130, %cst_44 [2] : vector<3x8x8xf32> to vector<3x8xf32>
    %132 = vector.shape_cast %131 : vector<3x8xf32> to vector<3x8x1xf32>
    %133 = vector.broadcast %132 : vector<3x8x1xf32> to vector<3x8x8xf32>
    %134 = arith.subf %130, %133 : vector<3x8x8xf32>
    %135 = math.exp %134 : vector<3x8x8xf32>
    %cst_45 = arith.constant dense<0.000000e+00> : vector<3x8xf32>
    %136 = vector.multi_reduction <add>, %135, %cst_45 [2] : vector<3x8x8xf32> to vector<3x8xf32>
    %137 = vector.shape_cast %136 : vector<3x8xf32> to vector<3x8x1xf32>
    %138 = tpu.reciprocal %137 {approx = true} : vector<3x8x1xf32> -> vector<3x8x1xf32>
    %139 = vector.broadcast %138 : vector<3x8x1xf32> to vector<3x8x8xf32>
    %140 = arith.mulf %135, %139 : vector<3x8x8xf32>
    %141 = arith.truncf %140 : vector<3x8x8xf32> to vector<3x8x8xbf16>
    "tpu.trace_start"() <{level = 10 : i32, message = "bqk,bkd->bqd"}> : () -> ()
    %cst_46 = arith.constant dense<0.000000e+00> : vector<3x8x8xf32>
    %142 = tpu.matmul %141, %127, %cst_46 {dimension_numbers = #tpu.dot_dimension_numbers<[2], [1], [1], [2], [0, 0, 0, 1, 1, 2], [0], [0]>} : vector<3x8x8xbf16>, vector<3x8x8xbf16>, vector<3x8x8xf32> -> vector<3x8x8xf32>
    "tpu.trace_stop"() : () -> ()
    %143 = vector.shape_cast %142 : vector<3x8x8xf32> to vector<24x8xf32>
    %144 = arith.truncf %143 : vector<24x8xf32> to vector<24x8xbf16>
    %145 = vector.extract_strided_slice %4 {offsets = [3, 0, 0], sizes = [1, 8, 32], strides = [1, 1, 1]} : vector<4x8x32xbf16> to vector<1x8x32xbf16>
    %146 = vector.shape_cast %145 : vector<1x8x32xbf16> to vector<8x32xbf16>
    %cst_47 = arith.constant dense<0.000000e+00> : vector<24x32xf32>
    %147 = tpu.matmul %144, %146, %cst_47 {dimension_numbers = #tpu.dot_dimension_numbers<[1], [0], [0], [1], [0, 0, 1, 1], [], []>} : vector<24x8xbf16>, vector<8x32xbf16>, vector<24x32xf32> -> vector<24x32xf32>
    %148 = arith.addf %118, %147 : vector<24x32xf32>
    %149 = vector.broadcast %15 : vector<1x32xf32> to vector<24x32xf32>
    %150 = arith.addf %148, %149 : vector<24x32xf32>
    %151 = arith.addf %0, %150 : vector<24x32xf32>
    %cst_48 = arith.constant dense<0.000000e+00> : vector<24xf32>
    %152 = vector.multi_reduction <add>, %151, %cst_48 [1] : vector<24x32xf32> to vector<24xf32>
    %153 = vector.shape_cast %152 : vector<24xf32> to vector<24x1xf32>
    %cst_49 = arith.constant 3.200000e+01 : f32
    %154 = vector.broadcast %cst_49 : f32 to vector<24x1xf32>
    %155 = arith.divf %153, %154 : vector<24x1xf32>
    %156 = vector.broadcast %155 : vector<24x1xf32> to vector<24x32xf32>
    %157 = arith.subf %151, %156 : vector<24x32xf32>
    %158 = arith.mulf %157, %157 : vector<24x32xf32>
    %cst_50 = arith.constant dense<0.000000e+00> : vector<24xf32>
    %159 = vector.multi_reduction <add>, %158, %cst_50 [1] : vector<24x32xf32> to vector<24xf32>
    %160 = vector.shape_cast %159 : vector<24xf32> to vector<24x1xf32>
    %cst_51 = arith.constant 3.200000e+01 : f32
    %161 = vector.broadcast %cst_51 : f32 to vector<24x1xf32>
    %162 = arith.divf %160, %161 : vector<24x1xf32>
    %163 = vector.broadcast %155 : vector<24x1xf32> to vector<24x32xf32>
    %164 = arith.subf %151, %163 : vector<24x32xf32>
    %cst_52 = arith.constant 9.99999996E-13 : f32
    %165 = vector.broadcast %cst_52 : f32 to vector<24x1xf32>
    %166 = arith.addf %162, %165 : vector<24x1xf32>
    %167 = math.rsqrt %166 : vector<24x1xf32>
    %168 = vector.broadcast %167 : vector<24x1xf32> to vector<24x32xf32>
    %169 = arith.mulf %164, %168 : vector<24x32xf32>
    %170 = vector.broadcast %16 : vector<1x32xf32> to vector<24x32xf32>
    %171 = arith.mulf %169, %170 : vector<24x32xf32>
    %172 = vector.broadcast %17 : vector<1x32xf32> to vector<24x32xf32>
    %173 = arith.addf %171, %172 : vector<24x32xf32>
    %174 = arith.truncf %173 : vector<24x32xf32> to vector<24x32xbf16>
    %cst_53 = arith.constant dense<0.000000e+00> : vector<24x64xf32>
    %175 = tpu.matmul %174, %6, %cst_53 {dimension_numbers = #tpu.dot_dimension_numbers<[1], [0], [0], [1], [0, 0, 1, 1], [], []>} : vector<24x32xbf16>, vector<32x64xbf16>, vector<24x64xf32> -> vector<24x64xf32>
    %176 = vector.broadcast %14 : vector<1x64xf32> to vector<24x64xf32>
    %177 = arith.addf %175, %176 : vector<24x64xf32>
    %178 = arith.mulf %177, %177 : vector<24x64xf32>
    %179 = arith.mulf %177, %178 : vector<24x64xf32>
    %cst_54 = arith.constant 4.471500e-02 : f32
    %180 = vector.broadcast %cst_54 : f32 to vector<24x64xf32>
    %181 = arith.mulf %180, %179 : vector<24x64xf32>
    %182 = arith.addf %177, %181 : vector<24x64xf32>
    %cst_55 = arith.constant 0.797884583 : f32
    %183 = vector.broadcast %cst_55 : f32 to vector<24x64xf32>
    %184 = arith.mulf %183, %182 : vector<24x64xf32>
    %185 = math.tanh %184 : vector<24x64xf32>
    %cst_56 = arith.constant 1.000000e+00 : f32
    %186 = vector.broadcast %cst_56 : f32 to vector<24x64xf32>
    %187 = arith.addf %186, %185 : vector<24x64xf32>
    %cst_57 = arith.constant 5.000000e-01 : f32
    %188 = vector.broadcast %cst_57 : f32 to vector<24x64xf32>
    %189 = arith.mulf %188, %187 : vector<24x64xf32>
    %190 = arith.mulf %177, %189 : vector<24x64xf32>
    %191 = arith.truncf %190 : vector<24x64xf32> to vector<24x64xbf16>
    %cst_58 = arith.constant dense<0.000000e+00> : vector<24x32xf32>
    %192 = tpu.matmul %191, %8, %cst_58 {dimension_numbers = #tpu.dot_dimension_numbers<[1], [0], [0], [1], [0, 0, 1, 1], [], []>} : vector<24x64xbf16>, vector<64x32xbf16>, vector<24x32xf32> -> vector<24x32xf32>
    %193 = vector.broadcast %18 : vector<1x32xf32> to vector<24x32xf32>
    %194 = arith.addf %192, %193 : vector<24x32xf32>
    %195 = arith.addf %173, %194 : vector<24x32xf32>
    %cst_59 = arith.constant dense<0.000000e+00> : vector<24xf32>
    %196 = vector.multi_reduction <add>, %195, %cst_59 [1] : vector<24x32xf32> to vector<24xf32>
    %197 = vector.shape_cast %196 : vector<24xf32> to vector<24x1xf32>
    %cst_60 = arith.constant 3.200000e+01 : f32
    %198 = vector.broadcast %cst_60 : f32 to vector<24x1xf32>
    %199 = arith.divf %197, %198 : vector<24x1xf32>
    %200 = vector.broadcast %199 : vector<24x1xf32> to vector<24x32xf32>
    %201 = arith.subf %195, %200 : vector<24x32xf32>
    %202 = arith.mulf %201, %201 : vector<24x32xf32>
    %cst_61 = arith.constant dense<0.000000e+00> : vector<24xf32>
    %203 = vector.multi_reduction <add>, %202, %cst_61 [1] : vector<24x32xf32> to vector<24xf32>
    %204 = vector.shape_cast %203 : vector<24xf32> to vector<24x1xf32>
    %cst_62 = arith.constant 3.200000e+01 : f32
    %205 = vector.broadcast %cst_62 : f32 to vector<24x1xf32>
    %206 = arith.divf %204, %205 : vector<24x1xf32>
    %207 = vector.broadcast %199 : vector<24x1xf32> to vector<24x32xf32>
    %208 = arith.subf %195, %207 : vector<24x32xf32>
    %cst_63 = arith.constant 9.99999996E-13 : f32
    %209 = vector.broadcast %cst_63 : f32 to vector<24x1xf32>
    %210 = arith.addf %206, %209 : vector<24x1xf32>
    %211 = math.rsqrt %210 : vector<24x1xf32>
    %212 = vector.broadcast %211 : vector<24x1xf32> to vector<24x32xf32>
    %213 = arith.mulf %208, %212 : vector<24x32xf32>
    %214 = vector.broadcast %19 : vector<1x32xf32> to vector<24x32xf32>
    %215 = arith.mulf %213, %214 : vector<24x32xf32>
    %216 = vector.broadcast %20 : vector<1x32xf32> to vector<24x32xf32>
    %217 = arith.addf %215, %216 : vector<24x32xf32>
    %c1 = arith.constant 1 : index
    %c0_64 = arith.constant 0 : index
    %c0_65 = arith.constant 0 : index
    %218 = vector.load %arg2[%c1, %c0_64, %c0_65] : memref<2x32x96xbf16, #tpu.memory_space<vmem>>, vector<1x32x96xbf16>
    %219 = vector.shape_cast %218 : vector<1x32x96xbf16> to vector<32x96xbf16>
    %c1_66 = arith.constant 1 : index
    %c0_67 = arith.constant 0 : index
    %c0_68 = arith.constant 0 : index
    %c0_69 = arith.constant 0 : index
    %220 = vector.load %arg3[%c1_66, %c0_67, %c0_68, %c0_69] : memref<2x4x8x32xbf16, #tpu.memory_space<vmem>>, vector<1x4x8x32xbf16>
    %221 = vector.shape_cast %220 : vector<1x4x8x32xbf16> to vector<4x8x32xbf16>
    %c1_70 = arith.constant 1 : index
    %c0_71 = arith.constant 0 : index
    %c0_72 = arith.constant 0 : index
    %222 = vector.load %arg4[%c1_70, %c0_71, %c0_72] : memref<2x32x64xbf16, #tpu.memory_space<vmem>>, vector<1x32x64xbf16>
    %223 = vector.shape_cast %222 : vector<1x32x64xbf16> to vector<32x64xbf16>
    %c1_73 = arith.constant 1 : index
    %c0_74 = arith.constant 0 : index
    %c0_75 = arith.constant 0 : index
    %224 = vector.load %arg5[%c1_73, %c0_74, %c0_75] : memref<2x64x32xbf16, #tpu.memory_space<vmem>>, vector<1x64x32xbf16>
    %225 = vector.shape_cast %224 : vector<1x64x32xbf16> to vector<64x32xbf16>
    %c1_76 = arith.constant 1 : index
    %c0_77 = arith.constant 0 : index
    %c0_78 = arith.constant 0 : index
    %226 = vector.load %arg6[%c1_76, %c0_77, %c0_78] : memref<2x1x96xf32, #tpu.memory_space<vmem>>, vector<1x1x96xf32>
    %227 = vector.shape_cast %226 : vector<1x1x96xf32> to vector<1x96xf32>
    %c1_79 = arith.constant 1 : index
    %c0_80 = arith.constant 0 : index
    %c0_81 = arith.constant 0 : index
    %228 = vector.load %arg7[%c1_79, %c0_80, %c0_81] : memref<2x6x32xf32, #tpu.memory_space<vmem>>, vector<1x6x32xf32>
    %229 = vector.shape_cast %228 : vector<1x6x32xf32> to vector<6x32xf32>
    %c1_82 = arith.constant 1 : index
    %c0_83 = arith.constant 0 : index
    %c0_84 = arith.constant 0 : index
    %230 = vector.load %arg8[%c1_82, %c0_83, %c0_84] : memref<2x1x64xf32, #tpu.memory_space<vmem>>, vector<1x1x64xf32>
    %231 = vector.shape_cast %230 : vector<1x1x64xf32> to vector<1x64xf32>
    %232 = vector.extract_strided_slice %229 {offsets = [0, 0], sizes = [1, 32], strides = [1, 1]} : vector<6x32xf32> to vector<1x32xf32>
    %233 = vector.extract_strided_slice %229 {offsets = [1, 0], sizes = [1, 32], strides = [1, 1]} : vector<6x32xf32> to vector<1x32xf32>
    %234 = vector.extract_strided_slice %229 {offsets = [2, 0], sizes = [1, 32], strides = [1, 1]} : vector<6x32xf32> to vector<1x32xf32>
    %235 = vector.extract_strided_slice %229 {offsets = [3, 0], sizes = [1, 32], strides = [1, 1]} : vector<6x32xf32> to vector<1x32xf32>
    %236 = vector.extract_strided_slice %229 {offsets = [4, 0], sizes = [1, 32], strides = [1, 1]} : vector<6x32xf32> to vector<1x32xf32>
    %237 = vector.extract_strided_slice %229 {offsets = [5, 0], sizes = [1, 32], strides = [1, 1]} : vector<6x32xf32> to vector<1x32xf32>
    %238 = arith.truncf %217 : vector<24x32xf32> to vector<24x32xbf16>
    %cst_85 = arith.constant dense<0.000000e+00> : vector<24x96xf32>
    %239 = tpu.matmul %238, %219, %cst_85 {dimension_numbers = #tpu.dot_dimension_numbers<[1], [0], [0], [1], [0, 0, 1, 1], [], []>} : vector<24x32xbf16>, vector<32x96xbf16>, vector<24x96xf32> -> vector<24x96xf32>
    %240 = vector.broadcast %227 : vector<1x96xf32> to vector<24x96xf32>
    %241 = arith.addf %239, %240 : vector<24x96xf32>
    %242 = vector.extract_strided_slice %241 {offsets = [0, 0], sizes = [24, 32], strides = [1, 1]} : vector<24x96xf32> to vector<24x32xf32>
    %243 = vector.extract_strided_slice %241 {offsets = [0, 32], sizes = [24, 32], strides = [1, 1]} : vector<24x96xf32> to vector<24x32xf32>
    %244 = vector.extract_strided_slice %241 {offsets = [0, 64], sizes = [24, 32], strides = [1, 1]} : vector<24x96xf32> to vector<24x32xf32>
    %cst_86 = arith.constant 0.000000e+00 : f32
    %245 = vector.broadcast %cst_86 : f32 to vector<24x32xf32>
    %246 = vector.extract_strided_slice %242 {offsets = [0, 0], sizes = [24, 8], strides = [1, 1]} : vector<24x32xf32> to vector<24x8xf32>
    %247 = vector.shape_cast %246 : vector<24x8xf32> to vector<3x8x8xf32>
    %248 = arith.truncf %247 : vector<3x8x8xf32> to vector<3x8x8xbf16>
    %249 = vector.extract_strided_slice %243 {offsets = [0, 0], sizes = [24, 8], strides = [1, 1]} : vector<24x32xf32> to vector<24x8xf32>
    %250 = vector.shape_cast %249 : vector<24x8xf32> to vector<3x8x8xf32>
    %251 = arith.truncf %250 : vector<3x8x8xf32> to vector<3x8x8xbf16>
    %252 = vector.extract_strided_slice %244 {offsets = [0, 0], sizes = [24, 8], strides = [1, 1]} : vector<24x32xf32> to vector<24x8xf32>
    %253 = vector.shape_cast %252 : vector<24x8xf32> to vector<3x8x8xf32>
    %254 = arith.truncf %253 : vector<3x8x8xf32> to vector<3x8x8xbf16>
    "tpu.trace_start"() <{level = 10 : i32, message = "bqd,bkd->bqk"}> : () -> ()
    %cst_87 = arith.constant dense<0.000000e+00> : vector<3x8x8xf32>
    %255 = tpu.matmul %248, %251, %cst_87 {dimension_numbers = #tpu.dot_dimension_numbers<[2], [2], [1], [1], [0, 0, 0, 1, 1, 1], [0], [0]>} : vector<3x8x8xbf16>, vector<3x8x8xbf16>, vector<3x8x8xf32> -> vector<3x8x8xf32>
    "tpu.trace_stop"() : () -> ()
    %cst_88 = arith.constant 0.353553385 : f32
    %256 = vector.broadcast %cst_88 : f32 to vector<3x8x8xf32>
    %257 = arith.mulf %255, %256 : vector<3x8x8xf32>
    %cst_89 = arith.constant dense<0xFF800000> : vector<3x8xf32>
    %258 = vector.multi_reduction <maximumf>, %257, %cst_89 [2] : vector<3x8x8xf32> to vector<3x8xf32>
    %259 = vector.shape_cast %258 : vector<3x8xf32> to vector<3x8x1xf32>
    %260 = vector.broadcast %259 : vector<3x8x1xf32> to vector<3x8x8xf32>
    %261 = arith.subf %257, %260 : vector<3x8x8xf32>
    %262 = math.exp %261 : vector<3x8x8xf32>
    %cst_90 = arith.constant dense<0.000000e+00> : vector<3x8xf32>
    %263 = vector.multi_reduction <add>, %262, %cst_90 [2] : vector<3x8x8xf32> to vector<3x8xf32>
    %264 = vector.shape_cast %263 : vector<3x8xf32> to vector<3x8x1xf32>
    %265 = tpu.reciprocal %264 {approx = true} : vector<3x8x1xf32> -> vector<3x8x1xf32>
    %266 = vector.broadcast %265 : vector<3x8x1xf32> to vector<3x8x8xf32>
    %267 = arith.mulf %262, %266 : vector<3x8x8xf32>
    %268 = arith.truncf %267 : vector<3x8x8xf32> to vector<3x8x8xbf16>
    "tpu.trace_start"() <{level = 10 : i32, message = "bqk,bkd->bqd"}> : () -> ()
    %cst_91 = arith.constant dense<0.000000e+00> : vector<3x8x8xf32>
    %269 = tpu.matmul %268, %254, %cst_91 {dimension_numbers = #tpu.dot_dimension_numbers<[2], [1], [1], [2], [0, 0, 0, 1, 1, 2], [0], [0]>} : vector<3x8x8xbf16>, vector<3x8x8xbf16>, vector<3x8x8xf32> -> vector<3x8x8xf32>
    "tpu.trace_stop"() : () -> ()
    %270 = vector.shape_cast %269 : vector<3x8x8xf32> to vector<24x8xf32>
    %271 = arith.truncf %270 : vector<24x8xf32> to vector<24x8xbf16>
    %272 = vector.extract_strided_slice %221 {offsets = [0, 0, 0], sizes = [1, 8, 32], strides = [1, 1, 1]} : vector<4x8x32xbf16> to vector<1x8x32xbf16>
    %273 = vector.shape_cast %272 : vector<1x8x32xbf16> to vector<8x32xbf16>
    %cst_92 = arith.constant dense<0.000000e+00> : vector<24x32xf32>
    %274 = tpu.matmul %271, %273, %cst_92 {dimension_numbers = #tpu.dot_dimension_numbers<[1], [0], [0], [1], [0, 0, 1, 1], [], []>} : vector<24x8xbf16>, vector<8x32xbf16>, vector<24x32xf32> -> vector<24x32xf32>
    %275 = arith.addf %245, %274 : vector<24x32xf32>
    %276 = vector.extract_strided_slice %242 {offsets = [0, 8], sizes = [24, 8], strides = [1, 1]} : vector<24x32xf32> to vector<24x8xf32>
    %277 = vector.shape_cast %276 : vector<24x8xf32> to vector<3x8x8xf32>
    %278 = arith.truncf %277 : vector<3x8x8xf32> to vector<3x8x8xbf16>
    %279 = vector.extract_strided_slice %243 {offsets = [0, 8], sizes = [24, 8], strides = [1, 1]} : vector<24x32xf32> to vector<24x8xf32>
    %280 = vector.shape_cast %279 : vector<24x8xf32> to vector<3x8x8xf32>
    %281 = arith.truncf %280 : vector<3x8x8xf32> to vector<3x8x8xbf16>
    %282 = vector.extract_strided_slice %244 {offsets = [0, 8], sizes = [24, 8], strides = [1, 1]} : vector<24x32xf32> to vector<24x8xf32>
    %283 = vector.shape_cast %282 : vector<24x8xf32> to vector<3x8x8xf32>
    %284 = arith.truncf %283 : vector<3x8x8xf32> to vector<3x8x8xbf16>
    "tpu.trace_start"() <{level = 10 : i32, message = "bqd,bkd->bqk"}> : () -> ()
    %cst_93 = arith.constant dense<0.000000e+00> : vector<3x8x8xf32>
    %285 = tpu.matmul %278, %281, %cst_93 {dimension_numbers = #tpu.dot_dimension_numbers<[2], [2], [1], [1], [0, 0, 0, 1, 1, 1], [0], [0]>} : vector<3x8x8xbf16>, vector<3x8x8xbf16>, vector<3x8x8xf32> -> vector<3x8x8xf32>
    "tpu.trace_stop"() : () -> ()
    %cst_94 = arith.constant 0.353553385 : f32
    %286 = vector.broadcast %cst_94 : f32 to vector<3x8x8xf32>
    %287 = arith.mulf %285, %286 : vector<3x8x8xf32>
    %cst_95 = arith.constant dense<0xFF800000> : vector<3x8xf32>
    %288 = vector.multi_reduction <maximumf>, %287, %cst_95 [2] : vector<3x8x8xf32> to vector<3x8xf32>
    %289 = vector.shape_cast %288 : vector<3x8xf32> to vector<3x8x1xf32>
    %290 = vector.broadcast %289 : vector<3x8x1xf32> to vector<3x8x8xf32>
    %291 = arith.subf %287, %290 : vector<3x8x8xf32>
    %292 = math.exp %291 : vector<3x8x8xf32>
    %cst_96 = arith.constant dense<0.000000e+00> : vector<3x8xf32>
    %293 = vector.multi_reduction <add>, %292, %cst_96 [2] : vector<3x8x8xf32> to vector<3x8xf32>
    %294 = vector.shape_cast %293 : vector<3x8xf32> to vector<3x8x1xf32>
    %295 = tpu.reciprocal %294 {approx = true} : vector<3x8x1xf32> -> vector<3x8x1xf32>
    %296 = vector.broadcast %295 : vector<3x8x1xf32> to vector<3x8x8xf32>
    %297 = arith.mulf %292, %296 : vector<3x8x8xf32>
    %298 = arith.truncf %297 : vector<3x8x8xf32> to vector<3x8x8xbf16>
    "tpu.trace_start"() <{level = 10 : i32, message = "bqk,bkd->bqd"}> : () -> ()
    %cst_97 = arith.constant dense<0.000000e+00> : vector<3x8x8xf32>
    %299 = tpu.matmul %298, %284, %cst_97 {dimension_numbers = #tpu.dot_dimension_numbers<[2], [1], [1], [2], [0, 0, 0, 1, 1, 2], [0], [0]>} : vector<3x8x8xbf16>, vector<3x8x8xbf16>, vector<3x8x8xf32> -> vector<3x8x8xf32>
    "tpu.trace_stop"() : () -> ()
    %300 = vector.shape_cast %299 : vector<3x8x8xf32> to vector<24x8xf32>
    %301 = arith.truncf %300 : vector<24x8xf32> to vector<24x8xbf16>
    %302 = vector.extract_strided_slice %221 {offsets = [1, 0, 0], sizes = [1, 8, 32], strides = [1, 1, 1]} : vector<4x8x32xbf16> to vector<1x8x32xbf16>
    %303 = vector.shape_cast %302 : vector<1x8x32xbf16> to vector<8x32xbf16>
    %cst_98 = arith.constant dense<0.000000e+00> : vector<24x32xf32>
    %304 = tpu.matmul %301, %303, %cst_98 {dimension_numbers = #tpu.dot_dimension_numbers<[1], [0], [0], [1], [0, 0, 1, 1], [], []>} : vector<24x8xbf16>, vector<8x32xbf16>, vector<24x32xf32> -> vector<24x32xf32>
    %305 = arith.addf %275, %304 : vector<24x32xf32>
    %306 = vector.extract_strided_slice %242 {offsets = [0, 16], sizes = [24, 8], strides = [1, 1]} : vector<24x32xf32> to vector<24x8xf32>
    %307 = vector.shape_cast %306 : vector<24x8xf32> to vector<3x8x8xf32>
    %308 = arith.truncf %307 : vector<3x8x8xf32> to vector<3x8x8xbf16>
    %309 = vector.extract_strided_slice %243 {offsets = [0, 16], sizes = [24, 8], strides = [1, 1]} : vector<24x32xf32> to vector<24x8xf32>
    %310 = vector.shape_cast %309 : vector<24x8xf32> to vector<3x8x8xf32>
    %311 = arith.truncf %310 : vector<3x8x8xf32> to vector<3x8x8xbf16>
    %312 = vector.extract_strided_slice %244 {offsets = [0, 16], sizes = [24, 8], strides = [1, 1]} : vector<24x32xf32> to vector<24x8xf32>
    %313 = vector.shape_cast %312 : vector<24x8xf32> to vector<3x8x8xf32>
    %314 = arith.truncf %313 : vector<3x8x8xf32> to vector<3x8x8xbf16>
    "tpu.trace_start"() <{level = 10 : i32, message = "bqd,bkd->bqk"}> : () -> ()
    %cst_99 = arith.constant dense<0.000000e+00> : vector<3x8x8xf32>
    %315 = tpu.matmul %308, %311, %cst_99 {dimension_numbers = #tpu.dot_dimension_numbers<[2], [2], [1], [1], [0, 0, 0, 1, 1, 1], [0], [0]>} : vector<3x8x8xbf16>, vector<3x8x8xbf16>, vector<3x8x8xf32> -> vector<3x8x8xf32>
    "tpu.trace_stop"() : () -> ()
    %cst_100 = arith.constant 0.353553385 : f32
    %316 = vector.broadcast %cst_100 : f32 to vector<3x8x8xf32>
    %317 = arith.mulf %315, %316 : vector<3x8x8xf32>
    %cst_101 = arith.constant dense<0xFF800000> : vector<3x8xf32>
    %318 = vector.multi_reduction <maximumf>, %317, %cst_101 [2] : vector<3x8x8xf32> to vector<3x8xf32>
    %319 = vector.shape_cast %318 : vector<3x8xf32> to vector<3x8x1xf32>
    %320 = vector.broadcast %319 : vector<3x8x1xf32> to vector<3x8x8xf32>
    %321 = arith.subf %317, %320 : vector<3x8x8xf32>
    %322 = math.exp %321 : vector<3x8x8xf32>
    %cst_102 = arith.constant dense<0.000000e+00> : vector<3x8xf32>
    %323 = vector.multi_reduction <add>, %322, %cst_102 [2] : vector<3x8x8xf32> to vector<3x8xf32>
    %324 = vector.shape_cast %323 : vector<3x8xf32> to vector<3x8x1xf32>
    %325 = tpu.reciprocal %324 {approx = true} : vector<3x8x1xf32> -> vector<3x8x1xf32>
    %326 = vector.broadcast %325 : vector<3x8x1xf32> to vector<3x8x8xf32>
    %327 = arith.mulf %322, %326 : vector<3x8x8xf32>
    %328 = arith.truncf %327 : vector<3x8x8xf32> to vector<3x8x8xbf16>
    "tpu.trace_start"() <{level = 10 : i32, message = "bqk,bkd->bqd"}> : () -> ()
    %cst_103 = arith.constant dense<0.000000e+00> : vector<3x8x8xf32>
    %329 = tpu.matmul %328, %314, %cst_103 {dimension_numbers = #tpu.dot_dimension_numbers<[2], [1], [1], [2], [0, 0, 0, 1, 1, 2], [0], [0]>} : vector<3x8x8xbf16>, vector<3x8x8xbf16>, vector<3x8x8xf32> -> vector<3x8x8xf32>
    "tpu.trace_stop"() : () -> ()
    %330 = vector.shape_cast %329 : vector<3x8x8xf32> to vector<24x8xf32>
    %331 = arith.truncf %330 : vector<24x8xf32> to vector<24x8xbf16>
    %332 = vector.extract_strided_slice %221 {offsets = [2, 0, 0], sizes = [1, 8, 32], strides = [1, 1, 1]} : vector<4x8x32xbf16> to vector<1x8x32xbf16>
    %333 = vector.shape_cast %332 : vector<1x8x32xbf16> to vector<8x32xbf16>
    %cst_104 = arith.constant dense<0.000000e+00> : vector<24x32xf32>
    %334 = tpu.matmul %331, %333, %cst_104 {dimension_numbers = #tpu.dot_dimension_numbers<[1], [0], [0], [1], [0, 0, 1, 1], [], []>} : vector<24x8xbf16>, vector<8x32xbf16>, vector<24x32xf32> -> vector<24x32xf32>
    %335 = arith.addf %305, %334 : vector<24x32xf32>
    %336 = vector.extract_strided_slice %242 {offsets = [0, 24], sizes = [24, 8], strides = [1, 1]} : vector<24x32xf32> to vector<24x8xf32>
    %337 = vector.shape_cast %336 : vector<24x8xf32> to vector<3x8x8xf32>
    %338 = arith.truncf %337 : vector<3x8x8xf32> to vector<3x8x8xbf16>
    %339 = vector.extract_strided_slice %243 {offsets = [0, 24], sizes = [24, 8], strides = [1, 1]} : vector<24x32xf32> to vector<24x8xf32>
    %340 = vector.shape_cast %339 : vector<24x8xf32> to vector<3x8x8xf32>
    %341 = arith.truncf %340 : vector<3x8x8xf32> to vector<3x8x8xbf16>
    %342 = vector.extract_strided_slice %244 {offsets = [0, 24], sizes = [24, 8], strides = [1, 1]} : vector<24x32xf32> to vector<24x8xf32>
    %343 = vector.shape_cast %342 : vector<24x8xf32> to vector<3x8x8xf32>
    %344 = arith.truncf %343 : vector<3x8x8xf32> to vector<3x8x8xbf16>
    "tpu.trace_start"() <{level = 10 : i32, message = "bqd,bkd->bqk"}> : () -> ()
    %cst_105 = arith.constant dense<0.000000e+00> : vector<3x8x8xf32>
    %345 = tpu.matmul %338, %341, %cst_105 {dimension_numbers = #tpu.dot_dimension_numbers<[2], [2], [1], [1], [0, 0, 0, 1, 1, 1], [0], [0]>} : vector<3x8x8xbf16>, vector<3x8x8xbf16>, vector<3x8x8xf32> -> vector<3x8x8xf32>
    "tpu.trace_stop"() : () -> ()
    %cst_106 = arith.constant 0.353553385 : f32
    %346 = vector.broadcast %cst_106 : f32 to vector<3x8x8xf32>
    %347 = arith.mulf %345, %346 : vector<3x8x8xf32>
    %cst_107 = arith.constant dense<0xFF800000> : vector<3x8xf32>
    %348 = vector.multi_reduction <maximumf>, %347, %cst_107 [2] : vector<3x8x8xf32> to vector<3x8xf32>
    %349 = vector.shape_cast %348 : vector<3x8xf32> to vector<3x8x1xf32>
    %350 = vector.broadcast %349 : vector<3x8x1xf32> to vector<3x8x8xf32>
    %351 = arith.subf %347, %350 : vector<3x8x8xf32>
    %352 = math.exp %351 : vector<3x8x8xf32>
    %cst_108 = arith.constant dense<0.000000e+00> : vector<3x8xf32>
    %353 = vector.multi_reduction <add>, %352, %cst_108 [2] : vector<3x8x8xf32> to vector<3x8xf32>
    %354 = vector.shape_cast %353 : vector<3x8xf32> to vector<3x8x1xf32>
    %355 = tpu.reciprocal %354 {approx = true} : vector<3x8x1xf32> -> vector<3x8x1xf32>
    %356 = vector.broadcast %355 : vector<3x8x1xf32> to vector<3x8x8xf32>
    %357 = arith.mulf %352, %356 : vector<3x8x8xf32>
    %358 = arith.truncf %357 : vector<3x8x8xf32> to vector<3x8x8xbf16>
    "tpu.trace_start"() <{level = 10 : i32, message = "bqk,bkd->bqd"}> : () -> ()
    %cst_109 = arith.constant dense<0.000000e+00> : vector<3x8x8xf32>
    %359 = tpu.matmul %358, %344, %cst_109 {dimension_numbers = #tpu.dot_dimension_numbers<[2], [1], [1], [2], [0, 0, 0, 1, 1, 2], [0], [0]>} : vector<3x8x8xbf16>, vector<3x8x8xbf16>, vector<3x8x8xf32> -> vector<3x8x8xf32>
    "tpu.trace_stop"() : () -> ()
    %360 = vector.shape_cast %359 : vector<3x8x8xf32> to vector<24x8xf32>
    %361 = arith.truncf %360 : vector<24x8xf32> to vector<24x8xbf16>
    %362 = vector.extract_strided_slice %221 {offsets = [3, 0, 0], sizes = [1, 8, 32], strides = [1, 1, 1]} : vector<4x8x32xbf16> to vector<1x8x32xbf16>
    %363 = vector.shape_cast %362 : vector<1x8x32xbf16> to vector<8x32xbf16>
    %cst_110 = arith.constant dense<0.000000e+00> : vector<24x32xf32>
    %364 = tpu.matmul %361, %363, %cst_110 {dimension_numbers = #tpu.dot_dimension_numbers<[1], [0], [0], [1], [0, 0, 1, 1], [], []>} : vector<24x8xbf16>, vector<8x32xbf16>, vector<24x32xf32> -> vector<24x32xf32>
    %365 = arith.addf %335, %364 : vector<24x32xf32>
    %366 = vector.broadcast %232 : vector<1x32xf32> to vector<24x32xf32>
    %367 = arith.addf %365, %366 : vector<24x32xf32>
    %368 = arith.addf %217, %367 : vector<24x32xf32>
    %cst_111 = arith.constant dense<0.000000e+00> : vector<24xf32>
    %369 = vector.multi_reduction <add>, %368, %cst_111 [1] : vector<24x32xf32> to vector<24xf32>
    %370 = vector.shape_cast %369 : vector<24xf32> to vector<24x1xf32>
    %cst_112 = arith.constant 3.200000e+01 : f32
    %371 = vector.broadcast %cst_112 : f32 to vector<24x1xf32>
    %372 = arith.divf %370, %371 : vector<24x1xf32>
    %373 = vector.broadcast %372 : vector<24x1xf32> to vector<24x32xf32>
    %374 = arith.subf %368, %373 : vector<24x32xf32>
    %375 = arith.mulf %374, %374 : vector<24x32xf32>
    %cst_113 = arith.constant dense<0.000000e+00> : vector<24xf32>
    %376 = vector.multi_reduction <add>, %375, %cst_113 [1] : vector<24x32xf32> to vector<24xf32>
    %377 = vector.shape_cast %376 : vector<24xf32> to vector<24x1xf32>
    %cst_114 = arith.constant 3.200000e+01 : f32
    %378 = vector.broadcast %cst_114 : f32 to vector<24x1xf32>
    %379 = arith.divf %377, %378 : vector<24x1xf32>
    %380 = vector.broadcast %372 : vector<24x1xf32> to vector<24x32xf32>
    %381 = arith.subf %368, %380 : vector<24x32xf32>
    %cst_115 = arith.constant 9.99999996E-13 : f32
    %382 = vector.broadcast %cst_115 : f32 to vector<24x1xf32>
    %383 = arith.addf %379, %382 : vector<24x1xf32>
    %384 = math.rsqrt %383 : vector<24x1xf32>
    %385 = vector.broadcast %384 : vector<24x1xf32> to vector<24x32xf32>
    %386 = arith.mulf %381, %385 : vector<24x32xf32>
    %387 = vector.broadcast %233 : vector<1x32xf32> to vector<24x32xf32>
    %388 = arith.mulf %386, %387 : vector<24x32xf32>
    %389 = vector.broadcast %234 : vector<1x32xf32> to vector<24x32xf32>
    %390 = arith.addf %388, %389 : vector<24x32xf32>
    %391 = arith.truncf %390 : vector<24x32xf32> to vector<24x32xbf16>
    %cst_116 = arith.constant dense<0.000000e+00> : vector<24x64xf32>
    %392 = tpu.matmul %391, %223, %cst_116 {dimension_numbers = #tpu.dot_dimension_numbers<[1], [0], [0], [1], [0, 0, 1, 1], [], []>} : vector<24x32xbf16>, vector<32x64xbf16>, vector<24x64xf32> -> vector<24x64xf32>
    %393 = vector.broadcast %231 : vector<1x64xf32> to vector<24x64xf32>
    %394 = arith.addf %392, %393 : vector<24x64xf32>
    %395 = arith.mulf %394, %394 : vector<24x64xf32>
    %396 = arith.mulf %394, %395 : vector<24x64xf32>
    %cst_117 = arith.constant 4.471500e-02 : f32
    %397 = vector.broadcast %cst_117 : f32 to vector<24x64xf32>
    %398 = arith.mulf %397, %396 : vector<24x64xf32>
    %399 = arith.addf %394, %398 : vector<24x64xf32>
    %cst_118 = arith.constant 0.797884583 : f32
    %400 = vector.broadcast %cst_118 : f32 to vector<24x64xf32>
    %401 = arith.mulf %400, %399 : vector<24x64xf32>
    %402 = math.tanh %401 : vector<24x64xf32>
    %cst_119 = arith.constant 1.000000e+00 : f32
    %403 = vector.broadcast %cst_119 : f32 to vector<24x64xf32>
    %404 = arith.addf %403, %402 : vector<24x64xf32>
    %cst_120 = arith.constant 5.000000e-01 : f32
    %405 = vector.broadcast %cst_120 : f32 to vector<24x64xf32>
    %406 = arith.mulf %405, %404 : vector<24x64xf32>
    %407 = arith.mulf %394, %406 : vector<24x64xf32>
    %408 = arith.truncf %407 : vector<24x64xf32> to vector<24x64xbf16>
    %cst_121 = arith.constant dense<0.000000e+00> : vector<24x32xf32>
    %409 = tpu.matmul %408, %225, %cst_121 {dimension_numbers = #tpu.dot_dimension_numbers<[1], [0], [0], [1], [0, 0, 1, 1], [], []>} : vector<24x64xbf16>, vector<64x32xbf16>, vector<24x32xf32> -> vector<24x32xf32>
    %410 = vector.broadcast %235 : vector<1x32xf32> to vector<24x32xf32>
    %411 = arith.addf %409, %410 : vector<24x32xf32>
    %412 = arith.addf %390, %411 : vector<24x32xf32>
    %cst_122 = arith.constant dense<0.000000e+00> : vector<24xf32>
    %413 = vector.multi_reduction <add>, %412, %cst_122 [1] : vector<24x32xf32> to vector<24xf32>
    %414 = vector.shape_cast %413 : vector<24xf32> to vector<24x1xf32>
    %cst_123 = arith.constant 3.200000e+01 : f32
    %415 = vector.broadcast %cst_123 : f32 to vector<24x1xf32>
    %416 = arith.divf %414, %415 : vector<24x1xf32>
    %417 = vector.broadcast %416 : vector<24x1xf32> to vector<24x32xf32>
    %418 = arith.subf %412, %417 : vector<24x32xf32>
    %419 = arith.mulf %418, %418 : vector<24x32xf32>
    %cst_124 = arith.constant dense<0.000000e+00> : vector<24xf32>
    %420 = vector.multi_reduction <add>, %419, %cst_124 [1] : vector<24x32xf32> to vector<24xf32>
    %421 = vector.shape_cast %420 : vector<24xf32> to vector<24x1xf32>
    %cst_125 = arith.constant 3.200000e+01 : f32
    %422 = vector.broadcast %cst_125 : f32 to vector<24x1xf32>
    %423 = arith.divf %421, %422 : vector<24x1xf32>
    %424 = vector.broadcast %416 : vector<24x1xf32> to vector<24x32xf32>
    %425 = arith.subf %412, %424 : vector<24x32xf32>
    %cst_126 = arith.constant 9.99999996E-13 : f32
    %426 = vector.broadcast %cst_126 : f32 to vector<24x1xf32>
    %427 = arith.addf %423, %426 : vector<24x1xf32>
    %428 = math.rsqrt %427 : vector<24x1xf32>
    %429 = vector.broadcast %428 : vector<24x1xf32> to vector<24x32xf32>
    %430 = arith.mulf %425, %429 : vector<24x32xf32>
    %431 = vector.broadcast %236 : vector<1x32xf32> to vector<24x32xf32>
    %432 = arith.mulf %430, %431 : vector<24x32xf32>
    %433 = vector.broadcast %237 : vector<1x32xf32> to vector<24x32xf32>
    %434 = arith.addf %432, %433 : vector<24x32xf32>
    %435 = arith.truncf %434 : vector<24x32xf32> to vector<24x32xbf16>
    %c0_127 = arith.constant 0 : index
    %c0_128 = arith.constant 0 : index
    %436 = vector.load %arg9[%c0_127, %c0_128] : memref<32x2xbf16, #tpu.memory_space<vmem>>, vector<32x2xbf16>
    %cst_129 = arith.constant dense<0.000000e+00> : vector<24x2xf32>
    %437 = tpu.matmul %435, %436, %cst_129 {dimension_numbers = #tpu.dot_dimension_numbers<[1], [0], [0], [1], [0, 0, 1, 1], [], []>} : vector<24x32xbf16>, vector<32x2xbf16>, vector<24x2xf32> -> vector<24x2xf32>
    %c0_130 = arith.constant 0 : index
    %c0_131 = arith.constant 0 : index
    %438 = vector.load %arg10[%c0_130, %c0_131] : memref<1x2xf32, #tpu.memory_space<vmem>>, vector<1x2xf32>
    %439 = vector.broadcast %438 : vector<1x2xf32> to vector<24x2xf32>
    %440 = arith.addf %437, %439 : vector<24x2xf32>
    %441 = vector.shape_cast %440 : vector<24x2xf32> to vector<3x8x2xf32>
    %442 = vector.extract_strided_slice %441 {offsets = [0, 0, 0], sizes = [3, 8, 1], strides = [1, 1, 1]} : vector<3x8x2xf32> to vector<3x8x1xf32>
    %443 = vector.extract_strided_slice %441 {offsets = [0, 0, 1], sizes = [3, 8, 1], strides = [1, 1, 1]} : vector<3x8x2xf32> to vector<3x8x1xf32>
    %cst_132 = arith.constant dense<0xFF800000> : vector<3x1xf32>
    %444 = vector.multi_reduction <maximumf>, %442, %cst_132 [1] : vector<3x8x1xf32> to vector<3x1xf32>
    %445 = vector.shape_cast %444 : vector<3x1xf32> to vector<3x1x1xf32>
    %446 = vector.broadcast %445 : vector<3x1x1xf32> to vector<3x8x1xf32>
    %447 = arith.subf %442, %446 : vector<3x8x1xf32>
    %448 = math.exp %447 : vector<3x8x1xf32>
    %cst_133 = arith.constant dense<0.000000e+00> : vector<3x1xf32>
    %449 = vector.multi_reduction <add>, %448, %cst_133 [1] : vector<3x8x1xf32> to vector<3x1xf32>
    %450 = vector.shape_cast %449 : vector<3x1xf32> to vector<3x1x1xf32>
    %451 = vector.broadcast %450 : vector<3x1x1xf32> to vector<3x8x1xf32>
    %452 = arith.divf %448, %451 : vector<3x8x1xf32>
    %cst_134 = arith.constant dense<0xFF800000> : vector<3x1xf32>
    %453 = vector.multi_reduction <maximumf>, %443, %cst_134 [1] : vector<3x8x1xf32> to vector<3x1xf32>
    %454 = vector.shape_cast %453 : vector<3x1xf32> to vector<3x1x1xf32>
    %455 = vector.broadcast %454 : vector<3x1x1xf32> to vector<3x8x1xf32>
    %456 = arith.subf %443, %455 : vector<3x8x1xf32>
    %457 = math.exp %456 : vector<3x8x1xf32>
    %cst_135 = arith.constant dense<0.000000e+00> : vector<3x1xf32>
    %458 = vector.multi_reduction <add>, %457, %cst_135 [1] : vector<3x8x1xf32> to vector<3x1xf32>
    %459 = vector.shape_cast %458 : vector<3x1xf32> to vector<3x1x1xf32>
    %460 = vector.broadcast %459 : vector<3x1x1xf32> to vector<3x8x1xf32>
    %461 = arith.divf %457, %460 : vector<3x8x1xf32>
    "tpu.trace_start"() <{level = 10 : i32, message = "bik,bjk->bij"}> : () -> ()
    %cst_136 = arith.constant dense<0.000000e+00> : vector<3x8x8xf32>
    %462 = tpu.matmul %452, %461, %cst_136 {dimension_numbers = #tpu.dot_dimension_numbers<[2], [2], [1], [1], [0, 0, 0, 1, 1, 1], [0], [0]>} : vector<3x8x1xf32>, vector<3x8x1xf32>, vector<3x8x8xf32> -> vector<3x8x8xf32>
    "tpu.trace_stop"() : () -> ()
    %463 = tpu.iota {dimensions = array<i32: 1>} : vector<3x8x8xi32>
    %464 = tpu.iota {dimensions = array<i32: 2>} : vector<3x8x8xi32>
    %465 = arith.cmpi sge, %464, %463 : vector<3x8x8xi32>
    %cst_137 = arith.constant 0.000000e+00 : f32
    %466 = vector.broadcast %cst_137 : f32 to vector<3x8x8xf32>
    %467 = arith.select %465, %462, %466 : vector<3x8x8xi1>, vector<3x8x8xf32>
    %cst_138 = arith.constant dense<0xFF800000> : vector<3x8xf32>
    %468 = vector.multi_reduction <maximumf>, %467, %cst_138 [2] : vector<3x8x8xf32> to vector<3x8xf32>
    %469 = vector.shape_cast %468 : vector<3x8xf32> to vector<3x8x1xf32>
    %cst_139 = arith.constant dense<0xFF800000> : vector<3x1xf32>
    %470 = vector.multi_reduction <maximumf>, %469, %cst_139 [1] : vector<3x8x1xf32> to vector<3x1xf32>
    %471 = vector.shape_cast %470 : vector<3x1xf32> to vector<3x1x1xf32>
    %c8_i32 = arith.constant 8 : i32
    %472 = vector.broadcast %c8_i32 : i32 to vector<3x8x8xi32>
    %473 = arith.muli %463, %472 : vector<3x8x8xi32>
    %474 = arith.addi %473, %464 : vector<3x8x8xi32>
    %475 = vector.broadcast %471 : vector<3x1x1xf32> to vector<3x8x8xf32>
    %476 = arith.cmpf oge, %467, %475 : vector<3x8x8xf32>
    %c64_i32 = arith.constant 64 : i32
    %477 = vector.broadcast %c64_i32 : i32 to vector<3x8x8xi32>
    %478 = arith.select %476, %474, %477 : vector<3x8x8xi1>, vector<3x8x8xi32>
    %cst_140 = arith.constant dense<2147483647> : vector<3x8xi32>
    %479 = vector.multi_reduction <minsi>, %478, %cst_140 [2] : vector<3x8x8xi32> to vector<3x8xi32>
    %480 = vector.shape_cast %479 : vector<3x8xi32> to vector<3x8x1xi32>
    %cst_141 = arith.constant dense<2147483647> : vector<3x1xi32>
    %481 = vector.multi_reduction <minsi>, %480, %cst_141 [1] : vector<3x8x1xi32> to vector<3x1xi32>
    %482 = vector.shape_cast %481 : vector<3x1xi32> to vector<3x1x1xi32>
    %c0_142 = arith.constant 0 : index
    %c0_143 = arith.constant 0 : index
    %c0_144 = arith.constant 0 : index
    %483 = vector.load %arg11[%c0_142, %c0_143, %c0_144] : memref<3x1x1xf32, #tpu.memory_space<vmem>>, vector<3x1x1xf32>
    tpu.vector_store %arg11[%c0_142, %c0_143, %c0_144], %471 {strides = array<i32>} : memref<3x1x1xf32, #tpu.memory_space<vmem>>, vector<3x1x1xf32>,
    %c0_145 = arith.constant 0 : index
    %c0_146 = arith.constant 0 : index
    %c0_147 = arith.constant 0 : index
    %484 = vector.load %arg12[%c0_145, %c0_146, %c0_147] : memref<3x1x1xi32, #tpu.memory_space<vmem>>, vector<3x1x1xi32>
    tpu.vector_store %arg12[%c0_145, %c0_146, %c0_147], %482 {strides = array<i32>} : memref<3x1x1xi32, #tpu.memory_space<vmem>>, vector<3x1x1xi32>,
    return
  }
  func.func @transform_0(%arg0: i32) -> (i32, i32) {
    %c0_i32 = arith.constant 0 : i32
    %c0_i32_0 = arith.constant 0 : i32
    return %arg0, %c0_i32 : i32, i32
  }
  func.func @transform_1(%arg0: i32) -> (i32, i32, i32) {
    %c0_i32 = arith.constant 0 : i32
    %c0_i32_0 = arith.constant 0 : i32
    %c0_i32_1 = arith.constant 0 : i32
    %c0_i32_2 = arith.constant 0 : i32
    return %c0_i32, %c0_i32_0, %c0_i32_1 : i32, i32, i32
  }
  func.func @transform_2(%arg0: i32) -> (i32, i32, i32, i32) {
    %c0_i32 = arith.constant 0 : i32
    %c0_i32_0 = arith.constant 0 : i32
    %c0_i32_1 = arith.constant 0 : i32
    %c0_i32_2 = arith.constant 0 : i32
    %c0_i32_3 = arith.constant 0 : i32
    return %c0_i32, %c0_i32_0, %c0_i32_1, %c0_i32_2 : i32, i32, i32, i32
  }
  func.func @transform_3(%arg0: i32) -> (i32, i32, i32) {
    %c0_i32 = arith.constant 0 : i32
    %c0_i32_0 = arith.constant 0 : i32
    %c0_i32_1 = arith.constant 0 : i32
    %c0_i32_2 = arith.constant 0 : i32
    return %c0_i32, %c0_i32_0, %c0_i32_1 : i32, i32, i32
  }
  func.func @transform_4(%arg0: i32) -> (i32, i32, i32) {
    %c0_i32 = arith.constant 0 : i32
    %c0_i32_0 = arith.constant 0 : i32
    %c0_i32_1 = arith.constant 0 : i32
    %c0_i32_2 = arith.constant 0 : i32
    return %c0_i32, %c0_i32_0, %c0_i32_1 : i32, i32, i32
  }
  func.func @transform_5(%arg0: i32) -> (i32, i32, i32) {
    %c0_i32 = arith.constant 0 : i32
    %c0_i32_0 = arith.constant 0 : i32
    %c0_i32_1 = arith.constant 0 : i32
    %c0_i32_2 = arith.constant 0 : i32
    return %c0_i32, %c0_i32_0, %c0_i32_1 : i32, i32, i32
  }
  func.func @transform_6(%arg0: i32) -> (i32, i32, i32) {
    %c0_i32 = arith.constant 0 : i32
    %c0_i32_0 = arith.constant 0 : i32
    %c0_i32_1 = arith.constant 0 : i32
    %c0_i32_2 = arith.constant 0 : i32
    return %c0_i32, %c0_i32_0, %c0_i32_1 : i32, i32, i32
  }
  func.func @transform_7(%arg0: i32) -> (i32, i32, i32) {
    %c0_i32 = arith.constant 0 : i32
    %c0_i32_0 = arith.constant 0 : i32
    %c0_i32_1 = arith.constant 0 : i32
    %c0_i32_2 = arith.constant 0 : i32
    return %c0_i32, %c0_i32_0, %c0_i32_1 : i32, i32, i32
  }
  func.func @transform_8(%arg0: i32) -> (i32, i32) {
    %c0_i32 = arith.constant 0 : i32
    %c0_i32_0 = arith.constant 0 : i32
    %c0_i32_1 = arith.constant 0 : i32
    return %c0_i32, %c0_i32_0 : i32, i32
  }
  func.func @transform_9(%arg0: i32) -> (i32, i32) {
    %c0_i32 = arith.constant 0 : i32
    %c0_i32_0 = arith.constant 0 : i32
    %c0_i32_1 = arith.constant 0 : i32
    return %c0_i32, %c0_i32_0 : i32, i32
  }
  func.func @transform_10(%arg0: i32) -> (i32, i32, i32) {
    %c0_i32 = arith.constant 0 : i32
    %c0_i32_0 = arith.constant 0 : i32
    %c0_i32_1 = arith.constant 0 : i32
    return %arg0, %c0_i32, %c0_i32_0 : i32, i32, i32
  }
  func.func @transform_11(%arg0: i32) -> (i32, i32, i32) {
    %c0_i32 = arith.constant 0 : i32
    %c0_i32_0 = arith.constant 0 : i32
    %c0_i32_1 = arith.constant 0 : i32
    return %arg0, %c0_i32, %c0_i32_0 : i32, i32, i32
  }
}

</mosaic_0001>

<llo_original>
// kernel: _device_forward.1
$region0: #{_device_forward.1}
  #allocation0 [shape = 'u32[]', space=smem, size = 0x4, offset = 0x4, fixed_abs, tag = 'smem constant byte address 0x4 - core index']
  #allocation1 [shape = 'u32[144,128]{1,0:T(1,128)}', space=vmem, size = 0x12000, scoped, tag = 'internal scratch']
  %s0 = inlined_call_operand.vmem [shape: f32[48,32], index: 0, kind: input, shape index: {}]
  %s1 = inlined_call_operand.vmem [shape: bf16[2,32,96], index: 1, kind: input, shape index: {}]
  %s2 = inlined_call_operand.vmem [shape: bf16[2,4,8,32], index: 2, kind: input, shape index: {}]
  %s3 = inlined_call_operand.vmem [shape: bf16[2,32,64], index: 3, kind: input, shape index: {}]
  %s4 = inlined_call_operand.vmem [shape: bf16[2,64,32], index: 4, kind: input, shape index: {}]
  %s5 = inlined_call_operand.vmem [shape: f32[2,1,96], index: 5, kind: input, shape index: {}]
  %s6 = inlined_call_operand.vmem [shape: f32[2,6,32], index: 6, kind: input, shape index: {}]
  %s7 = inlined_call_operand.vmem [shape: f32[2,1,64], index: 7, kind: input, shape index: {}]
  %s8 = inlined_call_operand.vmem [shape: bf16[32,2], index: 8, kind: input, shape index: {}]
  %s9 = inlined_call_operand.vmem [shape: f32[1,2], index: 9, kind: input, shape index: {}]
  %s10 = inlined_call_operand.vmem [shape: f32[6,1,1], index: 10, kind: output, shape index: {0}]
  %s11 = inlined_call_operand.vmem [shape: s32[6,1,1], index: 11, kind: output, shape index: {1}]
  %12 = xla_tuple %s10, %s11
  %s13 = sld [smem:[#allocation0]]
  $region81: #{_device_forward.1} parent=0
    _
  %s15 = ssub.s32 1, %s13
  %s16 = scalar_select 0, %s15, %s13
  loop: start=0, step=1, limit=4
  $region2: #{_device_forward.1} parent=0 // loop_pre_header
    _
  $region3: #{_device_forward.1} parent=0 // loop_header
    %s18 = sphi 0, %s22
    %p19 = scmp.ge.s32.totalorder %s18, 4
    %s28 = sphi 0, %s30
    %s31 = sphi 0, %s28
    %s32 = sphi 0, %s31
    %s48 = sphi 0, %s32
    %s52 = sphi 0, %s52
    %s54 = sphi 0, %s52
    %s55 = sphi 0, %s54
    %s69 = sphi 0, %s55
    %s73 = sphi 0, %s73
    %s75 = sphi 0, %s73
    %s76 = sphi 0, %s75
    %s90 = sphi 0, %s76
    %s94 = sphi 0, %s94
    %s96 = sphi 0, %s94
    %s97 = sphi 0, %s96
    %s111 = sphi 0, %s97
    %s115 = sphi 0, %s115
    %s117 = sphi 0, %s115
    %s118 = sphi 0, %s117
    %s132 = sphi 0, %s118
    %s136 = sphi 0, %s136
    %s138 = sphi 0, %s136
    %s139 = sphi 0, %s138
    %s153 = sphi 0, %s139
    %s157 = sphi 0, %s157
    %s159 = sphi 0, %s157
    %s160 = sphi 0, %s159
    %s174 = sphi 0, %s160
    %s178 = sphi 0, %s178
    %s180 = sphi 0, %s178
    %s181 = sphi 0, %s180
    %s195 = sphi 0, %s181
    %s199 = sphi 0, %s199
    %s201 = sphi 0, %s199
    %s202 = sphi 0, %s201
    %s216 = sphi 0, %s202
    %s220 = sphi 0, %s220
    %s222 = sphi 0, %s220
    %s223 = sphi 0, %s222
    %s237 = sphi 0, %s223
    %s243 = sphi 0, %s245
    %s246 = sphi 0, %s243
    %s247 = sphi 0, %s246
    %s263 = sphi 0, %s247
    %s269 = sphi 0, %s271
    %s272 = sphi 0, %s269
    %s273 = sphi 0, %s272
    %s289 = sphi 0, %s273
  $region4: #{_device_forward.1} parent=0 // loop_header_branch
    %21 = sbr.rel (%p19) target = $region8
  $region5: #{_device_forward.1} parent=0 // loop_body
    %s23 = ssub.s32 %s18, 1
    %s24 = ssub.s32 %s18, 2
    %s25 = sadd.s32 %s18, 1
    %s26 = ssub.s32 %s18, %s25
    %p27 = scmp.eq.s32.totalorder %s26, 0
    %s29 = sadd.s32 %s28, 1
    %s30 = scalar_select %p27, %s28, %s29
    %p33 = pneg %p27
    %p34 = scmp.eq.s32.totalorder %s18, 1
    %p35 = por %p33, %p34
    %p36 = scmp.ne.s32.totalorder %s28, %s31
    %p37 = scmp.eq.s32.totalorder %s18, 0
    %p38 = por %p36, %p37
    %p39 = scmp.ne.s32.totalorder %s28, %s31
    %p40 = scmp.eq.s32.totalorder %s23, 1
    %p41 = por %p39, %p40
    %p42 = scmp.ne.s32.totalorder %s31, %s32
    %p43 = scmp.eq.s32.totalorder %s23, 0
    %p44 = por %p42, %p43
    %p45 = scmp.ne.s32.totalorder %s31, %s32
    %p46 = scmp.eq.s32.totalorder %s24, 1
    %p47 = por %p45, %p46
    %p49 = scmp.ne.s32.totalorder %s32, %s48
    %p50 = scmp.eq.s32.totalorder %s24, 0
    %p51 = por %p49, %p50
    %s53 = sadd.s32 %s52, 1
    %p56 = scmp.eq.s32.totalorder %s18, 1
    %p57 = scmp.ne.s32.totalorder %s52, %s54
    %p58 = scmp.eq.s32.totalorder %s18, 0
    %p59 = por %p57, %p58
    %p60 = scmp.ne.s32.totalorder %s52, %s54
    %p61 = scmp.eq.s32.totalorder %s23, 1
    %p62 = por %p60, %p61
    %p63 = scmp.ne.s32.totalorder %s54, %s55
    %p64 = scmp.eq.s32.totalorder %s23, 0
    %p65 = por %p63, %p64
    %p66 = scmp.ne.s32.totalorder %s54, %s55
    %p67 = scmp.eq.s32.totalorder %s24, 1
    %p68 = por %p66, %p67
    %p70 = scmp.ne.s32.totalorder %s55, %s69
    %p71 = scmp.eq.s32.totalorder %s24, 0
    %p72 = por %p70, %p71
    %s74 = sadd.s32 %s73, 1
    %p77 = scmp.eq.s32.totalorder %s18, 1
    %p78 = scmp.ne.s32.totalorder %s73, %s75
    %p79 = scmp.eq.s32.totalorder %s18, 0
    %p80 = por %p78, %p79
    %p81 = scmp.ne.s32.totalorder %s73, %s75
    %p82 = scmp.eq.s32.totalorder %s23, 1
    %p83 = por %p81, %p82
    %p84 = scmp.ne.s32.totalorder %s75, %s76
    %p85 = scmp.eq.s32.totalorder %s23, 0
    %p86 = por %p84, %p85
    %p87 = scmp.ne.s32.totalorder %s75, %s76
    %p88 = scmp.eq.s32.totalorder %s24, 1
    %p89 = por %p87, %p88
    %p91 = scmp.ne.s32.totalorder %s76, %s90
    %p92 = scmp.eq.s32.totalorder %s24, 0
    %p93 = por %p91, %p92
    %s95 = sadd.s32 %s94, 1
    %p98 = scmp.eq.s32.totalorder %s18, 1
    %p99 = scmp.ne.s32.totalorder %s94, %s96
    %p100 = scmp.eq.s32.totalorder %s18, 0
    %p101 = por %p99, %p100
    %p102 = scmp.ne.s32.totalorder %s94, %s96
    %p103 = scmp.eq.s32.totalorder %s23, 1
    %p104 = por %p102, %p103
    %p105 = scmp.ne.s32.totalorder %s96, %s97
    %p106 = scmp.eq.s32.totalorder %s23, 0
    %p107 = por %p105, %p106
    %p108 = scmp.ne.s32.totalorder %s96, %s97
    %p109 = scmp.eq.s32.totalorder %s24, 1
    %p110 = por %p108, %p109
    %p112 = scmp.ne.s32.totalorder %s97, %s111
    %p113 = scmp.eq.s32.totalorder %s24, 0
    %p114 = por %p112, %p113
    %s116 = sadd.s32 %s115, 1
    %p119 = scmp.eq.s32.totalorder %s18, 1
    %p120 = scmp.ne.s32.totalorder %s115, %s117
    %p121 = scmp.eq.s32.totalorder %s18, 0
    %p122 = por %p120, %p121
    %p123 = scmp.ne.s32.totalorder %s115, %s117
    %p124 = scmp.eq.s32.totalorder %s23, 1
    %p125 = por %p123, %p124
    %p126 = scmp.ne.s32.totalorder %s117, %s118
    %p127 = scmp.eq.s32.totalorder %s23, 0
    %p128 = por %p126, %p127
    %p129 = scmp.ne.s32.totalorder %s117, %s118
    %p130 = scmp.eq.s32.totalorder %s24, 1
    %p131 = por %p129, %p130
    %p133 = scmp.ne.s32.totalorder %s118, %s132
    %p134 = scmp.eq.s32.totalorder %s24, 0
    %p135 = por %p133, %p134
    %s137 = sadd.s32 %s136, 1
    %p140 = scmp.eq.s32.totalorder %s18, 1
    %p141 = scmp.ne.s32.totalorder %s136, %s138
    %p142 = scmp.eq.s32.totalorder %s18, 0
    %p143 = por %p141, %p142
    %p144 = scmp.ne.s32.totalorder %s136, %s138
    %p145 = scmp.eq.s32.totalorder %s23, 1
    %p146 = por %p144, %p145
    %p147 = scmp.ne.s32.totalorder %s138, %s139
    %p148 = scmp.eq.s32.totalorder %s23, 0
    %p149 = por %p147, %p148
    %p150 = scmp.ne.s32.totalorder %s138, %s139
    %p151 = scmp.eq.s32.totalorder %s24, 1
    %p152 = por %p150, %p151
    %p154 = scmp.ne.s32.totalorder %s139, %s153
    %p155 = scmp.eq.s32.totalorder %s24, 0
    %p156 = por %p154, %p155
    %s158 = sadd.s32 %s157, 1
    %p161 = scmp.eq.s32.totalorder %s18, 1
    %p162 = scmp.ne.s32.totalorder %s157, %s159
    %p163 = scmp.eq.s32.totalorder %s18, 0
    %p164 = por %p162, %p163
    %p165 = scmp.ne.s32.totalorder %s157, %s159
    %p166 = scmp.eq.s32.totalorder %s23, 1
    %p167 = por %p165, %p166
    %p168 = scmp.ne.s32.totalorder %s159, %s160
    %p169 = scmp.eq.s32.totalorder %s23, 0
    %p170 = por %p168, %p169
    %p171 = scmp.ne.s32.totalorder %s159, %s160
    %p172 = scmp.eq.s32.totalorder %s24, 1
    %p173 = por %p171, %p172
    %p175 = scmp.ne.s32.totalorder %s160, %s174
    %p176 = scmp.eq.s32.totalorder %s24, 0
    %p177 = por %p175, %p176
    %s179 = sadd.s32 %s178, 1
    %p182 = scmp.eq.s32.totalorder %s18, 1
    %p183 = scmp.ne.s32.totalorder %s178, %s180
    %p184 = scmp.eq.s32.totalorder %s18, 0
    %p185 = por %p183, %p184
    %p186 = scmp.ne.s32.totalorder %s178, %s180
    %p187 = scmp.eq.s32.totalorder %s23, 1
    %p188 = por %p186, %p187
    %p189 = scmp.ne.s32.totalorder %s180, %s181
    %p190 = scmp.eq.s32.totalorder %s23, 0
    %p191 = por %p189, %p190
    %p192 = scmp.ne.s32.totalorder %s180, %s181
    %p193 = scmp.eq.s32.totalorder %s24, 1
    %p194 = por %p192, %p193
    %p196 = scmp.ne.s32.totalorder %s181, %s195
    %p197 = scmp.eq.s32.totalorder %s24, 0
    %p198 = por %p196, %p197
    %s200 = sadd.s32 %s199, 1
    %p203 = scmp.eq.s32.totalorder %s18, 1
    %p204 = scmp.ne.s32.totalorder %s199, %s201
    %p205 = scmp.eq.s32.totalorder %s18, 0
    %p206 = por %p204, %p205
    %p207 = scmp.ne.s32.totalorder %s199, %s201
    %p208 = scmp.eq.s32.totalorder %s23, 1
    %p209 = por %p207, %p208
    %p210 = scmp.ne.s32.totalorder %s201, %s202
    %p211 = scmp.eq.s32.totalorder %s23, 0
    %p212 = por %p210, %p211
    %p213 = scmp.ne.s32.totalorder %s201, %s202
    %p214 = scmp.eq.s32.totalorder %s24, 1
    %p215 = por %p213, %p214
    %p217 = scmp.ne.s32.totalorder %s202, %s216
    %p218 = scmp.eq.s32.totalorder %s24, 0
    %p219 = por %p217, %p218
    %s221 = sadd.s32 %s220, 1
    %p224 = scmp.eq.s32.totalorder %s18, 1
    %p225 = scmp.ne.s32.totalorder %s220, %s222
    %p226 = scmp.eq.s32.totalorder %s18, 0
    %p227 = por %p225, %p226
    %p228 = scmp.ne.s32.totalorder %s220, %s222
    %p229 = scmp.eq.s32.totalorder %s23, 1
    %p230 = por %p228, %p229
    %p231 = scmp.ne.s32.totalorder %s222, %s223
    %p232 = scmp.eq.s32.totalorder %s23, 0
    %p233 = por %p231, %p232
    %p234 = scmp.ne.s32.totalorder %s222, %s223
    %p235 = scmp.eq.s32.totalorder %s24, 1
    %p236 = por %p234, %p235
    %p238 = scmp.ne.s32.totalorder %s223, %s237
    %p239 = scmp.eq.s32.totalorder %s24, 0
    %p240 = por %p238, %p239
    %s241 = ssub.s32 %s18, %s25
    %p242 = scmp.eq.s32.totalorder %s241, 0
    %s244 = sadd.s32 %s243, 1
    %s245 = scalar_select %p242, %s243, %s244
    %p248 = pneg %p242
    %p249 = scmp.eq.s32.totalorder %s18, 1
    %p250 = por %p248, %p249
    %p251 = scmp.ne.s32.totalorder %s243, %s246
    %p252 = scmp.eq.s32.totalorder %s18, 0
    %p253 = por %p251, %p252
    %p254 = scmp.ne.s32.totalorder %s243, %s246
    %p255 = scmp.eq.s32.totalorder %s23, 1
    %p256 = por %p254, %p255
    %p257 = scmp.ne.s32.totalorder %s246, %s247
    %p258 = scmp.eq.s32.totalorder %s23, 0
    %p259 = por %p257, %p258
    %p260 = scmp.ne.s32.totalorder %s246, %s247
    %p261 = scmp.eq.s32.totalorder %s24, 1
    %p262 = por %p260, %p261
    %p264 = scmp.ne.s32.totalorder %s247, %s263
    %p265 = scmp.eq.s32.totalorder %s24, 0
    %p266 = por %p264, %p265
    %s267 = ssub.s32 %s18, %s25
    %p268 = scmp.eq.s32.totalorder %s267, 0
    %s270 = sadd.s32 %s269, 1
    %s271 = scalar_select %p268, %s269, %s270
    %p274 = pneg %p268
    %p275 = scmp.eq.s32.totalorder %s18, 1
    %p276 = por %p274, %p275
    %p277 = scmp.ne.s32.totalorder %s269, %s272
    %p278 = scmp.eq.s32.totalorder %s18, 0
    %p279 = por %p277, %p278
    %p280 = scmp.ne.s32.totalorder %s269, %s272
    %p281 = scmp.eq.s32.totalorder %s23, 1
    %p282 = por %p280, %p281
    %p283 = scmp.ne.s32.totalorder %s272, %s273
    %p284 = scmp.eq.s32.totalorder %s23, 0
    %p285 = por %p283, %p284
    %p286 = scmp.ne.s32.totalorder %s272, %s273
    %p287 = scmp.eq.s32.totalorder %s24, 1
    %p288 = por %p286, %p287
    %p290 = scmp.ne.s32.totalorder %s273, %s289
    %p291 = scmp.eq.s32.totalorder %s24, 0
    %p292 = por %p290, %p291
    %p293 = scmp.le.s32.totalorder 1, %s18
    %p294 = scmp.lt.s32.totalorder %s18, 3
    %p295 = pnand %p293, %p294
    %p296 = pneg %p295
    // Predicated region
    $region9: #{_device_forward.1} parent=5 // pred_check
      _
    $region10: #{_device_forward.1} parent=5 // pred_check_branch
      %298 = sbr.rel (%p295) target = $region12
    $region11: #{_device_forward.1} parent=5 // pred_region
      %s299 = ssub.s32 %s18, 1
      // Predicated region
      $region13: #{_device_forward.1} parent=11 // pred_check
        %p300 = pneg %p65
      $region14: #{_device_forward.1} parent=11 // pred_check_branch
        %302 = sbr.rel (%p300) target = $region16
      $region15: #{_device_forward.1} parent=11 // pred_region
        _
      $region16: #{_device_forward.1} parent=11 // pred_fallthru
        _
      // Predicated region
      $region17: #{_device_forward.1} parent=11 // pred_check
        %p303 = pneg %p86
      $region18: #{_device_forward.1} parent=11 // pred_check_branch
        %305 = sbr.rel (%p303) target = $region20
      $region19: #{_device_forward.1} parent=11 // pred_region
        _
      $region20: #{_device_forward.1} parent=11 // pred_fallthru
        _
      // Predicated region
      $region21: #{_device_forward.1} parent=11 // pred_check
        %p306 = pneg %p107
      $region22: #{_device_forward.1} parent=11 // pred_check_branch
        %308 = sbr.rel (%p306) target = $region24
      $region23: #{_device_forward.1} parent=11 // pred_region
        _
      $region24: #{_device_forward.1} parent=11 // pred_fallthru
        _
      // Predicated region
      $region25: #{_device_forward.1} parent=11 // pred_check
        %p309 = pneg %p128
      $region26: #{_device_forward.1} parent=11 // pred_check_branch
        %311 = sbr.rel (%p309) target = $region28
      $region27: #{_device_forward.1} parent=11 // pred_region
        _
      $region28: #{_device_forward.1} parent=11 // pred_fallthru
        _
      // Predicated region
      $region29: #{_device_forward.1} parent=11 // pred_check
        %p312 = pneg %p149
      $region30: #{_device_forward.1} parent=11 // pred_check_branch
        %314 = sbr.rel (%p312) target = $region32
      $region31: #{_device_forward.1} parent=11 // pred_region
        _
      $region32: #{_device_forward.1} parent=11 // pred_fallthru
        _
      // Predicated region
      $region33: #{_device_forward.1} parent=11 // pred_check
        %p315 = pneg %p170
      $region34: #{_device_forward.1} parent=11 // pred_check_branch
        %317 = sbr.rel (%p315) target = $region36
      $region35: #{_device_forward.1} parent=11 // pred_region
        _
      $region36: #{_device_forward.1} parent=11 // pred_fallthru
        _
      // Predicated region
      $region37: #{_device_forward.1} parent=11 // pred_check
        %p318 = pneg %p191
      $region38: #{_device_forward.1} parent=11 // pred_check_branch
        %320 = sbr.rel (%p318) target = $region40
      $region39: #{_device_forward.1} parent=11 // pred_region
        _
      $region40: #{_device_forward.1} parent=11 // pred_fallthru
        _
      // Predicated region
      $region41: #{_device_forward.1} parent=11 // pred_check
        %p321 = pneg %p212
      $region42: #{_device_forward.1} parent=11 // pred_check_branch
        %323 = sbr.rel (%p321) target = $region44
      $region43: #{_device_forward.1} parent=11 // pred_region
        _
      $region44: #{_device_forward.1} parent=11 // pred_fallthru
        _
      // Predicated region
      $region45: #{_device_forward.1} parent=11 // pred_check
        %p324 = pneg %p233
      $region46: #{_device_forward.1} parent=11 // pred_check_branch
        %326 = sbr.rel (%p324) target = $region48
      $region47: #{_device_forward.1} parent=11 // pred_region
        _
      $region48: #{_device_forward.1} parent=11 // pred_fallthru
        _
    $region12: #{_device_forward.1} parent=5 // pred_fallthru
      _
    %p327 = scmp.lt.s32.totalorder %s18, 2
    // Predicated region
    $region49: #{_device_forward.1} parent=5 // pred_check
      %p328 = pneg %p327
    $region50: #{_device_forward.1} parent=5 // pred_check_branch
      %330 = sbr.rel (%p328) target = $region52
    $region51: #{_device_forward.1} parent=5 // pred_region
      // Predicated region
      $region53: #{_device_forward.1} parent=51 // pred_check
        %p331 = pneg %p38
      $region54: #{_device_forward.1} parent=51 // pred_check_branch
        %333 = sbr.rel (%p331) target = $region56
      $region55: #{_device_forward.1} parent=51 // pred_region
        %s334 = smul.u32 3, %s18
        %p335 = scmp.lt.s32.totalorder %s334, 5
        %s336 = scalar_select %p335, %s334, 5
        %s337 = smul.addr %s336, 8
        %s338 = scalar_lea.vmem %s0, %s337
        %s339 = smul.u32 3, %s18
      $region56: #{_device_forward.1} parent=51 // pred_fallthru
        _
    $region52: #{_device_forward.1} parent=5 // pred_fallthru
      _
    %p340 = scmp.le.s32.totalorder 1, %s18
    %p341 = scmp.lt.s32.totalorder %s18, 3
    %p342 = pnand %p340, %p341
    %p343 = pneg %p342
    // Predicated region
    $region57: #{_device_forward.1} parent=5 // pred_check
      _
    $region58: #{_device_forward.1} parent=5 // pred_check_branch
      %345 = sbr.rel (%p342) target = $region60
    $region59: #{_device_forward.1} parent=5 // pred_region
      %s346 = ssub.s32 %s18, 1
      %s347 = smul.u32 3, %s23
      %p348 = scmp.lt.s32.totalorder %s347, 5
      %s349 = scalar_select %p348, %s347, 5
      %s350 = smul.addr %s349, 8
      %s351 = scalar_lea.vmem %s0, %s350
      %p352 = pneg %p44
      %p353 = pneg %p41
      %p354 = pneg %p65
      %p355 = pneg %p62
      %p356 = pneg %p86
      %p357 = pneg %p83
      %p358 = pneg %p107
      %p359 = pneg %p104
      %p360 = pneg %p128
      %p361 = pneg %p125
      %p362 = pneg %p149
      %p363 = pneg %p146
      %p364 = pneg %p170
      %p365 = pneg %p167
      %p366 = pneg %p191
      %p367 = pneg %p188
      %p368 = pneg %p212
      %p369 = pneg %p209
      %p370 = pneg %p233
      %p371 = pneg %p230
      %p372 = pneg %p259
      %p373 = pneg %p256
      %s374 = smul.u32 3, %s23
      %p375 = scmp.lt.s32.totalorder %s374, 5
      %s376 = scalar_select %p375, %s374, 5
      %s377 = scalar_lea.vmem %s10, %s376
      %p378 = pneg %p285
      %p379 = pneg %p282
      %s380 = smul.u32 3, %s23
      %p381 = scmp.lt.s32.totalorder %s380, 5
      %s382 = scalar_select %p381, %s380, 5
      %s383 = scalar_lea.vmem %s11, %s382
      %s384 = smul.u32 3, %s23
      %p385 = scmp.lt.s32.totalorder %s384, 5
      %s386 = scalar_select %p385, %s384, 5
      %s387 = smul.addr %s386, 8
      %s388 = scalar_lea.vmem %s0, %s387
      %s389 = smul.u32 3, %s23
      %s390 = smul.u32 3, %s23
      %p391 = scmp.lt.s32.totalorder %s390, 5
      %s392 = scalar_select %p391, %s390, 5
      %s393 = scalar_lea.vmem %s10, %s392
      %s394 = smul.u32 3, %s23
      %s395 = smul.u32 3, %s23
      %p396 = scmp.lt.s32.totalorder %s395, 5
      %s397 = scalar_select %p396, %s395, 5
      %s398 = scalar_lea.vmem %s11, %s397
      %s399 = smul.u32 3, %s23
      %v401 = vld [vmem:[%s388] sm:$0xff]
      %v402 = vld [vmem:[%s388 + $0x8] sm:$0xff]
      %v403 = vld [vmem:[%s388 + $0x10] sm:$0xff]
      %v404 = vld [vmem:[%s1] sm:$0xf]
      %v405 = vld [vmem:[%s1 + $0x4] sm:$0xf]
      %v406 = vld [vmem:[%s1 + $0x8] sm:$0xf]
      %v407 = vld [vmem:[%s1 + $0xc] sm:$0xf]
      %v408 = vld [vmem:[%s2] sm:$0xf]
      %v409 = vld [vmem:[%s2 + $0x4] sm:$0xf]
      %v410 = vld [vmem:[%s2 + $0x8] sm:$0xf]
      %v411 = vld [vmem:[%s2 + $0xc] sm:$0xf]
      %v412 = vld [vmem:[%s3] sm:$0xf]
      %v413 = vld [vmem:[%s3 + $0x4] sm:$0xf]
      %v414 = vld [vmem:[%s3 + $0x8] sm:$0xf]
      %v415 = vld [vmem:[%s3 + $0xc] sm:$0xf]
      %v416 = vld [vmem:[%s4] sm:$0xf]
      %v417 = vld [vmem:[%s4 + $0x4] sm:$0xf]
      %v418 = vld [vmem:[%s4 + $0x8] sm:$0xf]
      %v419 = vld [vmem:[%s4 + $0xc] sm:$0xf]
      %v420 = vld [vmem:[%s4 + $0x10] sm:$0xf]
      %v421 = vld [vmem:[%s4 + $0x14] sm:$0xf]
      %v422 = vld [vmem:[%s4 + $0x18] sm:$0xf]
      %v423 = vld [vmem:[%s4 + $0x1c] sm:$0xf]
      %v424 = vld [vmem:[%s5] sm:$0x1]
      %v425 = vld [vmem:[%s6] sm:$0x3f]
      %v426 = vld [vmem:[%s7] sm:$0x1]
      %v427 = vpack.c.bf16 %v402, %v401
      %v428 = vpack.c.bf16 %v403, %v403
      %v430 = vlaneseq
      %v431 = vshrl.u32 %v430, 7
      %v432 = vsub.s32 0, %v431
      %v433 = vrot.slane %v424, %v432
      %v439 = vunpack.c.l.b16 %v404
      %v440 = vunpack.c.l.b16 %v405
      %v441 = vunpack.c.l.b16 %v406
      %v442 = vunpack.c.l.b16 %v407
      %v443 = vpack.c.b16 %v440, %v439
      %v444 = vpack.c.b16 %v442, %v441
      %vm447 = vcmask 261120
      %v449 = vsel %vm447, %v427, 0
      %v452 = vsel %vm447, %v428, 0
      %454 = vmatprep.subr.bf16.mxu0 0
      %455 = vmatpush1.bf16.msra.mxu0 0
      %456 = vmatprep.subr.bf16.mxu0 0
      %457 = vmatpush1.bf16.msra.mxu0 0
      %458 = vmatprep.subr.bf16.mxu0 0
      %459 = vmatpush1.bf16.msra.mxu0 0
      %460 = vmatprep.subr.bf16.mxu0 0
      %461 = vmatpush1.bf16.msra.mxu0 0
      %462 = vmatprep.subr.bf16.mxu0 0
      %463 = vmatpush1.bf16.msra.mxu0 0
      %464 = vmatprep.subr.bf16.mxu0 0
      %465 = vmatpush1.bf16.msra.mxu0 0
      %466 = vmatprep.subr.bf16.mxu0 0
      %467 = vmatpush1.bf16.msra.mxu0 %v444
      %468 = vmatprep.subr.bf16.mxu0 0
      %469 = vmatpush1.bf16.msra.mxu0 %v443
      %470 = vmatprep.subr.bf16.mxu0 0
      %471 = vmatpush2.bf16.msra.mxu0 0
      %472 = vmatprep.subr.bf16.mxu0 0
      %473 = vmatpush2.bf16.msra.mxu0 0
      %474 = vmatprep.subr.bf16.mxu0 0
      %475 = vmatpush2.bf16.msra.mxu0 0
      %476 = vmatprep.subr.bf16.mxu0 0
      %477 = vmatpush2.bf16.msra.mxu0 0
      %478 = vmatprep.subr.bf16.mxu0 0
      %479 = vmatpush2.bf16.msra.mxu0 0
      %480 = vmatprep.subr.bf16.mxu0 0
      %481 = vmatpush2.bf16.msra.mxu0 0
      %482 = vmatprep.subr.bf16.mxu0 0
      %483 = vmatpush2.bf16.msra.mxu0 0
      %484 = vmatprep.subr.bf16.mxu0 0
      %485 = vmatpush2.bf16.msra.mxu0 0
      %486 = vmatprep.mubr.bf16.mxu0 0
      %487 = vmatmul.mubr.bf16.gmra.mxu0 %v449
      %v488 = vpop.f32.mrf.mxu0
      %v489 = vadd.f32 %v433, %v488
      %v490 = vpop.f32.mrf.mxu0
      %v491 = vpop.f32.mrf.mxu0
      %v492 = vadd.f32 %v433, %v491
      %v493 = vpop.f32.mrf.mxu0
      %494 = vmatprep.mubr.bf16.mxu0 0
      %495 = vmatmul.mubr.bf16.gmra.mxu0 %v452
      %v496 = vpop.f32.mrf.mxu0
      %v497 = vadd.f32 %v433, %v496
      %v498 = vpop.f32.mrf.mxu0
      %v499 = vpop.f32.mrf.mxu0
      %v500 = vpop.f32.mrf.mxu0
      %501 = vdwg.mxu0
      %v502 = vpack.c.bf16 %v489, %v489
      %v503 = vpack.c.bf16 %v492, %v492
      %v504 = vpack.c.bf16 %v497, %v497
      %506 = vrot.lane.b32.xlu0 %v502, 96
      %v507 = vpop.permute.xlu0 %506
      %vm508 = vcmask 64512
      %v510 = vsel %vm508, %v502, 0
      %v513 = vsel %vm508, %v507, 0
      %515 = vmatprep.subr.bf16.mxu0 0
      %516 = vmatpush1.bf16.xpose.msra.mxu0 0
      %517 = vmatprep.subr.bf16.mxu0 0
      %518 = vmatpush1.bf16.xpose.msra.mxu0 0
      %519 = vmatprep.subr.bf16.mxu0 0
      %520 = vmatpush1.bf16.xpose.msra.mxu0 0
      %521 = vmatprep.subr.bf16.mxu0 0
      %522 = vmatpush1.bf16.xpose.msra.mxu0 0
      %523 = vmatprep.subr.bf16.mxu0 0
      %524 = vmatpush1.bf16.xpose.msra.mxu0 0
      %525 = vmatprep.subr.bf16.mxu0 0
      %526 = vmatpush1.bf16.xpose.msra.mxu0 0
      %527 = vmatprep.subr.bf16.mxu0 0
      %528 = vmatpush1.bf16.xpose.msra.mxu0 0
      %529 = vmatprep.subr.bf16.mxu0 0
      %530 = vmatpush1.bf16.xpose.msra.mxu0 %v513
      %531 = vmatprep.subr.bf16.mxu0 0
      %532 = vmatpush2.bf16.xpose.msra.mxu0 0
      %533 = vmatprep.subr.bf16.mxu0 0
      %534 = vmatpush2.bf16.xpose.msra.mxu0 0
      %535 = vmatprep.subr.bf16.mxu0 0
      %536 = vmatpush2.bf16.xpose.msra.mxu0 0
      %537 = vmatprep.subr.bf16.mxu0 0
      %538 = vmatpush2.bf16.xpose.msra.mxu0 0
      %539 = vmatprep.subr.bf16.mxu0 0
      %540 = vmatpush2.bf16.xpose.msra.mxu0 0
      %541 = vmatprep.subr.bf16.mxu0 0
      %542 = vmatpush2.bf16.xpose.msra.mxu0 0
      %543 = vmatprep.subr.bf16.mxu0 0
      %544 = vmatpush2.bf16.xpose.msra.mxu0 0
      %545 = vmatprep.subr.bf16.mxu0 0
      %546 = vmatpush2.bf16.xpose.msra.mxu0 0
      %547 = vmatprep.mubr.bf16.mxu0 0
      %548 = vmatmul.mubr.bf16.gmra.mxu0 %v510
      %v549 = vpop.f32.mrf.mxu0
      %v550 = vadd.f32 0.0, %v549
      %v551 = vpop.f32.mrf.mxu0
      %v552 = vpop.f32.mrf.mxu0
      %v553 = vpop.f32.mrf.mxu0
      %554 = vdwg.mxu0
      %556 = vrot.lane.b32.xlu0 %v503, 96
      %v557 = vpop.permute.xlu0 %556
      %v559 = vsel %vm508, %v503, 0
      %v562 = vsel %vm508, %v557, 0
      %564 = vmatprep.subr.bf16.mxu0 0
      %565 = vmatpush1.bf16.xpose.msra.mxu0 0
      %566 = vmatprep.subr.bf16.mxu0 0
      %567 = vmatpush1.bf16.xpose.msra.mxu0 0
      %568 = vmatprep.subr.bf16.mxu0 0
      %569 = vmatpush1.bf16.xpose.msra.mxu0 0
      %570 = vmatprep.subr.bf16.mxu0 0
      %571 = vmatpush1.bf16.xpose.msra.mxu0 0
      %572 = vmatprep.subr.bf16.mxu0 0
      %573 = vmatpush1.bf16.xpose.msra.mxu0 0
      %574 = vmatprep.subr.bf16.mxu0 0
      %575 = vmatpush1.bf16.xpose.msra.mxu0 0
      %576 = vmatprep.subr.bf16.mxu0 0
      %577 = vmatpush1.bf16.xpose.msra.mxu0 0
      %578 = vmatprep.subr.bf16.mxu0 0
      %579 = vmatpush1.bf16.xpose.msra.mxu0 %v562
      %580 = vmatprep.subr.bf16.mxu0 0
      %581 = vmatpush2.bf16.xpose.msra.mxu0 0
      %582 = vmatprep.subr.bf16.mxu0 0
      %583 = vmatpush2.bf16.xpose.msra.mxu0 0
      %584 = vmatprep.subr.bf16.mxu0 0
      %585 = vmatpush2.bf16.xpose.msra.mxu0 0
      %586 = vmatprep.subr.bf16.mxu0 0
      %587 = vmatpush2.bf16.xpose.msra.mxu0 0
      %588 = vmatprep.subr.bf16.mxu0 0
      %589 = vmatpush2.bf16.xpose.msra.mxu0 0
      %590 = vmatprep.subr.bf16.mxu0 0
      %591 = vmatpush2.bf16.xpose.msra.mxu0 0
      %592 = vmatprep.subr.bf16.mxu0 0
      %593 = vmatpush2.bf16.xpose.msra.mxu0 0
      %594 = vmatprep.subr.bf16.mxu0 0
      %595 = vmatpush2.bf16.xpose.msra.mxu0 0
      %596 = vmatprep.mubr.bf16.mxu0 0
      %597 = vmatmul.mubr.bf16.gmra.mxu0 %v559
      %v598 = vpop.f32.mrf.mxu0
      %v599 = vadd.f32 0.0, %v598
      %v600 = vpop.f32.mrf.mxu0
      %v601 = vpop.f32.mrf.mxu0
      %v602 = vpop.f32.mrf.mxu0
      %603 = vdwg.mxu0
      %605 = vrot.lane.b32.xlu0 %v504, 96
      %v606 = vpop.permute.xlu0 %605
      %v608 = vsel %vm508, %v504, 0
      %v611 = vsel %vm508, %v606, 0
      %613 = vmatprep.subr.bf16.mxu0 0
      %614 = vmatpush1.bf16.xpose.msra.mxu0 0
      %615 = vmatprep.subr.bf16.mxu0 0
      %616 = vmatpush1.bf16.xpose.msra.mxu0 0
      %617 = vmatprep.subr.bf16.mxu0 0
      %618 = vmatpush1.bf16.xpose.msra.mxu0 0
      %619 = vmatprep.subr.bf16.mxu0 0
      %620 = vmatpush1.bf16.xpose.msra.mxu0 0
      %621 = vmatprep.subr.bf16.mxu0 0
      %622 = vmatpush1.bf16.xpose.msra.mxu0 0
      %623 = vmatprep.subr.bf16.mxu0 0
      %624 = vmatpush1.bf16.xpose.msra.mxu0 0
      %625 = vmatprep.subr.bf16.mxu0 0
      %626 = vmatpush1.bf16.xpose.msra.mxu0 0
      %627 = vmatprep.subr.bf16.mxu0 0
      %628 = vmatpush1.bf16.xpose.msra.mxu0 %v611
      %629 = vmatprep.subr.bf16.mxu0 0
      %630 = vmatpush2.bf16.xpose.msra.mxu0 0
      %631 = vmatprep.subr.bf16.mxu0 0
      %632 = vmatpush2.bf16.xpose.msra.mxu0 0
      %633 = vmatprep.subr.bf16.mxu0 0
      %634 = vmatpush2.bf16.xpose.msra.mxu0 0
      %635 = vmatprep.subr.bf16.mxu0 0
      %636 = vmatpush2.bf16.xpose.msra.mxu0 0
      %637 = vmatprep.subr.bf16.mxu0 0
      %638 = vmatpush2.bf16.xpose.msra.mxu0 0
      %639 = vmatprep.subr.bf16.mxu0 0
      %640 = vmatpush2.bf16.xpose.msra.mxu0 0
      %641 = vmatprep.subr.bf16.mxu0 0
      %642 = vmatpush2.bf16.xpose.msra.mxu0 0
      %643 = vmatprep.subr.bf16.mxu0 0
      %644 = vmatpush2.bf16.xpose.msra.mxu0 0
      %645 = vmatprep.mubr.bf16.mxu0 0
      %646 = vmatmul.mubr.bf16.gmra.mxu0 %v608
      %v647 = vpop.f32.mrf.mxu0
      %v648 = vadd.f32 0.0, %v647
      %v649 = vpop.f32.mrf.mxu0
      %v650 = vpop.f32.mrf.mxu0
      %v651 = vpop.f32.mrf.mxu0
      %652 = vdwg.mxu0
      %v653 = vmul.f32 %v550, 0.35355338
      %v654 = vmul.f32 %v599, 0.35355338
      %v655 = vmul.f32 %v648, 0.35355338
      %v656 = vsel %vm508, %v653, -inf
      %657 = vmax.xlane.f32.xlu0 %v656
      %v658 = vpop.xlane.xlu0 %657
      %v659 = vsel %vm508, %v654, -inf
      %660 = vmax.xlane.f32.xlu0 %v659
      %v661 = vpop.xlane.xlu0 %660
      %v662 = vsel %vm508, %v655, -inf
      %663 = vmax.xlane.f32.xlu0 %v662
      %v664 = vpop.xlane.xlu0 %663
      %v665 = vsub.f32 %v653, %v658
      %v666 = vsub.f32 %v654, %v661
      %v667 = vsub.f32 %v655, %v664
      %v668 = vmul.f32 %v665, 1.442695
      %v669 = vpow.pop %v668
      %v670 = vmul.f32 %v666, 1.442695
      %v671 = vpow.pop %v670
      %v672 = vmul.f32 %v667, 1.442695
      %v673 = vpow.pop %v672
      %v674 = vsel %vm508, %v669, 0.0
      %675 = vadd.xlane.f32.xlu0 %v674
      %v676 = vpop.xlane.xlu0 %675
      %v677 = vsel %vm508, %v671, 0.0
      %678 = vadd.xlane.f32.xlu0 %v677
      %v679 = vpop.xlane.xlu0 %678
      %v680 = vsel %vm508, %v673, 0.0
      %681 = vadd.xlane.f32.xlu0 %v680
      %v682 = vpop.xlane.xlu0 %681
      %v683 = vrcp.pop %v676
      %v684 = vrcp.pop %v679
      %v685 = vrcp.pop %v682
      %v686 = vmul.f32 %v669, %v683
      %v687 = vmul.f32 %v671, %v684
      %v688 = vmul.f32 %v673, %v685
      %v689 = vpack.c.bf16 %v686, %v686
      %v690 = vpack.c.bf16 %v687, %v687
      %v691 = vpack.c.bf16 %v688, %v688
      %692 = vrot.lane.b32.xlu0 %v502, 64
      %v693 = vpop.permute.xlu0 %692
      %v695 = vsel %vm508, %v689, 0
      %vm697 = vcmask 1043456
      %v699 = vsel %vm697, %v693, 0
      %701 = vmatprep.subr.bf16.mxu0 0
      %702 = vmatpush1.bf16.msra.mxu0 0
      %703 = vmatprep.subr.bf16.mxu0 0
      %704 = vmatpush1.bf16.msra.mxu0 0
      %705 = vmatprep.subr.bf16.mxu0 0
      %706 = vmatpush1.bf16.msra.mxu0 0
      %707 = vmatprep.subr.bf16.mxu0 0
      %708 = vmatpush1.bf16.msra.mxu0 0
      %709 = vmatprep.subr.bf16.mxu0 0
      %710 = vmatpush1.bf16.msra.mxu0 0
      %711 = vmatprep.subr.bf16.mxu0 0
      %712 = vmatpush1.bf16.msra.mxu0 0
      %713 = vmatprep.subr.bf16.mxu0 0
      %714 = vmatpush1.bf16.msra.mxu0 0
      %715 = vmatprep.subr.bf16.mxu0 0
      %716 = vmatpush1.bf16.msra.mxu0 %v699
      %717 = vmatprep.subr.bf16.mxu0 0
      %718 = vmatpush2.bf16.msra.mxu0 0
      %719 = vmatprep.subr.bf16.mxu0 0
      %720 = vmatpush2.bf16.msra.mxu0 0
      %721 = vmatprep.subr.bf16.mxu0 0
      %722 = vmatpush2.bf16.msra.mxu0 0
      %723 = vmatprep.subr.bf16.mxu0 0
      %724 = vmatpush2.bf16.msra.mxu0 0
      %725 = vmatprep.subr.bf16.mxu0 0
      %726 = vmatpush2.bf16.msra.mxu0 0
      %727 = vmatprep.subr.bf16.mxu0 0
      %728 = vmatpush2.bf16.msra.mxu0 0
      %729 = vmatprep.subr.bf16.mxu0 0
      %730 = vmatpush2.bf16.msra.mxu0 0
      %731 = vmatprep.subr.bf16.mxu0 0
      %732 = vmatpush2.bf16.msra.mxu0 0
      %733 = vmatprep.mubr.bf16.mxu0 0
      %734 = vmatmul.mubr.bf16.gmra.mxu0 %v695
      %v735 = vpop.f32.mrf.mxu0
      %v736 = vadd.f32 0.0, %v735
      %v737 = vpop.f32.mrf.mxu0
      %v738 = vpop.f32.mrf.mxu0
      %v739 = vpop.f32.mrf.mxu0
      %740 = vdwg.mxu0
      %741 = vrot.lane.b32.xlu0 %v503, 64
      %v742 = vpop.permute.xlu0 %741
      %v744 = vsel %vm508, %v690, 0
      %v747 = vsel %vm697, %v742, 0
      %749 = vmatprep.subr.bf16.mxu0 0
      %750 = vmatpush1.bf16.msra.mxu0 0
      %751 = vmatprep.subr.bf16.mxu0 0
      %752 = vmatpush1.bf16.msra.mxu0 0
      %753 = vmatprep.subr.bf16.mxu0 0
      %754 = vmatpush1.bf16.msra.mxu0 0
      %755 = vmatprep.subr.bf16.mxu0 0
      %756 = vmatpush1.bf16.msra.mxu0 0
      %757 = vmatprep.subr.bf16.mxu0 0
      %758 = vmatpush1.bf16.msra.mxu0 0
      %759 = vmatprep.subr.bf16.mxu0 0
      %760 = vmatpush1.bf16.msra.mxu0 0
      %761 = vmatprep.subr.bf16.mxu0 0
      %762 = vmatpush1.bf16.msra.mxu0 0
      %763 = vmatprep.subr.bf16.mxu0 0
      %764 = vmatpush1.bf16.msra.mxu0 %v747
      %765 = vmatprep.subr.bf16.mxu0 0
      %766 = vmatpush2.bf16.msra.mxu0 0
      %767 = vmatprep.subr.bf16.mxu0 0
      %768 = vmatpush2.bf16.msra.mxu0 0
      %769 = vmatprep.subr.bf16.mxu0 0
      %770 = vmatpush2.bf16.msra.mxu0 0
      %771 = vmatprep.subr.bf16.mxu0 0
      %772 = vmatpush2.bf16.msra.mxu0 0
      %773 = vmatprep.subr.bf16.mxu0 0
      %774 = vmatpush2.bf16.msra.mxu0 0
      %775 = vmatprep.subr.bf16.mxu0 0
      %776 = vmatpush2.bf16.msra.mxu0 0
      %777 = vmatprep.subr.bf16.mxu0 0
      %778 = vmatpush2.bf16.msra.mxu0 0
      %779 = vmatprep.subr.bf16.mxu0 0
      %780 = vmatpush2.bf16.msra.mxu0 0
      %781 = vmatprep.mubr.bf16.mxu0 0
      %782 = vmatmul.mubr.bf16.gmra.mxu0 %v744
      %v783 = vpop.f32.mrf.mxu0
      %v784 = vadd.f32 0.0, %v783
      %v785 = vpop.f32.mrf.mxu0
      %v786 = vpop.f32.mrf.mxu0
      %v787 = vpop.f32.mrf.mxu0
      %788 = vdwg.mxu0
      %789 = vrot.lane.b32.xlu0 %v504, 64
      %v790 = vpop.permute.xlu0 %789
      %v792 = vsel %vm508, %v691, 0
      %v795 = vsel %vm697, %v790, 0
      %797 = vmatprep.subr.bf16.mxu0 0
      %798 = vmatpush1.bf16.msra.mxu0 0
      %799 = vmatprep.subr.bf16.mxu0 0
      %800 = vmatpush1.bf16.msra.mxu0 0
      %801 = vmatprep.subr.bf16.mxu0 0
      %802 = vmatpush1.bf16.msra.mxu0 0
      %803 = vmatprep.subr.bf16.mxu0 0
      %804 = vmatpush1.bf16.msra.mxu0 0
      %805 = vmatprep.subr.bf16.mxu0 0
      %806 = vmatpush1.bf16.msra.mxu0 0
      %807 = vmatprep.subr.bf16.mxu0 0
      %808 = vmatpush1.bf16.msra.mxu0 0
      %809 = vmatprep.subr.bf16.mxu0 0
      %810 = vmatpush1.bf16.msra.mxu0 0
      %811 = vmatprep.subr.bf16.mxu0 0
      %812 = vmatpush1.bf16.msra.mxu0 %v795
      %813 = vmatprep.subr.bf16.mxu0 0
      %814 = vmatpush2.bf16.msra.mxu0 0
      %815 = vmatprep.subr.bf16.mxu0 0
      %816 = vmatpush2.bf16.msra.mxu0 0
      %817 = vmatprep.subr.bf16.mxu0 0
      %818 = vmatpush2.bf16.msra.mxu0 0
      %819 = vmatprep.subr.bf16.mxu0 0
      %820 = vmatpush2.bf16.msra.mxu0 0
      %821 = vmatprep.subr.bf16.mxu0 0
      %822 = vmatpush2.bf16.msra.mxu0 0
      %823 = vmatprep.subr.bf16.mxu0 0
      %824 = vmatpush2.bf16.msra.mxu0 0
      %825 = vmatprep.subr.bf16.mxu0 0
      %826 = vmatpush2.bf16.msra.mxu0 0
      %827 = vmatprep.subr.bf16.mxu0 0
      %828 = vmatpush2.bf16.msra.mxu0 0
      %829 = vmatprep.mubr.bf16.mxu0 0
      %830 = vmatmul.mubr.bf16.gmra.mxu0 %v792
      %v831 = vpop.f32.mrf.mxu0
      %v832 = vadd.f32 0.0, %v831
      %v833 = vpop.f32.mrf.mxu0
      %v834 = vpop.f32.mrf.mxu0
      %v835 = vpop.f32.mrf.mxu0
      %836 = vdwg.mxu0
      %v837 = vpack.c.bf16 %v784, %v736
      %v838 = vpack.c.bf16 %v832, %v832
      %839 = vrot.lane.b32.xlu0 %v502, 120
      %v840 = vpop.permute.xlu0 %839
      %841 = vrot.lane.b32.xlu0 %v502, 88
      %v842 = vpop.permute.xlu0 %841
      %v844 = vsel %vm508, %v840, 0
      %v847 = vsel %vm508, %v842, 0
      %849 = vmatprep.subr.bf16.mxu0 0
      %850 = vmatpush1.bf16.xpose.msra.mxu0 0
      %851 = vmatprep.subr.bf16.mxu0 0
      %852 = vmatpush1.bf16.xpose.msra.mxu0 0
      %853 = vmatprep.subr.bf16.mxu0 0
      %854 = vmatpush1.bf16.xpose.msra.mxu0 0
      %855 = vmatprep.subr.bf16.mxu0 0
      %856 = vmatpush1.bf16.xpose.msra.mxu0 0
      %857 = vmatprep.subr.bf16.mxu0 0
      %858 = vmatpush1.bf16.xpose.msra.mxu0 0
      %859 = vmatprep.subr.bf16.mxu0 0
      %860 = vmatpush1.bf16.xpose.msra.mxu0 0
      %861 = vmatprep.subr.bf16.mxu0 0
      %862 = vmatpush1.bf16.xpose.msra.mxu0 0
      %863 = vmatprep.subr.bf16.mxu0 0
      %864 = vmatpush1.bf16.xpose.msra.mxu0 %v847
      %865 = vmatprep.subr.bf16.mxu0 0
      %866 = vmatpush2.bf16.xpose.msra.mxu0 0
      %867 = vmatprep.subr.bf16.mxu0 0
      %868 = vmatpush2.bf16.xpose.msra.mxu0 0
      %869 = vmatprep.subr.bf16.mxu0 0
      %870 = vmatpush2.bf16.xpose.msra.mxu0 0
      %871 = vmatprep.subr.bf16.mxu0 0
      %872 = vmatpush2.bf16.xpose.msra.mxu0 0
      %873 = vmatprep.subr.bf16.mxu0 0
      %874 = vmatpush2.bf16.xpose.msra.mxu0 0
      %875 = vmatprep.subr.bf16.mxu0 0
      %876 = vmatpush2.bf16.xpose.msra.mxu0 0
      %877 = vmatprep.subr.bf16.mxu0 0
      %878 = vmatpush2.bf16.xpose.msra.mxu0 0
      %879 = vmatprep.subr.bf16.mxu0 0
      %880 = vmatpush2.bf16.xpose.msra.mxu0 0
      %881 = vmatprep.mubr.bf16.mxu0 0
      %882 = vmatmul.mubr.bf16.gmra.mxu0 %v844
      %v883 = vpop.f32.mrf.mxu0
      %v884 = vadd.f32 0.0, %v883
      %v885 = vpop.f32.mrf.mxu0
      %v886 = vpop.f32.mrf.mxu0
      %v887 = vpop.f32.mrf.mxu0
      %888 = vdwg.mxu0
      %889 = vrot.lane.b32.xlu0 %v503, 120
      %v890 = vpop.permute.xlu0 %889
      %891 = vrot.lane.b32.xlu0 %v503, 88
      %v892 = vpop.permute.xlu0 %891
      %v894 = vsel %vm508, %v890, 0
      %v897 = vsel %vm508, %v892, 0
      %899 = vmatprep.subr.bf16.mxu0 0
      %900 = vmatpush1.bf16.xpose.msra.mxu0 0
      %901 = vmatprep.subr.bf16.mxu0 0
      %902 = vmatpush1.bf16.xpose.msra.mxu0 0
      %903 = vmatprep.subr.bf16.mxu0 0
      %904 = vmatpush1.bf16.xpose.msra.mxu0 0
      %905 = vmatprep.subr.bf16.mxu0 0
      %906 = vmatpush1.bf16.xpose.msra.mxu0 0
      %907 = vmatprep.subr.bf16.mxu0 0
      %908 = vmatpush1.bf16.xpose.msra.mxu0 0
      %909 = vmatprep.subr.bf16.mxu0 0
      %910 = vmatpush1.bf16.xpose.msra.mxu0 0
      %911 = vmatprep.subr.bf16.mxu0 0
      %912 = vmatpush1.bf16.xpose.msra.mxu0 0
      %913 = vmatprep.subr.bf16.mxu0 0
      %914 = vmatpush1.bf16.xpose.msra.mxu0 %v897
      %915 = vmatprep.subr.bf16.mxu0 0
      %916 = vmatpush2.bf16.xpose.msra.mxu0 0
      %917 = vmatprep.subr.bf16.mxu0 0
      %918 = vmatpush2.bf16.xpose.msra.mxu0 0
      %919 = vmatprep.subr.bf16.mxu0 0
      %920 = vmatpush2.bf16.xpose.msra.mxu0 0
      %921 = vmatprep.subr.bf16.mxu0 0
      %922 = vmatpush2.bf16.xpose.msra.mxu0 0
      %923 = vmatprep.subr.bf16.mxu0 0
      %924 = vmatpush2.bf16.xpose.msra.mxu0 0
      %925 = vmatprep.subr.bf16.mxu0 0
      %926 = vmatpush2.bf16.xpose.msra.mxu0 0
      %927 = vmatprep.subr.bf16.mxu0 0
      %928 = vmatpush2.bf16.xpose.msra.mxu0 0
      %929 = vmatprep.subr.bf16.mxu0 0
      %930 = vmatpush2.bf16.xpose.msra.mxu0 0
      %931 = vmatprep.mubr.bf16.mxu0 0
      %932 = vmatmul.mubr.bf16.gmra.mxu0 %v894
      %v933 = vpop.f32.mrf.mxu0
      %v934 = vadd.f32 0.0, %v933
      %v935 = vpop.f32.mrf.mxu0
      %v936 = vpop.f32.mrf.mxu0
      %v937 = vpop.f32.mrf.mxu0
      %938 = vdwg.mxu0
      %939 = vrot.lane.b32.xlu0 %v504, 120
      %v940 = vpop.permute.xlu0 %939
      %941 = vrot.lane.b32.xlu0 %v504, 88
      %v942 = vpop.permute.xlu0 %941
      %v944 = vsel %vm508, %v940, 0
      %v947 = vsel %vm508, %v942, 0
      %949 = vmatprep.subr.bf16.mxu0 0
      %950 = vmatpush1.bf16.xpose.msra.mxu0 0
      %951 = vmatprep.subr.bf16.mxu0 0
      %952 = vmatpush1.bf16.xpose.msra.mxu0 0
      %953 = vmatprep.subr.bf16.mxu0 0
      %954 = vmatpush1.bf16.xpose.msra.mxu0 0
      %955 = vmatprep.subr.bf16.mxu0 0
      %956 = vmatpush1.bf16.xpose.msra.mxu0 0
      %957 = vmatprep.subr.bf16.mxu0 0
      %958 = vmatpush1.bf16.xpose.msra.mxu0 0
      %959 = vmatprep.subr.bf16.mxu0 0
      %960 = vmatpush1.bf16.xpose.msra.mxu0 0
      %961 = vmatprep.subr.bf16.mxu0 0
      %962 = vmatpush1.bf16.xpose.msra.mxu0 0
      %963 = vmatprep.subr.bf16.mxu0 0
      %964 = vmatpush1.bf16.xpose.msra.mxu0 %v947
      %965 = vmatprep.subr.bf16.mxu0 0
      %966 = vmatpush2.bf16.xpose.msra.mxu0 0
      %967 = vmatprep.subr.bf16.mxu0 0
      %968 = vmatpush2.bf16.xpose.msra.mxu0 0
      %969 = vmatprep.subr.bf16.mxu0 0
      %970 = vmatpush2.bf16.xpose.msra.mxu0 0
      %971 = vmatprep.subr.bf16.mxu0 0
      %972 = vmatpush2.bf16.xpose.msra.mxu0 0
      %973 = vmatprep.subr.bf16.mxu0 0
      %974 = vmatpush2.bf16.xpose.msra.mxu0 0
      %975 = vmatprep.subr.bf16.mxu0 0
      %976 = vmatpush2.bf16.xpose.msra.mxu0 0
      %977 = vmatprep.subr.bf16.mxu0 0
      %978 = vmatpush2.bf16.xpose.msra.mxu0 0
      %979 = vmatprep.subr.bf16.mxu0 0
      %980 = vmatpush2.bf16.xpose.msra.mxu0 0
      %981 = vmatprep.mubr.bf16.mxu0 0
      %982 = vmatmul.mubr.bf16.gmra.mxu0 %v944
      %v983 = vpop.f32.mrf.mxu0
      %v984 = vadd.f32 0.0, %v983
      %v985 = vpop.f32.mrf.mxu0
      %v986 = vpop.f32.mrf.mxu0
      %v987 = vpop.f32.mrf.mxu0
      %988 = vdwg.mxu0
      %v989 = vmul.f32 %v884, 0.35355338
      %v990 = vmul.f32 %v934, 0.35355338
      %v991 = vmul.f32 %v984, 0.35355338
      %v992 = vsel %vm508, %v989, -inf
      %993 = vmax.xlane.f32.xlu0 %v992
      %v994 = vpop.xlane.xlu0 %993
      %v995 = vsel %vm508, %v990, -inf
      %996 = vmax.xlane.f32.xlu0 %v995
      %v997 = vpop.xlane.xlu0 %996
      %v998 = vsel %vm508, %v991, -inf
      %999 = vmax.xlane.f32.xlu0 %v998
      %v1000 = vpop.xlane.xlu0 %999
      %v1001 = vsub.f32 %v989, %v994
      %v1002 = vsub.f32 %v990, %v997
      %v1003 = vsub.f32 %v991, %v1000
      %v1004 = vmul.f32 %v1001, 1.442695
      %v1005 = vpow.pop %v1004
      %v1006 = vmul.f32 %v1002, 1.442695
      %v1007 = vpow.pop %v1006
      %v1008 = vmul.f32 %v1003, 1.442695
      %v1009 = vpow.pop %v1008
      %v1010 = vsel %vm508, %v1005, 0.0
      %1011 = vadd.xlane.f32.xlu0 %v1010
      %v1012 = vpop.xlane.xlu0 %1011
      %v1013 = vsel %vm508, %v1007, 0.0
      %1014 = vadd.xlane.f32.xlu0 %v1013
      %v1015 = vpop.xlane.xlu0 %1014
      %v1016 = vsel %vm508, %v1009, 0.0
      %1017 = vadd.xlane.f32.xlu0 %v1016
      %v1018 = vpop.xlane.xlu0 %1017
      %v1019 = vrcp.pop %v1012
      %v1020 = vrcp.pop %v1015
      %v1021 = vrcp.pop %v1018
      %v1022 = vmul.f32 %v1005, %v1019
      %v1023 = vmul.f32 %v1007, %v1020
      %v1024 = vmul.f32 %v1009, %v1021
      %v1025 = vpack.c.bf16 %v1022, %v1022
      %v1026 = vpack.c.bf16 %v1023, %v1023
      %v1027 = vpack.c.bf16 %v1024, %v1024
      %1028 = vrot.lane.b32.xlu0 %v502, 56
      %v1029 = vpop.permute.xlu0 %1028
      %v1031 = vsel %vm508, %v1025, 0
      %v1034 = vsel %vm697, %v1029, 0
      %1036 = vmatprep.subr.bf16.mxu0 0
      %1037 = vmatpush1.bf16.msra.mxu0 0
      %1038 = vmatprep.subr.bf16.mxu0 0
      %1039 = vmatpush1.bf16.msra.mxu0 0
      %1040 = vmatprep.subr.bf16.mxu0 0
      %1041 = vmatpush1.bf16.msra.mxu0 0
      %1042 = vmatprep.subr.bf16.mxu0 0
      %1043 = vmatpush1.bf16.msra.mxu0 0
      %1044 = vmatprep.subr.bf16.mxu0 0
      %1045 = vmatpush1.bf16.msra.mxu0 0
      %1046 = vmatprep.subr.bf16.mxu0 0
      %1047 = vmatpush1.bf16.msra.mxu0 0
      %1048 = vmatprep.subr.bf16.mxu0 0
      %1049 = vmatpush1.bf16.msra.mxu0 0
      %1050 = vmatprep.subr.bf16.mxu0 0
      %1051 = vmatpush1.bf16.msra.mxu0 %v1034
      %1052 = vmatprep.subr.bf16.mxu0 0
      %1053 = vmatpush2.bf16.msra.mxu0 0
      %1054 = vmatprep.subr.bf16.mxu0 0
      %1055 = vmatpush2.bf16.msra.mxu0 0
      %1056 = vmatprep.subr.bf16.mxu0 0
      %1057 = vmatpush2.bf16.msra.mxu0 0
      %1058 = vmatprep.subr.bf16.mxu0 0
      %1059 = vmatpush2.bf16.msra.mxu0 0
      %1060 = vmatprep.subr.bf16.mxu0 0
      %1061 = vmatpush2.bf16.msra.mxu0 0
      %1062 = vmatprep.subr.bf16.mxu0 0
      %1063 = vmatpush2.bf16.msra.mxu0 0
      %1064 = vmatprep.subr.bf16.mxu0 0
      %1065 = vmatpush2.bf16.msra.mxu0 0
      %1066 = vmatprep.subr.bf16.mxu0 0
      %1067 = vmatpush2.bf16.msra.mxu0 0
      %1068 = vmatprep.mubr.bf16.mxu0 0
      %1069 = vmatmul.mubr.bf16.gmra.mxu0 %v1031
      %v1070 = vpop.f32.mrf.mxu0
      %v1071 = vadd.f32 0.0, %v1070
      %v1072 = vpop.f32.mrf.mxu0
      %v1073 = vpop.f32.mrf.mxu0
      %v1074 = vpop.f32.mrf.mxu0
      %1075 = vdwg.mxu0
      %1076 = vrot.lane.b32.xlu0 %v503, 56
      %v1077 = vpop.permute.xlu0 %1076
      %v1079 = vsel %vm508, %v1026, 0
      %v1082 = vsel %vm697, %v1077, 0
      %1084 = vmatprep.subr.bf16.mxu0 0
      %1085 = vmatpush1.bf16.msra.mxu0 0
      %1086 = vmatprep.subr.bf16.mxu0 0
      %1087 = vmatpush1.bf16.msra.mxu0 0
      %1088 = vmatprep.subr.bf16.mxu0 0
      %1089 = vmatpush1.bf16.msra.mxu0 0
      %1090 = vmatprep.subr.bf16.mxu0 0
      %1091 = vmatpush1.bf16.msra.mxu0 0
      %1092 = vmatprep.subr.bf16.mxu0 0
      %1093 = vmatpush1.bf16.msra.mxu0 0
      %1094 = vmatprep.subr.bf16.mxu0 0
      %1095 = vmatpush1.bf16.msra.mxu0 0
      %1096 = vmatprep.subr.bf16.mxu0 0
      %1097 = vmatpush1.bf16.msra.mxu0 0
      %1098 = vmatprep.subr.bf16.mxu0 0
      %1099 = vmatpush1.bf16.msra.mxu0 %v1082
      %1100 = vmatprep.subr.bf16.mxu0 0
      %1101 = vmatpush2.bf16.msra.mxu0 0
      %1102 = vmatprep.subr.bf16.mxu0 0
      %1103 = vmatpush2.bf16.msra.mxu0 0
      %1104 = vmatprep.subr.bf16.mxu0 0
      %1105 = vmatpush2.bf16.msra.mxu0 0
      %1106 = vmatprep.subr.bf16.mxu0 0
      %1107 = vmatpush2.bf16.msra.mxu0 0
      %1108 = vmatprep.subr.bf16.mxu0 0
      %1109 = vmatpush2.bf16.msra.mxu0 0
      %1110 = vmatprep.subr.bf16.mxu0 0
      %1111 = vmatpush2.bf16.msra.mxu0 0
      %1112 = vmatprep.subr.bf16.mxu0 0
      %1113 = vmatpush2.bf16.msra.mxu0 0
      %1114 = vmatprep.subr.bf16.mxu0 0
      %1115 = vmatpush2.bf16.msra.mxu0 0
      %1116 = vmatprep.mubr.bf16.mxu0 0
      %1117 = vmatmul.mubr.bf16.gmra.mxu0 %v1079
      %v1118 = vpop.f32.mrf.mxu0
      %v1119 = vadd.f32 0.0, %v1118
      %v1120 = vpop.f32.mrf.mxu0
      %v1121 = vpop.f32.mrf.mxu0
      %v1122 = vpop.f32.mrf.mxu0
      %1123 = vdwg.mxu0
      %1124 = vrot.lane.b32.xlu0 %v504, 56
      %v1125 = vpop.permute.xlu0 %1124
      %v1127 = vsel %vm508, %v1027, 0
      %v1130 = vsel %vm697, %v1125, 0
      %1132 = vmatprep.subr.bf16.mxu0 0
      %1133 = vmatpush1.bf16.msra.mxu0 0
      %1134 = vmatprep.subr.bf16.mxu0 0
      %1135 = vmatpush1.bf16.msra.mxu0 0
      %1136 = vmatprep.subr.bf16.mxu0 0
      %1137 = vmatpush1.bf16.msra.mxu0 0
      %1138 = vmatprep.subr.bf16.mxu0 0
      %1139 = vmatpush1.bf16.msra.mxu0 0
      %1140 = vmatprep.subr.bf16.mxu0 0
      %1141 = vmatpush1.bf16.msra.mxu0 0
      %1142 = vmatprep.subr.bf16.mxu0 0
      %1143 = vmatpush1.bf16.msra.mxu0 0
      %1144 = vmatprep.subr.bf16.mxu0 0
      %1145 = vmatpush1.bf16.msra.mxu0 0
      %1146 = vmatprep.subr.bf16.mxu0 0
      %1147 = vmatpush1.bf16.msra.mxu0 %v1130
      %1148 = vmatprep.subr.bf16.mxu0 0
      %1149 = vmatpush2.bf16.msra.mxu0 0
      %1150 = vmatprep.subr.bf16.mxu0 0
      %1151 = vmatpush2.bf16.msra.mxu0 0
      %1152 = vmatprep.subr.bf16.mxu0 0
      %1153 = vmatpush2.bf16.msra.mxu0 0
      %1154 = vmatprep.subr.bf16.mxu0 0
      %1155 = vmatpush2.bf16.msra.mxu0 0
      %1156 = vmatprep.subr.bf16.mxu0 0
      %1157 = vmatpush2.bf16.msra.mxu0 0
      %1158 = vmatprep.subr.bf16.mxu0 0
      %1159 = vmatpush2.bf16.msra.mxu0 0
      %1160 = vmatprep.subr.bf16.mxu0 0
      %1161 = vmatpush2.bf16.msra.mxu0 0
      %1162 = vmatprep.subr.bf16.mxu0 0
      %1163 = vmatpush2.bf16.msra.mxu0 0
      %1164 = vmatprep.mubr.bf16.mxu0 0
      %1165 = vmatmul.mubr.bf16.gmra.mxu0 %v1127
      %v1166 = vpop.f32.mrf.mxu0
      %v1167 = vadd.f32 0.0, %v1166
      %v1168 = vpop.f32.mrf.mxu0
      %v1169 = vpop.f32.mrf.mxu0
      %v1170 = vpop.f32.mrf.mxu0
      %1171 = vdwg.mxu0
      %v1172 = vpack.c.bf16 %v1119, %v1071
      %v1173 = vpack.c.bf16 %v1167, %v1167
      %v1175 = vsel %vm508, %v1172, 0
      %v1178 = vsel %vm508, %v1173, 0
      %v1181 = vsel %vm697, %v409, 0
      %1183 = vmatprep.subr.bf16.mxu0 0
      %1184 = vmatpush1.bf16.msra.mxu0 0
      %1185 = vmatprep.subr.bf16.mxu0 0
      %1186 = vmatpush1.bf16.msra.mxu0 0
      %1187 = vmatprep.subr.bf16.mxu0 0
      %1188 = vmatpush1.bf16.msra.mxu0 0
      %1189 = vmatprep.subr.bf16.mxu0 0
      %1190 = vmatpush1.bf16.msra.mxu0 0
      %1191 = vmatprep.subr.bf16.mxu0 0
      %1192 = vmatpush1.bf16.msra.mxu0 0
      %1193 = vmatprep.subr.bf16.mxu0 0
      %1194 = vmatpush1.bf16.msra.mxu0 0
      %1195 = vmatprep.subr.bf16.mxu0 0
      %1196 = vmatpush1.bf16.msra.mxu0 0
      %1197 = vmatprep.subr.bf16.mxu0 0
      %1198 = vmatpush1.bf16.msra.mxu0 %v1181
      %1199 = vmatprep.subr.bf16.mxu0 0
      %1200 = vmatpush2.bf16.msra.mxu0 0
      %1201 = vmatprep.subr.bf16.mxu0 0
      %1202 = vmatpush2.bf16.msra.mxu0 0
      %1203 = vmatprep.subr.bf16.mxu0 0
      %1204 = vmatpush2.bf16.msra.mxu0 0
      %1205 = vmatprep.subr.bf16.mxu0 0
      %1206 = vmatpush2.bf16.msra.mxu0 0
      %1207 = vmatprep.subr.bf16.mxu0 0
      %1208 = vmatpush2.bf16.msra.mxu0 0
      %1209 = vmatprep.subr.bf16.mxu0 0
      %1210 = vmatpush2.bf16.msra.mxu0 0
      %1211 = vmatprep.subr.bf16.mxu0 0
      %1212 = vmatpush2.bf16.msra.mxu0 0
      %1213 = vmatprep.subr.bf16.mxu0 0
      %1214 = vmatpush2.bf16.msra.mxu0 0
      %1215 = vmatprep.mubr.bf16.mxu0 0
      %1216 = vmatmul.mubr.bf16.gmra.mxu0 %v1175
      %v1217 = vpop.f32.mrf.mxu0
      %v1218 = vadd.f32 0.0, %v1217
      %v1219 = vpop.f32.mrf.mxu0
      %v1220 = vpop.f32.mrf.mxu0
      %v1221 = vadd.f32 0.0, %v1220
      %v1222 = vpop.f32.mrf.mxu0
      %1223 = vmatprep.mubr.bf16.mxu0 0
      %1224 = vmatmul.mubr.bf16.gmra.mxu0 %v1178
      %v1225 = vpop.f32.mrf.mxu0
      %v1226 = vadd.f32 0.0, %v1225
      %v1227 = vpop.f32.mrf.mxu0
      %v1228 = vpop.f32.mrf.mxu0
      %v1229 = vpop.f32.mrf.mxu0
      %1230 = vdwg.mxu0
      %v1232 = vsel %vm508, %v837, 0
      %v1235 = vsel %vm508, %v838, 0
      %v1238 = vsel %vm697, %v408, 0
      %1240 = vmatprep.subr.bf16.mxu0 0
      %1241 = vmatpush1.bf16.msra.mxu0 0
      %1242 = vmatprep.subr.bf16.mxu0 0
      %1243 = vmatpush1.bf16.msra.mxu0 0
      %1244 = vmatprep.subr.bf16.mxu0 0
      %1245 = vmatpush1.bf16.msra.mxu0 0
      %1246 = vmatprep.subr.bf16.mxu0 0
      %1247 = vmatpush1.bf16.msra.mxu0 0
      %1248 = vmatprep.subr.bf16.mxu0 0
      %1249 = vmatpush1.bf16.msra.mxu0 0
      %1250 = vmatprep.subr.bf16.mxu0 0
      %1251 = vmatpush1.bf16.msra.mxu0 0
      %1252 = vmatprep.subr.bf16.mxu0 0
      %1253 = vmatpush1.bf16.msra.mxu0 0
      %1254 = vmatprep.subr.bf16.mxu0 0
      %1255 = vmatpush1.bf16.msra.mxu0 %v1238
      %1256 = vmatprep.subr.bf16.mxu0 0
      %1257 = vmatpush2.bf16.msra.mxu0 0
      %1258 = vmatprep.subr.bf16.mxu0 0
      %1259 = vmatpush2.bf16.msra.mxu0 0
      %1260 = vmatprep.subr.bf16.mxu0 0
      %1261 = vmatpush2.bf16.msra.mxu0 0
      %1262 = vmatprep.subr.bf16.mxu0 0
      %1263 = vmatpush2.bf16.msra.mxu0 0
      %1264 = vmatprep.subr.bf16.mxu0 0
      %1265 = vmatpush2.bf16.msra.mxu0 0
      %1266 = vmatprep.subr.bf16.mxu0 0
      %1267 = vmatpush2.bf16.msra.mxu0 0
      %1268 = vmatprep.subr.bf16.mxu0 0
      %1269 = vmatpush2.bf16.msra.mxu0 0
      %1270 = vmatprep.subr.bf16.mxu0 0
      %1271 = vmatpush2.bf16.msra.mxu0 0
      %1272 = vmatprep.mubr.bf16.mxu0 0
      %1273 = vmatmul.mubr.bf16.gmra.mxu0 %v1232
      %v1274 = vpop.f32.mrf.mxu0
      %v1275 = vadd.f32 %v1218, %v1274
      %v1276 = vpop.f32.mrf.mxu0
      %v1277 = vpop.f32.mrf.mxu0
      %v1278 = vadd.f32 %v1221, %v1277
      %v1279 = vpop.f32.mrf.mxu0
      %1280 = vmatprep.mubr.bf16.mxu0 0
      %1281 = vmatmul.mubr.bf16.gmra.mxu0 %v1235
      %v1282 = vpop.f32.mrf.mxu0
      %v1283 = vadd.f32 %v1226, %v1282
      %v1284 = vpop.f32.mrf.mxu0
      %v1285 = vpop.f32.mrf.mxu0
      %v1286 = vpop.f32.mrf.mxu0
      %1287 = vdwg.mxu0
      %1288 = vrot.lane.b32.xlu0 %v502, 112
      %v1289 = vpop.permute.xlu0 %1288
      %1290 = vrot.lane.b32.xlu0 %v502, 80
      %v1291 = vpop.permute.xlu0 %1290
      %v1293 = vsel %vm508, %v1289, 0
      %v1296 = vsel %vm508, %v1291, 0
      %1298 = vmatprep.subr.bf16.mxu0 0
      %1299 = vmatpush1.bf16.xpose.msra.mxu0 0
      %1300 = vmatprep.subr.bf16.mxu0 0
      %1301 = vmatpush1.bf16.xpose.msra.mxu0 0
      %1302 = vmatprep.subr.bf16.mxu0 0
      %1303 = vmatpush1.bf16.xpose.msra.mxu0 0
      %1304 = vmatprep.subr.bf16.mxu0 0
      %1305 = vmatpush1.bf16.xpose.msra.mxu0 0
      %1306 = vmatprep.subr.bf16.mxu0 0
      %1307 = vmatpush1.bf16.xpose.msra.mxu0 0
      %1308 = vmatprep.subr.bf16.mxu0 0
      %1309 = vmatpush1.bf16.xpose.msra.mxu0 0
      %1310 = vmatprep.subr.bf16.mxu0 0
      %1311 = vmatpush1.bf16.xpose.msra.mxu0 0
      %1312 = vmatprep.subr.bf16.mxu0 0
      %1313 = vmatpush1.bf16.xpose.msra.mxu0 %v1296
      %1314 = vmatprep.subr.bf16.mxu0 0
      %1315 = vmatpush2.bf16.xpose.msra.mxu0 0
      %1316 = vmatprep.subr.bf16.mxu0 0
      %1317 = vmatpush2.bf16.xpose.msra.mxu0 0
      %1318 = vmatprep.subr.bf16.mxu0 0
      %1319 = vmatpush2.bf16.xpose.msra.mxu0 0
      %1320 = vmatprep.subr.bf16.mxu0 0
      %1321 = vmatpush2.bf16.xpose.msra.mxu0 0
      %1322 = vmatprep.subr.bf16.mxu0 0
      %1323 = vmatpush2.bf16.xpose.msra.mxu0 0
      %1324 = vmatprep.subr.bf16.mxu0 0
      %1325 = vmatpush2.bf16.xpose.msra.mxu0 0
      %1326 = vmatprep.subr.bf16.mxu0 0
      %1327 = vmatpush2.bf16.xpose.msra.mxu0 0
      %1328 = vmatprep.subr.bf16.mxu0 0
      %1329 = vmatpush2.bf16.xpose.msra.mxu0 0
      %1330 = vmatprep.mubr.bf16.mxu0 0
      %1331 = vmatmul.mubr.bf16.gmra.mxu0 %v1293
      %v1332 = vpop.f32.mrf.mxu0
      %v1333 = vadd.f32 0.0, %v1332
      %v1334 = vpop.f32.mrf.mxu0
      %v1335 = vpop.f32.mrf.mxu0
      %v1336 = vpop.f32.mrf.mxu0
      %1337 = vdwg.mxu0
      %1338 = vrot.lane.b32.xlu0 %v503, 112
      %v1339 = vpop.permute.xlu0 %1338
      %1340 = vrot.lane.b32.xlu0 %v503, 80
      %v1341 = vpop.permute.xlu0 %1340
      %v1343 = vsel %vm508, %v1339, 0
      %v1346 = vsel %vm508, %v1341, 0
      %1348 = vmatprep.subr.bf16.mxu0 0
      %1349 = vmatpush1.bf16.xpose.msra.mxu0 0
      %1350 = vmatprep.subr.bf16.mxu0 0
      %1351 = vmatpush1.bf16.xpose.msra.mxu0 0
      %1352 = vmatprep.subr.bf16.mxu0 0
      %1353 = vmatpush1.bf16.xpose.msra.mxu0 0
      %1354 = vmatprep.subr.bf16.mxu0 0
      %1355 = vmatpush1.bf16.xpose.msra.mxu0 0
      %1356 = vmatprep.subr.bf16.mxu0 0
      %1357 = vmatpush1.bf16.xpose.msra.mxu0 0
      %1358 = vmatprep.subr.bf16.mxu0 0
      %1359 = vmatpush1.bf16.xpose.msra.mxu0 0
      %1360 = vmatprep.subr.bf16.mxu0 0
      %1361 = vmatpush1.bf16.xpose.msra.mxu0 0
      %1362 = vmatprep.subr.bf16.mxu0 0
      %1363 = vmatpush1.bf16.xpose.msra.mxu0 %v1346
      %1364 = vmatprep.subr.bf16.mxu0 0
      %1365 = vmatpush2.bf16.xpose.msra.mxu0 0
      %1366 = vmatprep.subr.bf16.mxu0 0
      %1367 = vmatpush2.bf16.xpose.msra.mxu0 0
      %1368 = vmatprep.subr.bf16.mxu0 0
      %1369 = vmatpush2.bf16.xpose.msra.mxu0 0
      %1370 = vmatprep.subr.bf16.mxu0 0
      %1371 = vmatpush2.bf16.xpose.msra.mxu0 0
      %1372 = vmatprep.subr.bf16.mxu0 0
      %1373 = vmatpush2.bf16.xpose.msra.mxu0 0
      %1374 = vmatprep.subr.bf16.mxu0 0
      %1375 = vmatpush2.bf16.xpose.msra.mxu0 0
      %1376 = vmatprep.subr.bf16.mxu0 0
      %1377 = vmatpush2.bf16.xpose.msra.mxu0 0
      %1378 = vmatprep.subr.bf16.mxu0 0
      %1379 = vmatpush2.bf16.xpose.msra.mxu0 0
      %1380 = vmatprep.mubr.bf16.mxu0 0
      %1381 = vmatmul.mubr.bf16.gmra.mxu0 %v1343
      %v1382 = vpop.f32.mrf.mxu0
      %v1383 = vadd.f32 0.0, %v1382
      %v1384 = vpop.f32.mrf.mxu0
      %v1385 = vpop.f32.mrf.mxu0
      %v1386 = vpop.f32.mrf.mxu0
      %1387 = vdwg.mxu0
      %1388 = vrot.lane.b32.xlu0 %v504, 112
      %v1389 = vpop.permute.xlu0 %1388
      %1390 = vrot.lane.b32.xlu0 %v504, 80
      %v1391 = vpop.permute.xlu0 %1390
      %v1393 = vsel %vm508, %v1389, 0
      %v1396 = vsel %vm508, %v1391, 0
      %1398 = vmatprep.subr.bf16.mxu0 0
      %1399 = vmatpush1.bf16.xpose.msra.mxu0 0
      %1400 = vmatprep.subr.bf16.mxu0 0
      %1401 = vmatpush1.bf16.xpose.msra.mxu0 0
      %1402 = vmatprep.subr.bf16.mxu0 0
      %1403 = vmatpush1.bf16.xpose.msra.mxu0 0
      %1404 = vmatprep.subr.bf16.mxu0 0
      %1405 = vmatpush1.bf16.xpose.msra.mxu0 0
      %1406 = vmatprep.subr.bf16.mxu0 0
      %1407 = vmatpush1.bf16.xpose.msra.mxu0 0
      %1408 = vmatprep.subr.bf16.mxu0 0
      %1409 = vmatpush1.bf16.xpose.msra.mxu0 0
      %1410 = vmatprep.subr.bf16.mxu0 0
      %1411 = vmatpush1.bf16.xpose.msra.mxu0 0
      %1412 = vmatprep.subr.bf16.mxu0 0
      %1413 = vmatpush1.bf16.xpose.msra.mxu0 %v1396
      %1414 = vmatprep.subr.bf16.mxu0 0
      %1415 = vmatpush2.bf16.xpose.msra.mxu0 0
      %1416 = vmatprep.subr.bf16.mxu0 0
      %1417 = vmatpush2.bf16.xpose.msra.mxu0 0
      %1418 = vmatprep.subr.bf16.mxu0 0
      %1419 = vmatpush2.bf16.xpose.msra.mxu0 0
      %1420 = vmatprep.subr.bf16.mxu0 0
      %1421 = vmatpush2.bf16.xpose.msra.mxu0 0
      %1422 = vmatprep.subr.bf16.mxu0 0
      %1423 = vmatpush2.bf16.xpose.msra.mxu0 0
      %1424 = vmatprep.subr.bf16.mxu0 0
      %1425 = vmatpush2.bf16.xpose.msra.mxu0 0
      %1426 = vmatprep.subr.bf16.mxu0 0
      %1427 = vmatpush2.bf16.xpose.msra.mxu0 0
      %1428 = vmatprep.subr.bf16.mxu0 0
      %1429 = vmatpush2.bf16.xpose.msra.mxu0 0
      %1430 = vmatprep.mubr.bf16.mxu0 0
      %1431 = vmatmul.mubr.bf16.gmra.mxu0 %v1393
      %v1432 = vpop.f32.mrf.mxu0
      %v1433 = vadd.f32 0.0, %v1432
      %v1434 = vpop.f32.mrf.mxu0
      %v1435 = vpop.f32.mrf.mxu0
      %v1436 = vpop.f32.mrf.mxu0
      %1437 = vdwg.mxu0
      %v1438 = vmul.f32 %v1333, 0.35355338
      %v1439 = vmul.f32 %v1383, 0.35355338
      %v1440 = vmul.f32 %v1433, 0.35355338
      %v1441 = vsel %vm508, %v1438, -inf
      %1442 = vmax.xlane.f32.xlu0 %v1441
      %v1443 = vpop.xlane.xlu0 %1442
      %v1444 = vsel %vm508, %v1439, -inf
      %1445 = vmax.xlane.f32.xlu0 %v1444
      %v1446 = vpop.xlane.xlu0 %1445
      %v1447 = vsel %vm508, %v1440, -inf
      %1448 = vmax.xlane.f32.xlu0 %v1447
      %v1449 = vpop.xlane.xlu0 %1448
      %v1450 = vsub.f32 %v1438, %v1443
      %v1451 = vsub.f32 %v1439, %v1446
      %v1452 = vsub.f32 %v1440, %v1449
      %v1453 = vmul.f32 %v1450, 1.442695
      %v1454 = vpow.pop %v1453
      %v1455 = vmul.f32 %v1451, 1.442695
      %v1456 = vpow.pop %v1455
      %v1457 = vmul.f32 %v1452, 1.442695
      %v1458 = vpow.pop %v1457
      %v1459 = vsel %vm508, %v1454, 0.0
      %1460 = vadd.xlane.f32.xlu0 %v1459
      %v1461 = vpop.xlane.xlu0 %1460
      %v1462 = vsel %vm508, %v1456, 0.0
      %1463 = vadd.xlane.f32.xlu0 %v1462
      %v1464 = vpop.xlane.xlu0 %1463
      %v1465 = vsel %vm508, %v1458, 0.0
      %1466 = vadd.xlane.f32.xlu0 %v1465
      %v1467 = vpop.xlane.xlu0 %1466
      %v1468 = vrcp.pop %v1461
      %v1469 = vrcp.pop %v1464
      %v1470 = vrcp.pop %v1467
      %v1471 = vmul.f32 %v1454, %v1468
      %v1472 = vmul.f32 %v1456, %v1469
      %v1473 = vmul.f32 %v1458, %v1470
      %v1474 = vpack.c.bf16 %v1471, %v1471
      %v1475 = vpack.c.bf16 %v1472, %v1472
      %v1476 = vpack.c.bf16 %v1473, %v1473
      %1477 = vrot.lane.b32.xlu0 %v502, 48
      %v1478 = vpop.permute.xlu0 %1477
      %v1480 = vsel %vm508, %v1474, 0
      %v1483 = vsel %vm697, %v1478, 0
      %1485 = vmatprep.subr.bf16.mxu0 0
      %1486 = vmatpush1.bf16.msra.mxu0 0
      %1487 = vmatprep.subr.bf16.mxu0 0
      %1488 = vmatpush1.bf16.msra.mxu0 0
      %1489 = vmatprep.subr.bf16.mxu0 0
      %1490 = vmatpush1.bf16.msra.mxu0 0
      %1491 = vmatprep.subr.bf16.mxu0 0
      %1492 = vmatpush1.bf16.msra.mxu0 0
      %1493 = vmatprep.subr.bf16.mxu0 0
      %1494 = vmatpush1.bf16.msra.mxu0 0
      %1495 = vmatprep.subr.bf16.mxu0 0
      %1496 = vmatpush1.bf16.msra.mxu0 0
      %1497 = vmatprep.subr.bf16.mxu0 0
      %1498 = vmatpush1.bf16.msra.mxu0 0
      %1499 = vmatprep.subr.bf16.mxu0 0
      %1500 = vmatpush1.bf16.msra.mxu0 %v1483
      %1501 = vmatprep.subr.bf16.mxu0 0
      %1502 = vmatpush2.bf16.msra.mxu0 0
      %1503 = vmatprep.subr.bf16.mxu0 0
      %1504 = vmatpush2.bf16.msra.mxu0 0
      %1505 = vmatprep.subr.bf16.mxu0 0
      %1506 = vmatpush2.bf16.msra.mxu0 0
      %1507 = vmatprep.subr.bf16.mxu0 0
      %1508 = vmatpush2.bf16.msra.mxu0 0
      %1509 = vmatprep.subr.bf16.mxu0 0
      %1510 = vmatpush2.bf16.msra.mxu0 0
      %1511 = vmatprep.subr.bf16.mxu0 0
      %1512 = vmatpush2.bf16.msra.mxu0 0
      %1513 = vmatprep.subr.bf16.mxu0 0
      %1514 = vmatpush2.bf16.msra.mxu0 0
      %1515 = vmatprep.subr.bf16.mxu0 0
      %1516 = vmatpush2.bf16.msra.mxu0 0
      %1517 = vmatprep.mubr.bf16.mxu0 0
      %1518 = vmatmul.mubr.bf16.gmra.mxu0 %v1480
      %v1519 = vpop.f32.mrf.mxu0
      %v1520 = vadd.f32 0.0, %v1519
      %v1521 = vpop.f32.mrf.mxu0
      %v1522 = vpop.f32.mrf.mxu0
      %v1523 = vpop.f32.mrf.mxu0
      %1524 = vdwg.mxu0
      %1525 = vrot.lane.b32.xlu0 %v503, 48
      %v1526 = vpop.permute.xlu0 %1525
      %v1528 = vsel %vm508, %v1475, 0
      %v1531 = vsel %vm697, %v1526, 0
      %1533 = vmatprep.subr.bf16.mxu0 0
      %1534 = vmatpush1.bf16.msra.mxu0 0
      %1535 = vmatprep.subr.bf16.mxu0 0
      %1536 = vmatpush1.bf16.msra.mxu0 0
      %1537 = vmatprep.subr.bf16.mxu0 0
      %1538 = vmatpush1.bf16.msra.mxu0 0
      %1539 = vmatprep.subr.bf16.mxu0 0
      %1540 = vmatpush1.bf16.msra.mxu0 0
      %1541 = vmatprep.subr.bf16.mxu0 0
      %1542 = vmatpush1.bf16.msra.mxu0 0
      %1543 = vmatprep.subr.bf16.mxu0 0
      %1544 = vmatpush1.bf16.msra.mxu0 0
      %1545 = vmatprep.subr.bf16.mxu0 0
      %1546 = vmatpush1.bf16.msra.mxu0 0
      %1547 = vmatprep.subr.bf16.mxu0 0
      %1548 = vmatpush1.bf16.msra.mxu0 %v1531
      %1549 = vmatprep.subr.bf16.mxu0 0
      %1550 = vmatpush2.bf16.msra.mxu0 0
      %1551 = vmatprep.subr.bf16.mxu0 0
      %1552 = vmatpush2.bf16.msra.mxu0 0
      %1553 = vmatprep.subr.bf16.mxu0 0
      %1554 = vmatpush2.bf16.msra.mxu0 0
      %1555 = vmatprep.subr.bf16.mxu0 0
      %1556 = vmatpush2.bf16.msra.mxu0 0
      %1557 = vmatprep.subr.bf16.mxu0 0
      %1558 = vmatpush2.bf16.msra.mxu0 0
      %1559 = vmatprep.subr.bf16.mxu0 0
      %1560 = vmatpush2.bf16.msra.mxu0 0
      %1561 = vmatprep.subr.bf16.mxu0 0
      %1562 = vmatpush2.bf16.msra.mxu0 0
      %1563 = vmatprep.subr.bf16.mxu0 0
      %1564 = vmatpush2.bf16.msra.mxu0 0
      %1565 = vmatprep.mubr.bf16.mxu0 0
      %1566 = vmatmul.mubr.bf16.gmra.mxu0 %v1528
      %v1567 = vpop.f32.mrf.mxu0
      %v1568 = vadd.f32 0.0, %v1567
      %v1569 = vpop.f32.mrf.mxu0
      %v1570 = vpop.f32.mrf.mxu0
      %v1571 = vpop.f32.mrf.mxu0
      %1572 = vdwg.mxu0
      %1573 = vrot.lane.b32.xlu0 %v504, 48
      %v1574 = vpop.permute.xlu0 %1573
      %v1576 = vsel %vm508, %v1476, 0
      %v1579 = vsel %vm697, %v1574, 0
      %1581 = vmatprep.subr.bf16.mxu0 0
      %1582 = vmatpush1.bf16.msra.mxu0 0
      %1583 = vmatprep.subr.bf16.mxu0 0
      %1584 = vmatpush1.bf16.msra.mxu0 0
      %1585 = vmatprep.subr.bf16.mxu0 0
      %1586 = vmatpush1.bf16.msra.mxu0 0
      %1587 = vmatprep.subr.bf16.mxu0 0
      %1588 = vmatpush1.bf16.msra.mxu0 0
      %1589 = vmatprep.subr.bf16.mxu0 0
      %1590 = vmatpush1.bf16.msra.mxu0 0
      %1591 = vmatprep.subr.bf16.mxu0 0
      %1592 = vmatpush1.bf16.msra.mxu0 0
      %1593 = vmatprep.subr.bf16.mxu0 0
      %1594 = vmatpush1.bf16.msra.mxu0 0
      %1595 = vmatprep.subr.bf16.mxu0 0
      %1596 = vmatpush1.bf16.msra.mxu0 %v1579
      %1597 = vmatprep.subr.bf16.mxu0 0
      %1598 = vmatpush2.bf16.msra.mxu0 0
      %1599 = vmatprep.subr.bf16.mxu0 0
      %1600 = vmatpush2.bf16.msra.mxu0 0
      %1601 = vmatprep.subr.bf16.mxu0 0
      %1602 = vmatpush2.bf16.msra.mxu0 0
      %1603 = vmatprep.subr.bf16.mxu0 0
      %1604 = vmatpush2.bf16.msra.mxu0 0
      %1605 = vmatprep.subr.bf16.mxu0 0
      %1606 = vmatpush2.bf16.msra.mxu0 0
      %1607 = vmatprep.subr.bf16.mxu0 0
      %1608 = vmatpush2.bf16.msra.mxu0 0
      %1609 = vmatprep.subr.bf16.mxu0 0
      %1610 = vmatpush2.bf16.msra.mxu0 0
      %1611 = vmatprep.subr.bf16.mxu0 0
      %1612 = vmatpush2.bf16.msra.mxu0 0
      %1613 = vmatprep.mubr.bf16.mxu0 0
      %1614 = vmatmul.mubr.bf16.gmra.mxu0 %v1576
      %v1615 = vpop.f32.mrf.mxu0
      %v1616 = vadd.f32 0.0, %v1615
      %v1617 = vpop.f32.mrf.mxu0
      %v1618 = vpop.f32.mrf.mxu0
      %v1619 = vpop.f32.mrf.mxu0
      %1620 = vdwg.mxu0
      %v1621 = vpack.c.bf16 %v1568, %v1520
      %v1622 = vpack.c.bf16 %v1616, %v1616
      %v1624 = vsel %vm508, %v1621, 0
      %v1627 = vsel %vm508, %v1622, 0
      %v1630 = vsel %vm697, %v410, 0
      %1632 = vmatprep.subr.bf16.mxu0 0
      %1633 = vmatpush1.bf16.msra.mxu0 0
      %1634 = vmatprep.subr.bf16.mxu0 0
      %1635 = vmatpush1.bf16.msra.mxu0 0
      %1636 = vmatprep.subr.bf16.mxu0 0
      %1637 = vmatpush1.bf16.msra.mxu0 0
      %1638 = vmatprep.subr.bf16.mxu0 0
      %1639 = vmatpush1.bf16.msra.mxu0 0
      %1640 = vmatprep.subr.bf16.mxu0 0
      %1641 = vmatpush1.bf16.msra.mxu0 0
      %1642 = vmatprep.subr.bf16.mxu0 0
      %1643 = vmatpush1.bf16.msra.mxu0 0
      %1644 = vmatprep.subr.bf16.mxu0 0
      %1645 = vmatpush1.bf16.msra.mxu0 0
      %1646 = vmatprep.subr.bf16.mxu0 0
      %1647 = vmatpush1.bf16.msra.mxu0 %v1630
      %1648 = vmatprep.subr.bf16.mxu0 0
      %1649 = vmatpush2.bf16.msra.mxu0 0
      %1650 = vmatprep.subr.bf16.mxu0 0
      %1651 = vmatpush2.bf16.msra.mxu0 0
      %1652 = vmatprep.subr.bf16.mxu0 0
      %1653 = vmatpush2.bf16.msra.mxu0 0
      %1654 = vmatprep.subr.bf16.mxu0 0
      %1655 = vmatpush2.bf16.msra.mxu0 0
      %1656 = vmatprep.subr.bf16.mxu0 0
      %1657 = vmatpush2.bf16.msra.mxu0 0
      %1658 = vmatprep.subr.bf16.mxu0 0
      %1659 = vmatpush2.bf16.msra.mxu0 0
      %1660 = vmatprep.subr.bf16.mxu0 0
      %1661 = vmatpush2.bf16.msra.mxu0 0
      %1662 = vmatprep.subr.bf16.mxu0 0
      %1663 = vmatpush2.bf16.msra.mxu0 0
      %1664 = vmatprep.mubr.bf16.mxu0 0
      %1665 = vmatmul.mubr.bf16.gmra.mxu0 %v1624
      %v1666 = vpop.f32.mrf.mxu0
      %v1667 = vadd.f32 0.0, %v1666
      %v1668 = vpop.f32.mrf.mxu0
      %v1669 = vpop.f32.mrf.mxu0
      %v1670 = vadd.f32 0.0, %v1669
      %v1671 = vpop.f32.mrf.mxu0
      %1672 = vmatprep.mubr.bf16.mxu0 0
      %1673 = vmatmul.mubr.bf16.gmra.mxu0 %v1627
      %v1674 = vpop.f32.mrf.mxu0
      %v1675 = vadd.f32 0.0, %v1674
      %v1676 = vpop.f32.mrf.mxu0
      %v1677 = vpop.f32.mrf.mxu0
      %v1678 = vpop.f32.mrf.mxu0
      %1679 = vdwg.mxu0
      %v1680 = vadd.f32 %v1275, %v1667
      %v1681 = vadd.f32 %v1278, %v1670
      %v1682 = vadd.f32 %v1283, %v1675
      %1683 = vrot.lane.b32.xlu0 %v502, 104
      %v1684 = vpop.permute.xlu0 %1683
      %1685 = vrot.lane.b32.xlu0 %v502, 72
      %v1686 = vpop.permute.xlu0 %1685
      %v1688 = vsel %vm508, %v1684, 0
      %v1691 = vsel %vm508, %v1686, 0
      %1693 = vmatprep.subr.bf16.mxu0 0
      %1694 = vmatpush1.bf16.xpose.msra.mxu0 0
      %1695 = vmatprep.subr.bf16.mxu0 0
      %1696 = vmatpush1.bf16.xpose.msra.mxu0 0
      %1697 = vmatprep.subr.bf16.mxu0 0
      %1698 = vmatpush1.bf16.xpose.msra.mxu0 0
      %1699 = vmatprep.subr.bf16.mxu0 0
      %1700 = vmatpush1.bf16.xpose.msra.mxu0 0
      %1701 = vmatprep.subr.bf16.mxu0 0
      %1702 = vmatpush1.bf16.xpose.msra.mxu0 0
      %1703 = vmatprep.subr.bf16.mxu0 0
      %1704 = vmatpush1.bf16.xpose.msra.mxu0 0
      %1705 = vmatprep.subr.bf16.mxu0 0
      %1706 = vmatpush1.bf16.xpose.msra.mxu0 0
      %1707 = vmatprep.subr.bf16.mxu0 0
      %1708 = vmatpush1.bf16.xpose.msra.mxu0 %v1691
      %1709 = vmatprep.subr.bf16.mxu0 0
      %1710 = vmatpush2.bf16.xpose.msra.mxu0 0
      %1711 = vmatprep.subr.bf16.mxu0 0
      %1712 = vmatpush2.bf16.xpose.msra.mxu0 0
      %1713 = vmatprep.subr.bf16.mxu0 0
      %1714 = vmatpush2.bf16.xpose.msra.mxu0 0
      %1715 = vmatprep.subr.bf16.mxu0 0
      %1716 = vmatpush2.bf16.xpose.msra.mxu0 0
      %1717 = vmatprep.subr.bf16.mxu0 0
      %1718 = vmatpush2.bf16.xpose.msra.mxu0 0
      %1719 = vmatprep.subr.bf16.mxu0 0
      %1720 = vmatpush2.bf16.xpose.msra.mxu0 0
      %1721 = vmatprep.subr.bf16.mxu0 0
      %1722 = vmatpush2.bf16.xpose.msra.mxu0 0
      %1723 = vmatprep.subr.bf16.mxu0 0
      %1724 = vmatpush2.bf16.xpose.msra.mxu0 0
      %1725 = vmatprep.mubr.bf16.mxu0 0
      %1726 = vmatmul.mubr.bf16.gmra.mxu0 %v1688
      %v1727 = vpop.f32.mrf.mxu0
      %v1728 = vadd.f32 0.0, %v1727
      %v1729 = vpop.f32.mrf.mxu0
      %v1730 = vpop.f32.mrf.mxu0
      %v1731 = vpop.f32.mrf.mxu0
      %1732 = vdwg.mxu0
      %1733 = vrot.lane.b32.xlu0 %v503, 104
      %v1734 = vpop.permute.xlu0 %1733
      %1735 = vrot.lane.b32.xlu0 %v503, 72
      %v1736 = vpop.permute.xlu0 %1735
      %v1738 = vsel %vm508, %v1734, 0
      %v1741 = vsel %vm508, %v1736, 0
      %1743 = vmatprep.subr.bf16.mxu0 0
      %1744 = vmatpush1.bf16.xpose.msra.mxu0 0
      %1745 = vmatprep.subr.bf16.mxu0 0
      %1746 = vmatpush1.bf16.xpose.msra.mxu0 0
      %1747 = vmatprep.subr.bf16.mxu0 0
      %1748 = vmatpush1.bf16.xpose.msra.mxu0 0
      %1749 = vmatprep.subr.bf16.mxu0 0
      %1750 = vmatpush1.bf16.xpose.msra.mxu0 0
      %1751 = vmatprep.subr.bf16.mxu0 0
      %1752 = vmatpush1.bf16.xpose.msra.mxu0 0
      %1753 = vmatprep.subr.bf16.mxu0 0
      %1754 = vmatpush1.bf16.xpose.msra.mxu0 0
      %1755 = vmatprep.subr.bf16.mxu0 0
      %1756 = vmatpush1.bf16.xpose.msra.mxu0 0
      %1757 = vmatprep.subr.bf16.mxu0 0
      %1758 = vmatpush1.bf16.xpose.msra.mxu0 %v1741
      %1759 = vmatprep.subr.bf16.mxu0 0
      %1760 = vmatpush2.bf16.xpose.msra.mxu0 0
      %1761 = vmatprep.subr.bf16.mxu0 0
      %1762 = vmatpush2.bf16.xpose.msra.mxu0 0
      %1763 = vmatprep.subr.bf16.mxu0 0
      %1764 = vmatpush2.bf16.xpose.msra.mxu0 0
      %1765 = vmatprep.subr.bf16.mxu0 0
      %1766 = vmatpush2.bf16.xpose.msra.mxu0 0
      %1767 = vmatprep.subr.bf16.mxu0 0
      %1768 = vmatpush2.bf16.xpose.msra.mxu0 0
      %1769 = vmatprep.subr.bf16.mxu0 0
      %1770 = vmatpush2.bf16.xpose.msra.mxu0 0
      %1771 = vmatprep.subr.bf16.mxu0 0
      %1772 = vmatpush2.bf16.xpose.msra.mxu0 0
      %1773 = vmatprep.subr.bf16.mxu0 0
      %1774 = vmatpush2.bf16.xpose.msra.mxu0 0
      %1775 = vmatprep.mubr.bf16.mxu0 0
      %1776 = vmatmul.mubr.bf16.gmra.mxu0 %v1738
      %v1777 = vpop.f32.mrf.mxu0
      %v1778 = vadd.f32 0.0, %v1777
      %v1779 = vpop.f32.mrf.mxu0
      %v1780 = vpop.f32.mrf.mxu0
      %v1781 = vpop.f32.mrf.mxu0
      %1782 = vdwg.mxu0
      %1783 = vrot.lane.b32.xlu0 %v504, 104
      %v1784 = vpop.permute.xlu0 %1783
      %1785 = vrot.lane.b32.xlu0 %v504, 72
      %v1786 = vpop.permute.xlu0 %1785
      %v1788 = vsel %vm508, %v1784, 0
      %v1791 = vsel %vm508, %v1786, 0
      %1793 = vmatprep.subr.bf16.mxu0 0
      %1794 = vmatpush1.bf16.xpose.msra.mxu0 0
      %1795 = vmatprep.subr.bf16.mxu0 0
      %1796 = vmatpush1.bf16.xpose.msra.mxu0 0
      %1797 = vmatprep.subr.bf16.mxu0 0
      %1798 = vmatpush1.bf16.xpose.msra.mxu0 0
      %1799 = vmatprep.subr.bf16.mxu0 0
      %1800 = vmatpush1.bf16.xpose.msra.mxu0 0
      %1801 = vmatprep.subr.bf16.mxu0 0
      %1802 = vmatpush1.bf16.xpose.msra.mxu0 0
      %1803 = vmatprep.subr.bf16.mxu0 0
      %1804 = vmatpush1.bf16.xpose.msra.mxu0 0
      %1805 = vmatprep.subr.bf16.mxu0 0
      %1806 = vmatpush1.bf16.xpose.msra.mxu0 0
      %1807 = vmatprep.subr.bf16.mxu0 0
      %1808 = vmatpush1.bf16.xpose.msra.mxu0 %v1791
      %1809 = vmatprep.subr.bf16.mxu0 0
      %1810 = vmatpush2.bf16.xpose.msra.mxu0 0
      %1811 = vmatprep.subr.bf16.mxu0 0
      %1812 = vmatpush2.bf16.xpose.msra.mxu0 0
      %1813 = vmatprep.subr.bf16.mxu0 0
      %1814 = vmatpush2.bf16.xpose.msra.mxu0 0
      %1815 = vmatprep.subr.bf16.mxu0 0
      %1816 = vmatpush2.bf16.xpose.msra.mxu0 0
      %1817 = vmatprep.subr.bf16.mxu0 0
      %1818 = vmatpush2.bf16.xpose.msra.mxu0 0
      %1819 = vmatprep.subr.bf16.mxu0 0
      %1820 = vmatpush2.bf16.xpose.msra.mxu0 0
      %1821 = vmatprep.subr.bf16.mxu0 0
      %1822 = vmatpush2.bf16.xpose.msra.mxu0 0
      %1823 = vmatprep.subr.bf16.mxu0 0
      %1824 = vmatpush2.bf16.xpose.msra.mxu0 0
      %1825 = vmatprep.mubr.bf16.mxu0 0
      %1826 = vmatmul.mubr.bf16.gmra.mxu0 %v1788
      %v1827 = vpop.f32.mrf.mxu0
      %v1828 = vadd.f32 0.0, %v1827
      %v1829 = vpop.f32.mrf.mxu0
      %v1830 = vpop.f32.mrf.mxu0
      %v1831 = vpop.f32.mrf.mxu0
      %1832 = vdwg.mxu0
      %v1833 = vmul.f32 %v1728, 0.35355338
      %v1834 = vmul.f32 %v1778, 0.35355338
      %v1835 = vmul.f32 %v1828, 0.35355338
      %v1836 = vsel %vm508, %v1833, -inf
      %1837 = vmax.xlane.f32.xlu0 %v1836
      %v1838 = vpop.xlane.xlu0 %1837
      %v1839 = vsel %vm508, %v1834, -inf
      %1840 = vmax.xlane.f32.xlu0 %v1839
      %v1841 = vpop.xlane.xlu0 %1840
      %v1842 = vsel %vm508, %v1835, -inf
      %1843 = vmax.xlane.f32.xlu0 %v1842
      %v1844 = vpop.xlane.xlu0 %1843
      %v1845 = vsub.f32 %v1833, %v1838
      %v1846 = vsub.f32 %v1834, %v1841
      %v1847 = vsub.f32 %v1835, %v1844
      %v1848 = vmul.f32 %v1845, 1.442695
      %v1849 = vpow.pop %v1848
      %v1850 = vmul.f32 %v1846, 1.442695
      %v1851 = vpow.pop %v1850
      %v1852 = vmul.f32 %v1847, 1.442695
      %v1853 = vpow.pop %v1852
      %v1854 = vsel %vm508, %v1849, 0.0
      %1855 = vadd.xlane.f32.xlu0 %v1854
      %v1856 = vpop.xlane.xlu0 %1855
      %v1857 = vsel %vm508, %v1851, 0.0
      %1858 = vadd.xlane.f32.xlu0 %v1857
      %v1859 = vpop.xlane.xlu0 %1858
      %v1860 = vsel %vm508, %v1853, 0.0
      %1861 = vadd.xlane.f32.xlu0 %v1860
      %v1862 = vpop.xlane.xlu0 %1861
      %v1863 = vrcp.pop %v1856
      %v1864 = vrcp.pop %v1859
      %v1865 = vrcp.pop %v1862
      %v1866 = vmul.f32 %v1849, %v1863
      %v1867 = vmul.f32 %v1851, %v1864
      %v1868 = vmul.f32 %v1853, %v1865
      %v1869 = vpack.c.bf16 %v1866, %v1866
      %v1870 = vpack.c.bf16 %v1867, %v1867
      %v1871 = vpack.c.bf16 %v1868, %v1868
      %1872 = vrot.lane.b32.xlu0 %v502, 40
      %v1873 = vpop.permute.xlu0 %1872
      %v1875 = vsel %vm508, %v1869, 0
      %v1878 = vsel %vm697, %v1873, 0
      %1880 = vmatprep.subr.bf16.mxu0 0
      %1881 = vmatpush1.bf16.msra.mxu0 0
      %1882 = vmatprep.subr.bf16.mxu0 0
      %1883 = vmatpush1.bf16.msra.mxu0 0
      %1884 = vmatprep.subr.bf16.mxu0 0
      %1885 = vmatpush1.bf16.msra.mxu0 0
      %1886 = vmatprep.subr.bf16.mxu0 0
      %1887 = vmatpush1.bf16.msra.mxu0 0
      %1888 = vmatprep.subr.bf16.mxu0 0
      %1889 = vmatpush1.bf16.msra.mxu0 0
      %1890 = vmatprep.subr.bf16.mxu0 0
      %1891 = vmatpush1.bf16.msra.mxu0 0
      %1892 = vmatprep.subr.bf16.mxu0 0
      %1893 = vmatpush1.bf16.msra.mxu0 0
      %1894 = vmatprep.subr.bf16.mxu0 0
      %1895 = vmatpush1.bf16.msra.mxu0 %v1878
      %1896 = vmatprep.subr.bf16.mxu0 0
      %1897 = vmatpush2.bf16.msra.mxu0 0
      %1898 = vmatprep.subr.bf16.mxu0 0
      %1899 = vmatpush2.bf16.msra.mxu0 0
      %1900 = vmatprep.subr.bf16.mxu0 0
      %1901 = vmatpush2.bf16.msra.mxu0 0
      %1902 = vmatprep.subr.bf16.mxu0 0
      %1903 = vmatpush2.bf16.msra.mxu0 0
      %1904 = vmatprep.subr.bf16.mxu0 0
      %1905 = vmatpush2.bf16.msra.mxu0 0
      %1906 = vmatprep.subr.bf16.mxu0 0
      %1907 = vmatpush2.bf16.msra.mxu0 0
      %1908 = vmatprep.subr.bf16.mxu0 0
      %1909 = vmatpush2.bf16.msra.mxu0 0
      %1910 = vmatprep.subr.bf16.mxu0 0
      %1911 = vmatpush2.bf16.msra.mxu0 0
      %1912 = vmatprep.mubr.bf16.mxu0 0
      %1913 = vmatmul.mubr.bf16.gmra.mxu0 %v1875
      %v1914 = vpop.f32.mrf.mxu0
      %v1915 = vadd.f32 0.0, %v1914
      %v1916 = vpop.f32.mrf.mxu0
      %v1917 = vpop.f32.mrf.mxu0
      %v1918 = vpop.f32.mrf.mxu0
      %1919 = vdwg.mxu0
      %1920 = vrot.lane.b32.xlu0 %v503, 40
      %v1921 = vpop.permute.xlu0 %1920
      %v1923 = vsel %vm508, %v1870, 0
      %v1926 = vsel %vm697, %v1921, 0
      %1928 = vmatprep.subr.bf16.mxu0 0
      %1929 = vmatpush1.bf16.msra.mxu0 0
      %1930 = vmatprep.subr.bf16.mxu0 0
      %1931 = vmatpush1.bf16.msra.mxu0 0
      %1932 = vmatprep.subr.bf16.mxu0 0
      %1933 = vmatpush1.bf16.msra.mxu0 0
      %1934 = vmatprep.subr.bf16.mxu0 0
      %1935 = vmatpush1.bf16.msra.mxu0 0
      %1936 = vmatprep.subr.bf16.mxu0 0
      %1937 = vmatpush1.bf16.msra.mxu0 0
      %1938 = vmatprep.subr.bf16.mxu0 0
      %1939 = vmatpush1.bf16.msra.mxu0 0
      %1940 = vmatprep.subr.bf16.mxu0 0
      %1941 = vmatpush1.bf16.msra.mxu0 0
      %1942 = vmatprep.subr.bf16.mxu0 0
      %1943 = vmatpush1.bf16.msra.mxu0 %v1926
      %1944 = vmatprep.subr.bf16.mxu0 0
      %1945 = vmatpush2.bf16.msra.mxu0 0
      %1946 = vmatprep.subr.bf16.mxu0 0
      %1947 = vmatpush2.bf16.msra.mxu0 0
      %1948 = vmatprep.subr.bf16.mxu0 0
      %1949 = vmatpush2.bf16.msra.mxu0 0
      %1950 = vmatprep.subr.bf16.mxu0 0
      %1951 = vmatpush2.bf16.msra.mxu0 0
      %1952 = vmatprep.subr.bf16.mxu0 0
      %1953 = vmatpush2.bf16.msra.mxu0 0
      %1954 = vmatprep.subr.bf16.mxu0 0
      %1955 = vmatpush2.bf16.msra.mxu0 0
      %1956 = vmatprep.subr.bf16.mxu0 0
      %1957 = vmatpush2.bf16.msra.mxu0 0
      %1958 = vmatprep.subr.bf16.mxu0 0
      %1959 = vmatpush2.bf16.msra.mxu0 0
      %1960 = vmatprep.mubr.bf16.mxu0 0
      %1961 = vmatmul.mubr.bf16.gmra.mxu0 %v1923
      %v1962 = vpop.f32.mrf.mxu0
      %v1963 = vadd.f32 0.0, %v1962
      %v1964 = vpop.f32.mrf.mxu0
      %v1965 = vpop.f32.mrf.mxu0
      %v1966 = vpop.f32.mrf.mxu0
      %1967 = vdwg.mxu0
      %1968 = vrot.lane.b32.xlu0 %v504, 40
      %v1969 = vpop.permute.xlu0 %1968
      %v1971 = vsel %vm508, %v1871, 0
      %v1974 = vsel %vm697, %v1969, 0
      %1976 = vmatprep.subr.bf16.mxu0 0
      %1977 = vmatpush1.bf16.msra.mxu0 0
      %1978 = vmatprep.subr.bf16.mxu0 0
      %1979 = vmatpush1.bf16.msra.mxu0 0
      %1980 = vmatprep.subr.bf16.mxu0 0
      %1981 = vmatpush1.bf16.msra.mxu0 0
      %1982 = vmatprep.subr.bf16.mxu0 0
      %1983 = vmatpush1.bf16.msra.mxu0 0
      %1984 = vmatprep.subr.bf16.mxu0 0
      %1985 = vmatpush1.bf16.msra.mxu0 0
      %1986 = vmatprep.subr.bf16.mxu0 0
      %1987 = vmatpush1.bf16.msra.mxu0 0
      %1988 = vmatprep.subr.bf16.mxu0 0
      %1989 = vmatpush1.bf16.msra.mxu0 0
      %1990 = vmatprep.subr.bf16.mxu0 0
      %1991 = vmatpush1.bf16.msra.mxu0 %v1974
      %1992 = vmatprep.subr.bf16.mxu0 0
      %1993 = vmatpush2.bf16.msra.mxu0 0
      %1994 = vmatprep.subr.bf16.mxu0 0
      %1995 = vmatpush2.bf16.msra.mxu0 0
      %1996 = vmatprep.subr.bf16.mxu0 0
      %1997 = vmatpush2.bf16.msra.mxu0 0
      %1998 = vmatprep.subr.bf16.mxu0 0
      %1999 = vmatpush2.bf16.msra.mxu0 0
      %2000 = vmatprep.subr.bf16.mxu0 0
      %2001 = vmatpush2.bf16.msra.mxu0 0
      %2002 = vmatprep.subr.bf16.mxu0 0
      %2003 = vmatpush2.bf16.msra.mxu0 0
      %2004 = vmatprep.subr.bf16.mxu0 0
      %2005 = vmatpush2.bf16.msra.mxu0 0
      %2006 = vmatprep.subr.bf16.mxu0 0
      %2007 = vmatpush2.bf16.msra.mxu0 0
      %2008 = vmatprep.mubr.bf16.mxu0 0
      %2009 = vmatmul.mubr.bf16.gmra.mxu0 %v1971
      %v2010 = vpop.f32.mrf.mxu0
      %v2011 = vadd.f32 0.0, %v2010
      %v2012 = vpop.f32.mrf.mxu0
      %v2013 = vpop.f32.mrf.mxu0
      %v2014 = vpop.f32.mrf.mxu0
      %2015 = vdwg.mxu0
      %v2016 = vpack.c.bf16 %v1963, %v1915
      %v2017 = vpack.c.bf16 %v2011, %v2011
      %v2019 = vsel %vm508, %v2016, 0
      %v2022 = vsel %vm508, %v2017, 0
      %v2025 = vsel %vm697, %v411, 0
      %2027 = vmatprep.subr.bf16.mxu0 0
      %2028 = vmatpush1.bf16.msra.mxu0 0
      %2029 = vmatprep.subr.bf16.mxu0 0
      %2030 = vmatpush1.bf16.msra.mxu0 0
      %2031 = vmatprep.subr.bf16.mxu0 0
      %2032 = vmatpush1.bf16.msra.mxu0 0
      %2033 = vmatprep.subr.bf16.mxu0 0
      %2034 = vmatpush1.bf16.msra.mxu0 0
      %2035 = vmatprep.subr.bf16.mxu0 0
      %2036 = vmatpush1.bf16.msra.mxu0 0
      %2037 = vmatprep.subr.bf16.mxu0 0
      %2038 = vmatpush1.bf16.msra.mxu0 0
      %2039 = vmatprep.subr.bf16.mxu0 0
      %2040 = vmatpush1.bf16.msra.mxu0 0
      %2041 = vmatprep.subr.bf16.mxu0 0
      %2042 = vmatpush1.bf16.msra.mxu0 %v2025
      %2043 = vmatprep.subr.bf16.mxu0 0
      %2044 = vmatpush2.bf16.msra.mxu0 0
      %2045 = vmatprep.subr.bf16.mxu0 0
      %2046 = vmatpush2.bf16.msra.mxu0 0
      %2047 = vmatprep.subr.bf16.mxu0 0
      %2048 = vmatpush2.bf16.msra.mxu0 0
      %2049 = vmatprep.subr.bf16.mxu0 0
      %2050 = vmatpush2.bf16.msra.mxu0 0
      %2051 = vmatprep.subr.bf16.mxu0 0
      %2052 = vmatpush2.bf16.msra.mxu0 0
      %2053 = vmatprep.subr.bf16.mxu0 0
      %2054 = vmatpush2.bf16.msra.mxu0 0
      %2055 = vmatprep.subr.bf16.mxu0 0
      %2056 = vmatpush2.bf16.msra.mxu0 0
      %2057 = vmatprep.subr.bf16.mxu0 0
      %2058 = vmatpush2.bf16.msra.mxu0 0
      %2059 = vmatprep.mubr.bf16.mxu0 0
      %2060 = vmatmul.mubr.bf16.gmra.mxu0 %v2019
      %v2061 = vpop.f32.mrf.mxu0
      %v2062 = vadd.f32 0.0, %v2061
      %v2063 = vpop.f32.mrf.mxu0
      %v2064 = vpop.f32.mrf.mxu0
      %v2065 = vadd.f32 0.0, %v2064
      %v2066 = vpop.f32.mrf.mxu0
      %2067 = vmatprep.mubr.bf16.mxu0 0
      %2068 = vmatmul.mubr.bf16.gmra.mxu0 %v2022
      %v2069 = vpop.f32.mrf.mxu0
      %v2070 = vadd.f32 0.0, %v2069
      %v2071 = vpop.f32.mrf.mxu0
      %v2072 = vpop.f32.mrf.mxu0
      %v2073 = vpop.f32.mrf.mxu0
      %2074 = vdwg.mxu0
      %v2075 = vadd.f32 %v1680, %v2062
      %v2076 = vadd.f32 %v1681, %v2065
      %v2077 = vadd.f32 %v1682, %v2070
      %v2078 = vlaneseq
      %v2079 = vshrl.u32 %v2078, 7
      %v2080 = vsub.s32 0, %v2079
      %v2081 = vrot.slane %v425, %v2080
      %v2082 = vadd.f32 %v2075, %v2081
      %v2083 = vadd.f32 %v2076, %v2081
      %v2084 = vadd.f32 %v2077, %v2081
      %v2085 = vadd.f32 %v401, %v2082
      %v2086 = vadd.f32 %v402, %v2083
      %v2087 = vadd.f32 %v403, %v2084
      %v2088 = vsel %vm447, %v2085, 0.0
      %2089 = vadd.xlane.f32.xlu0 %v2088
      %v2090 = vpop.xlane.xlu0 %2089
      %v2091 = vsel %vm447, %v2086, 0.0
      %2092 = vadd.xlane.f32.xlu0 %v2091
      %v2093 = vpop.xlane.xlu0 %2092
      %v2094 = vsel %vm447, %v2087, 0.0
      %2095 = vadd.xlane.f32.xlu0 %v2094
      %v2096 = vpop.xlane.xlu0 %2095
      %v2097 = vrcp.pop 32.0
      %v2098 = vmul.f32 %v2090, %v2097
      %v2099 = vmul.f32 %v2093, %v2097
      %v2100 = vmul.f32 %v2096, %v2097
      %v2101 = vsub.f32 %v2085, %v2098
      %v2102 = vsub.f32 %v2086, %v2099
      %v2103 = vsub.f32 %v2087, %v2100
      %v2104 = vmul.f32 %v2101, %v2101
      %v2105 = vmul.f32 %v2102, %v2102
      %v2106 = vmul.f32 %v2103, %v2103
      %v2107 = vsel %vm447, %v2104, 0.0
      %2108 = vadd.xlane.f32.xlu0 %v2107
      %v2109 = vpop.xlane.xlu0 %2108
      %v2110 = vsel %vm447, %v2105, 0.0
      %2111 = vadd.xlane.f32.xlu0 %v2110
      %v2112 = vpop.xlane.xlu0 %2111
      %v2113 = vsel %vm447, %v2106, 0.0
      %2114 = vadd.xlane.f32.xlu0 %v2113
      %v2115 = vpop.xlane.xlu0 %2114
      %v2116 = vmul.f32 %v2109, %v2097
      %v2117 = vmul.f32 %v2112, %v2097
      %v2118 = vmul.f32 %v2115, %v2097
      %v2119 = vadd.f32 %v2116, 1e-12
      %v2120 = vadd.f32 %v2117, 1e-12
      %v2121 = vadd.f32 %v2118, 1e-12
      %v2122 = vrsqrt.pop %v2119
      %v2123 = vrsqrt.pop %v2120
      %v2124 = vrsqrt.pop %v2121
      %v2125 = vmul.f32 %v2101, %v2122
      %v2126 = vmul.f32 %v2102, %v2123
      %v2127 = vmul.f32 %v2103, %v2124
      %v2128 = vlaneseq
      %v2129 = vshrl.u32 %v2128, 7
      %v2130 = vsub.s32 1, %v2129
      %v2131 = vrot.slane %v425, %v2130
      %v2132 = vmul.f32 %v2125, %v2131
      %v2133 = vmul.f32 %v2126, %v2131
      %v2134 = vmul.f32 %v2127, %v2131
      %v2135 = vlaneseq
      %v2136 = vshrl.u32 %v2135, 7
      %v2137 = vsub.s32 2, %v2136
      %v2138 = vrot.slane %v425, %v2137
      %v2139 = vadd.f32 %v2132, %v2138
      %v2140 = vadd.f32 %v2133, %v2138
      %v2141 = vadd.f32 %v2134, %v2138
      %v2142 = vpack.c.bf16 %v2140, %v2139
      %v2143 = vpack.c.bf16 %v2141, %v2141
      %v2145 = vlaneseq
      %v2146 = vshrl.u32 %v2145, 7
      %v2147 = vsub.s32 0, %v2146
      %v2148 = vrot.slane %v426, %v2147
      %v2154 = vunpack.c.l.b16 %v412
      %v2155 = vunpack.c.l.b16 %v413
      %v2156 = vunpack.c.l.b16 %v414
      %v2157 = vunpack.c.l.b16 %v415
      %v2158 = vpack.c.b16 %v2155, %v2154
      %v2159 = vpack.c.b16 %v2157, %v2156
      %v2163 = vsel %vm447, %v2142, 0
      %v2166 = vsel %vm447, %v2143, 0
      %2168 = vmatprep.subr.bf16.mxu0 0
      %2169 = vmatpush1.bf16.msra.mxu0 0
      %2170 = vmatprep.subr.bf16.mxu0 0
      %2171 = vmatpush1.bf16.msra.mxu0 0
      %2172 = vmatprep.subr.bf16.mxu0 0
      %2173 = vmatpush1.bf16.msra.mxu0 0
      %2174 = vmatprep.subr.bf16.mxu0 0
      %2175 = vmatpush1.bf16.msra.mxu0 0
      %2176 = vmatprep.subr.bf16.mxu0 0
      %2177 = vmatpush1.bf16.msra.mxu0 0
      %2178 = vmatprep.subr.bf16.mxu0 0
      %2179 = vmatpush1.bf16.msra.mxu0 0
      %2180 = vmatprep.subr.bf16.mxu0 0
      %2181 = vmatpush1.bf16.msra.mxu0 %v2159
      %2182 = vmatprep.subr.bf16.mxu0 0
      %2183 = vmatpush1.bf16.msra.mxu0 %v2158
      %2184 = vmatprep.subr.bf16.mxu0 0
      %2185 = vmatpush2.bf16.msra.mxu0 0
      %2186 = vmatprep.subr.bf16.mxu0 0
      %2187 = vmatpush2.bf16.msra.mxu0 0
      %2188 = vmatprep.subr.bf16.mxu0 0
      %2189 = vmatpush2.bf16.msra.mxu0 0
      %2190 = vmatprep.subr.bf16.mxu0 0
      %2191 = vmatpush2.bf16.msra.mxu0 0
      %2192 = vmatprep.subr.bf16.mxu0 0
      %2193 = vmatpush2.bf16.msra.mxu0 0
      %2194 = vmatprep.subr.bf16.mxu0 0
      %2195 = vmatpush2.bf16.msra.mxu0 0
      %2196 = vmatprep.subr.bf16.mxu0 0
      %2197 = vmatpush2.bf16.msra.mxu0 0
      %2198 = vmatprep.subr.bf16.mxu0 0
      %2199 = vmatpush2.bf16.msra.mxu0 0
      %2200 = vmatprep.mubr.bf16.mxu0 0
      %2201 = vmatmul.mubr.bf16.gmra.mxu0 %v2163
      %v2202 = vpop.f32.mrf.mxu0
      %v2203 = vadd.f32 %v2148, %v2202
      %v2204 = vpop.f32.mrf.mxu0
      %v2205 = vpop.f32.mrf.mxu0
      %v2206 = vadd.f32 %v2148, %v2205
      %v2207 = vpop.f32.mrf.mxu0
      %2208 = vmatprep.mubr.bf16.mxu0 0
      %2209 = vmatmul.mubr.bf16.gmra.mxu0 %v2166
      %v2210 = vpop.f32.mrf.mxu0
      %v2211 = vadd.f32 %v2148, %v2210
      %v2212 = vpop.f32.mrf.mxu0
      %v2213 = vpop.f32.mrf.mxu0
      %v2214 = vpop.f32.mrf.mxu0
      %2215 = vdwg.mxu0
      %v2216 = vmul.f32 %v2203, %v2203
      %v2217 = vmul.f32 %v2206, %v2206
      %v2218 = vmul.f32 %v2211, %v2211
      %v2219 = vmul.f32 %v2203, %v2216
      %v2220 = vmul.f32 %v2206, %v2217
      %v2221 = vmul.f32 %v2211, %v2218
      %v2222 = vmul.f32 %v2219, 0.044715
      %v2223 = vmul.f32 %v2220, 0.044715
      %v2224 = vmul.f32 %v2221, 0.044715
      %v2225 = vadd.f32 %v2203, %v2222
      %v2226 = vadd.f32 %v2206, %v2223
      %v2227 = vadd.f32 %v2211, %v2224
      %v2228 = vmul.f32 %v2225, 0.7978846
      %v2229 = vmul.f32 %v2226, 0.7978846
      %v2230 = vmul.f32 %v2227, 0.7978846
      %v2231 = vtanh.pop %v2228
      %v2232 = vtanh.pop %v2229
      %v2233 = vtanh.pop %v2230
      %v2234 = vadd.f32 %v2231, 1.0
      %v2235 = vadd.f32 %v2232, 1.0
      %v2236 = vadd.f32 %v2233, 1.0
      %v2237 = vmul.f32 %v2234, 0.5
      %v2238 = vmul.f32 %v2235, 0.5
      %v2239 = vmul.f32 %v2236, 0.5
      %v2240 = vmul.f32 %v2203, %v2237
      %v2241 = vmul.f32 %v2206, %v2238
      %v2242 = vmul.f32 %v2211, %v2239
      %v2243 = vpack.c.bf16 %v2241, %v2240
      %v2244 = vpack.c.bf16 %v2242, %v2242
      %v2245 = vlaneseq
      %v2246 = vshrl.u32 %v2245, 7
      %v2247 = vsub.s32 3, %v2246
      %v2248 = vrot.slane %v425, %v2247
      %v2257 = vunpack.c.l.b16 %v416
      %v2258 = vunpack.c.l.b16 %v417
      %v2259 = vunpack.c.l.b16 %v418
      %v2260 = vunpack.c.l.b16 %v419
      %v2261 = vunpack.c.l.b16 %v420
      %v2262 = vunpack.c.l.b16 %v421
      %v2263 = vunpack.c.l.b16 %v422
      %v2264 = vunpack.c.l.b16 %v423
      %v2265 = vpack.c.b16 %v2258, %v2257
      %v2266 = vpack.c.b16 %v2260, %v2259
      %v2267 = vpack.c.b16 %v2262, %v2261
      %v2268 = vpack.c.b16 %v2264, %v2263
      %vm2273 = vcmask 523264
      %v2275 = vsel %vm2273, %v2243, 0
      %v2278 = vsel %vm2273, %v2244, 0
      %2280 = vmatprep.subr.bf16.mxu0 0
      %2281 = vmatpush1.bf16.msra.mxu0 0
      %2282 = vmatprep.subr.bf16.mxu0 0
      %2283 = vmatpush1.bf16.msra.mxu0 0
      %2284 = vmatprep.subr.bf16.mxu0 0
      %2285 = vmatpush1.bf16.msra.mxu0 0
      %2286 = vmatprep.subr.bf16.mxu0 0
      %2287 = vmatpush1.bf16.msra.mxu0 0
      %2288 = vmatprep.subr.bf16.mxu0 0
      %2289 = vmatpush1.bf16.msra.mxu0 %v2268
      %2290 = vmatprep.subr.bf16.mxu0 0
      %2291 = vmatpush1.bf16.msra.mxu0 %v2267
      %2292 = vmatprep.subr.bf16.mxu0 0
      %2293 = vmatpush1.bf16.msra.mxu0 %v2266
      %2294 = vmatprep.subr.bf16.mxu0 0
      %2295 = vmatpush1.bf16.msra.mxu0 %v2265
      %2296 = vmatprep.subr.bf16.mxu0 0
      %2297 = vmatpush2.bf16.msra.mxu0 0
      %2298 = vmatprep.subr.bf16.mxu0 0
      %2299 = vmatpush2.bf16.msra.mxu0 0
      %2300 = vmatprep.subr.bf16.mxu0 0
      %2301 = vmatpush2.bf16.msra.mxu0 0
      %2302 = vmatprep.subr.bf16.mxu0 0
      %2303 = vmatpush2.bf16.msra.mxu0 0
      %2304 = vmatprep.subr.bf16.mxu0 0
      %2305 = vmatpush2.bf16.msra.mxu0 0
      %2306 = vmatprep.subr.bf16.mxu0 0
      %2307 = vmatpush2.bf16.msra.mxu0 0
      %2308 = vmatprep.subr.bf16.mxu0 0
      %2309 = vmatpush2.bf16.msra.mxu0 0
      %2310 = vmatprep.subr.bf16.mxu0 0
      %2311 = vmatpush2.bf16.msra.mxu0 0
      %2312 = vmatprep.mubr.bf16.mxu0 0
      %2313 = vmatmul.mubr.bf16.gmra.mxu0 %v2275
      %v2314 = vpop.f32.mrf.mxu0
      %v2315 = vadd.f32 %v2248, %v2314
      %v2316 = vpop.f32.mrf.mxu0
      %v2317 = vpop.f32.mrf.mxu0
      %v2318 = vadd.f32 %v2248, %v2317
      %v2319 = vpop.f32.mrf.mxu0
      %2320 = vmatprep.mubr.bf16.mxu0 0
      %2321 = vmatmul.mubr.bf16.gmra.mxu0 %v2278
      %v2322 = vpop.f32.mrf.mxu0
      %v2323 = vadd.f32 %v2248, %v2322
      %v2324 = vpop.f32.mrf.mxu0
      %v2325 = vpop.f32.mrf.mxu0
      %v2326 = vpop.f32.mrf.mxu0
      %2327 = vdwg.mxu0
      %v2328 = vadd.f32 %v2139, %v2315
      %v2329 = vadd.f32 %v2140, %v2318
      %v2330 = vadd.f32 %v2141, %v2323
      %v2331 = vsel %vm447, %v2328, 0.0
      %2332 = vadd.xlane.f32.xlu0 %v2331
      %v2333 = vpop.xlane.xlu0 %2332
      %v2334 = vsel %vm447, %v2329, 0.0
      %2335 = vadd.xlane.f32.xlu0 %v2334
      %v2336 = vpop.xlane.xlu0 %2335
      %v2337 = vsel %vm447, %v2330, 0.0
      %2338 = vadd.xlane.f32.xlu0 %v2337
      %v2339 = vpop.xlane.xlu0 %2338
      %v2340 = vmul.f32 %v2333, %v2097
      %v2341 = vmul.f32 %v2336, %v2097
      %v2342 = vmul.f32 %v2339, %v2097
      %v2343 = vsub.f32 %v2328, %v2340
      %v2344 = vsub.f32 %v2329, %v2341
      %v2345 = vsub.f32 %v2330, %v2342
      %v2346 = vmul.f32 %v2343, %v2343
      %v2347 = vmul.f32 %v2344, %v2344
      %v2348 = vmul.f32 %v2345, %v2345
      %v2349 = vsel %vm447, %v2346, 0.0
      %2350 = vadd.xlane.f32.xlu0 %v2349
      %v2351 = vpop.xlane.xlu0 %2350
      %v2352 = vsel %vm447, %v2347, 0.0
      %2353 = vadd.xlane.f32.xlu0 %v2352
      %v2354 = vpop.xlane.xlu0 %2353
      %v2355 = vsel %vm447, %v2348, 0.0
      %2356 = vadd.xlane.f32.xlu0 %v2355
      %v2357 = vpop.xlane.xlu0 %2356
      %v2358 = vmul.f32 %v2351, %v2097
      %v2359 = vmul.f32 %v2354, %v2097
      %v2360 = vmul.f32 %v2357, %v2097
      %v2361 = vadd.f32 %v2358, 1e-12
      %v2362 = vadd.f32 %v2359, 1e-12
      %v2363 = vadd.f32 %v2360, 1e-12
      %v2364 = vrsqrt.pop %v2361
      %v2365 = vrsqrt.pop %v2362
      %v2366 = vrsqrt.pop %v2363
      %v2367 = vmul.f32 %v2343, %v2364
      %v2368 = vmul.f32 %v2344, %v2365
      %v2369 = vmul.f32 %v2345, %v2366
      %v2370 = vlaneseq
      %v2371 = vshrl.u32 %v2370, 7
      %v2372 = vsub.s32 4, %v2371
      %v2373 = vrot.slane %v425, %v2372
      %v2374 = vmul.f32 %v2367, %v2373
      %v2375 = vmul.f32 %v2368, %v2373
      %v2376 = vmul.f32 %v2369, %v2373
      %v2377 = vlaneseq
      %v2378 = vshrl.u32 %v2377, 7
      %v2379 = vsub.s32 5, %v2378
      %v2380 = vrot.slane %v425, %v2379
      %v2381 = vadd.f32 %v2374, %v2380
      %v2382 = vadd.f32 %v2375, %v2380
      %v2383 = vadd.f32 %v2376, %v2380
      %s2384 = scalar_lea.vmem %s1, 16
      %v2385 = vld [vmem:[%s2384] sm:$0xf]
      %v2386 = vld [vmem:[%s2384 + $0x4] sm:$0xf]
      %v2387 = vld [vmem:[%s2384 + $0x8] sm:$0xf]
      %v2388 = vld [vmem:[%s2384 + $0xc] sm:$0xf]
      %s2389 = scalar_lea.vmem %s2, 16
      %v2390 = vld [vmem:[%s2389] sm:$0xf]
      %v2391 = vld [vmem:[%s2389 + $0x4] sm:$0xf]
      %v2392 = vld [vmem:[%s2389 + $0x8] sm:$0xf]
      %v2393 = vld [vmem:[%s2389 + $0xc] sm:$0xf]
      %s2394 = scalar_lea.vmem %s3, 16
      %v2395 = vld [vmem:[%s2394] sm:$0xf]
      %v2396 = vld [vmem:[%s2394 + $0x4] sm:$0xf]
      %v2397 = vld [vmem:[%s2394 + $0x8] sm:$0xf]
      %v2398 = vld [vmem:[%s2394 + $0xc] sm:$0xf]
      %s2399 = scalar_lea.vmem %s4, 32
      %v2400 = vld [vmem:[%s2399] sm:$0xf]
      %v2401 = vld [vmem:[%s2399 + $0x4] sm:$0xf]
      %v2402 = vld [vmem:[%s2399 + $0x8] sm:$0xf]
      %v2403 = vld [vmem:[%s2399 + $0xc] sm:$0xf]
      %v2404 = vld [vmem:[%s2399 + $0x10] sm:$0xf]
      %v2405 = vld [vmem:[%s2399 + $0x14] sm:$0xf]
      %v2406 = vld [vmem:[%s2399 + $0x18] sm:$0xf]
      %v2407 = vld [vmem:[%s2399 + $0x1c] sm:$0xf]
      %s2408 = scalar_lea.vmem %s5, 1
      %v2409 = vld [vmem:[%s2408] sm:$0x1]
      %s2410 = scalar_lea.vmem %s6, 8
      %v2411 = vld [vmem:[%s2410] sm:$0x3f]
      %s2412 = scalar_lea.vmem %s7, 1
      %v2413 = vld [vmem:[%s2412] sm:$0x1]
      %v2414 = vpack.c.bf16 %v2382, %v2381
      %v2415 = vpack.c.bf16 %v2383, %v2383
      %v2417 = vlaneseq
      %v2418 = vshrl.u32 %v2417, 7
      %v2419 = vsub.s32 0, %v2418
      %v2420 = vrot.slane %v2409, %v2419
      %v2426 = vunpack.c.l.b16 %v2385
      %v2427 = vunpack.c.l.b16 %v2386
      %v2428 = vunpack.c.l.b16 %v2387
      %v2429 = vunpack.c.l.b16 %v2388
      %v2430 = vpack.c.b16 %v2427, %v2426
      %v2431 = vpack.c.b16 %v2429, %v2428
      %v2435 = vsel %vm447, %v2414, 0
      %v2438 = vsel %vm447, %v2415, 0
      %2440 = vmatprep.subr.bf16.mxu0 0
      %2441 = vmatpush1.bf16.msra.mxu0 0
      %2442 = vmatprep.subr.bf16.mxu0 0
      %2443 = vmatpush1.bf16.msra.mxu0 0
      %2444 = vmatprep.subr.bf16.mxu0 0
      %2445 = vmatpush1.bf16.msra.mxu0 0
      %2446 = vmatprep.subr.bf16.mxu0 0
      %2447 = vmatpush1.bf16.msra.mxu0 0
      %2448 = vmatprep.subr.bf16.mxu0 0
      %2449 = vmatpush1.bf16.msra.mxu0 0
      %2450 = vmatprep.subr.bf16.mxu0 0
      %2451 = vmatpush1.bf16.msra.mxu0 0
      %2452 = vmatprep.subr.bf16.mxu0 0
      %2453 = vmatpush1.bf16.msra.mxu0 %v2431
      %2454 = vmatprep.subr.bf16.mxu0 0
      %2455 = vmatpush1.bf16.msra.mxu0 %v2430
      %2456 = vmatprep.subr.bf16.mxu0 0
      %2457 = vmatpush2.bf16.msra.mxu0 0
      %2458 = vmatprep.subr.bf16.mxu0 0
      %2459 = vmatpush2.bf16.msra.mxu0 0
      %2460 = vmatprep.subr.bf16.mxu0 0
      %2461 = vmatpush2.bf16.msra.mxu0 0
      %2462 = vmatprep.subr.bf16.mxu0 0
      %2463 = vmatpush2.bf16.msra.mxu0 0
      %2464 = vmatprep.subr.bf16.mxu0 0
      %2465 = vmatpush2.bf16.msra.mxu0 0
      %2466 = vmatprep.subr.bf16.mxu0 0
      %2467 = vmatpush2.bf16.msra.mxu0 0
      %2468 = vmatprep.subr.bf16.mxu0 0
      %2469 = vmatpush2.bf16.msra.mxu0 0
      %2470 = vmatprep.subr.bf16.mxu0 0
      %2471 = vmatpush2.bf16.msra.mxu0 0
      %2472 = vmatprep.mubr.bf16.mxu0 0
      %2473 = vmatmul.mubr.bf16.gmra.mxu0 %v2435
      %v2474 = vpop.f32.mrf.mxu0
      %v2475 = vadd.f32 %v2420, %v2474
      %v2476 = vpop.f32.mrf.mxu0
      %v2477 = vpop.f32.mrf.mxu0
      %v2478 = vadd.f32 %v2420, %v2477
      %v2479 = vpop.f32.mrf.mxu0
      %2480 = vmatprep.mubr.bf16.mxu0 0
      %2481 = vmatmul.mubr.bf16.gmra.mxu0 %v2438
      %v2482 = vpop.f32.mrf.mxu0
      %v2483 = vadd.f32 %v2420, %v2482
      %v2484 = vpop.f32.mrf.mxu0
      %v2485 = vpop.f32.mrf.mxu0
      %v2486 = vpop.f32.mrf.mxu0
      %2487 = vdwg.mxu0
      %v2488 = vpack.c.bf16 %v2475, %v2475
      %v2489 = vpack.c.bf16 %v2478, %v2478
      %v2490 = vpack.c.bf16 %v2483, %v2483
      %2492 = vrot.lane.b32.xlu0 %v2488, 96
      %v2493 = vpop.permute.xlu0 %2492
      %v2495 = vsel %vm508, %v2488, 0
      %v2498 = vsel %vm508, %v2493, 0
      %2500 = vmatprep.subr.bf16.mxu0 0
      %2501 = vmatpush1.bf16.xpose.msra.mxu0 0
      %2502 = vmatprep.subr.bf16.mxu0 0
      %2503 = vmatpush1.bf16.xpose.msra.mxu0 0
      %2504 = vmatprep.subr.bf16.mxu0 0
      %2505 = vmatpush1.bf16.xpose.msra.mxu0 0
      %2506 = vmatprep.subr.bf16.mxu0 0
      %2507 = vmatpush1.bf16.xpose.msra.mxu0 0
      %2508 = vmatprep.subr.bf16.mxu0 0
      %2509 = vmatpush1.bf16.xpose.msra.mxu0 0
      %2510 = vmatprep.subr.bf16.mxu0 0
      %2511 = vmatpush1.bf16.xpose.msra.mxu0 0
      %2512 = vmatprep.subr.bf16.mxu0 0
      %2513 = vmatpush1.bf16.xpose.msra.mxu0 0
      %2514 = vmatprep.subr.bf16.mxu0 0
      %2515 = vmatpush1.bf16.xpose.msra.mxu0 %v2498
      %2516 = vmatprep.subr.bf16.mxu0 0
      %2517 = vmatpush2.bf16.xpose.msra.mxu0 0
      %2518 = vmatprep.subr.bf16.mxu0 0
      %2519 = vmatpush2.bf16.xpose.msra.mxu0 0
      %2520 = vmatprep.subr.bf16.mxu0 0
      %2521 = vmatpush2.bf16.xpose.msra.mxu0 0
      %2522 = vmatprep.subr.bf16.mxu0 0
      %2523 = vmatpush2.bf16.xpose.msra.mxu0 0
      %2524 = vmatprep.subr.bf16.mxu0 0
      %2525 = vmatpush2.bf16.xpose.msra.mxu0 0
      %2526 = vmatprep.subr.bf16.mxu0 0
      %2527 = vmatpush2.bf16.xpose.msra.mxu0 0
      %2528 = vmatprep.subr.bf16.mxu0 0
      %2529 = vmatpush2.bf16.xpose.msra.mxu0 0
      %2530 = vmatprep.subr.bf16.mxu0 0
      %2531 = vmatpush2.bf16.xpose.msra.mxu0 0
      %2532 = vmatprep.mubr.bf16.mxu0 0
      %2533 = vmatmul.mubr.bf16.gmra.mxu0 %v2495
      %v2534 = vpop.f32.mrf.mxu0
      %v2535 = vadd.f32 0.0, %v2534
      %v2536 = vpop.f32.mrf.mxu0
      %v2537 = vpop.f32.mrf.mxu0
      %v2538 = vpop.f32.mrf.mxu0
      %2539 = vdwg.mxu0
      %2541 = vrot.lane.b32.xlu0 %v2489, 96
      %v2542 = vpop.permute.xlu0 %2541
      %v2544 = vsel %vm508, %v2489, 0
      %v2547 = vsel %vm508, %v2542, 0
      %2549 = vmatprep.subr.bf16.mxu0 0
      %2550 = vmatpush1.bf16.xpose.msra.mxu0 0
      %2551 = vmatprep.subr.bf16.mxu0 0
      %2552 = vmatpush1.bf16.xpose.msra.mxu0 0
      %2553 = vmatprep.subr.bf16.mxu0 0
      %2554 = vmatpush1.bf16.xpose.msra.mxu0 0
      %2555 = vmatprep.subr.bf16.mxu0 0
      %2556 = vmatpush1.bf16.xpose.msra.mxu0 0
      %2557 = vmatprep.subr.bf16.mxu0 0
      %2558 = vmatpush1.bf16.xpose.msra.mxu0 0
      %2559 = vmatprep.subr.bf16.mxu0 0
      %2560 = vmatpush1.bf16.xpose.msra.mxu0 0
      %2561 = vmatprep.subr.bf16.mxu0 0
      %2562 = vmatpush1.bf16.xpose.msra.mxu0 0
      %2563 = vmatprep.subr.bf16.mxu0 0
      %2564 = vmatpush1.bf16.xpose.msra.mxu0 %v2547
      %2565 = vmatprep.subr.bf16.mxu0 0
      %2566 = vmatpush2.bf16.xpose.msra.mxu0 0
      %2567 = vmatprep.subr.bf16.mxu0 0
      %2568 = vmatpush2.bf16.xpose.msra.mxu0 0
      %2569 = vmatprep.subr.bf16.mxu0 0
      %2570 = vmatpush2.bf16.xpose.msra.mxu0 0
      %2571 = vmatprep.subr.bf16.mxu0 0
      %2572 = vmatpush2.bf16.xpose.msra.mxu0 0
      %2573 = vmatprep.subr.bf16.mxu0 0
      %2574 = vmatpush2.bf16.xpose.msra.mxu0 0
      %2575 = vmatprep.subr.bf16.mxu0 0
      %2576 = vmatpush2.bf16.xpose.msra.mxu0 0
      %2577 = vmatprep.subr.bf16.mxu0 0
      %2578 = vmatpush2.bf16.xpose.msra.mxu0 0
      %2579 = vmatprep.subr.bf16.mxu0 0
      %2580 = vmatpush2.bf16.xpose.msra.mxu0 0
      %2581 = vmatprep.mubr.bf16.mxu0 0
      %2582 = vmatmul.mubr.bf16.gmra.mxu0 %v2544
      %v2583 = vpop.f32.mrf.mxu0
      %v2584 = vadd.f32 0.0, %v2583
      %v2585 = vpop.f32.mrf.mxu0
      %v2586 = vpop.f32.mrf.mxu0
      %v2587 = vpop.f32.mrf.mxu0
      %2588 = vdwg.mxu0
      %2590 = vrot.lane.b32.xlu0 %v2490, 96
      %v2591 = vpop.permute.xlu0 %2590
      %v2593 = vsel %vm508, %v2490, 0
      %v2596 = vsel %vm508, %v2591, 0
      %2598 = vmatprep.subr.bf16.mxu0 0
      %2599 = vmatpush1.bf16.xpose.msra.mxu0 0
      %2600 = vmatprep.subr.bf16.mxu0 0
      %2601 = vmatpush1.bf16.xpose.msra.mxu0 0
      %2602 = vmatprep.subr.bf16.mxu0 0
      %2603 = vmatpush1.bf16.xpose.msra.mxu0 0
      %2604 = vmatprep.subr.bf16.mxu0 0
      %2605 = vmatpush1.bf16.xpose.msra.mxu0 0
      %2606 = vmatprep.subr.bf16.mxu0 0
      %2607 = vmatpush1.bf16.xpose.msra.mxu0 0
      %2608 = vmatprep.subr.bf16.mxu0 0
      %2609 = vmatpush1.bf16.xpose.msra.mxu0 0
      %2610 = vmatprep.subr.bf16.mxu0 0
      %2611 = vmatpush1.bf16.xpose.msra.mxu0 0
      %2612 = vmatprep.subr.bf16.mxu0 0
      %2613 = vmatpush1.bf16.xpose.msra.mxu0 %v2596
      %2614 = vmatprep.subr.bf16.mxu0 0
      %2615 = vmatpush2.bf16.xpose.msra.mxu0 0
      %2616 = vmatprep.subr.bf16.mxu0 0
      %2617 = vmatpush2.bf16.xpose.msra.mxu0 0
      %2618 = vmatprep.subr.bf16.mxu0 0
      %2619 = vmatpush2.bf16.xpose.msra.mxu0 0
      %2620 = vmatprep.subr.bf16.mxu0 0
      %2621 = vmatpush2.bf16.xpose.msra.mxu0 0
      %2622 = vmatprep.subr.bf16.mxu0 0
      %2623 = vmatpush2.bf16.xpose.msra.mxu0 0
      %2624 = vmatprep.subr.bf16.mxu0 0
      %2625 = vmatpush2.bf16.xpose.msra.mxu0 0
      %2626 = vmatprep.subr.bf16.mxu0 0
      %2627 = vmatpush2.bf16.xpose.msra.mxu0 0
      %2628 = vmatprep.subr.bf16.mxu0 0
      %2629 = vmatpush2.bf16.xpose.msra.mxu0 0
      %2630 = vmatprep.mubr.bf16.mxu0 0
      %2631 = vmatmul.mubr.bf16.gmra.mxu0 %v2593
      %v2632 = vpop.f32.mrf.mxu0
      %v2633 = vadd.f32 0.0, %v2632
      %v2634 = vpop.f32.mrf.mxu0
      %v2635 = vpop.f32.mrf.mxu0
      %v2636 = vpop.f32.mrf.mxu0
      %2637 = vdwg.mxu0
      %v2638 = vmul.f32 %v2535, 0.35355338
      %v2639 = vmul.f32 %v2584, 0.35355338
      %v2640 = vmul.f32 %v2633, 0.35355338
      %v2641 = vsel %vm508, %v2638, -inf
      %2642 = vmax.xlane.f32.xlu0 %v2641
      %v2643 = vpop.xlane.xlu0 %2642
      %v2644 = vsel %vm508, %v2639, -inf
      %2645 = vmax.xlane.f32.xlu0 %v2644
      %v2646 = vpop.xlane.xlu0 %2645
      %v2647 = vsel %vm508, %v2640, -inf
      %2648 = vmax.xlane.f32.xlu0 %v2647
      %v2649 = vpop.xlane.xlu0 %2648
      %v2650 = vsub.f32 %v2638, %v2643
      %v2651 = vsub.f32 %v2639, %v2646
      %v2652 = vsub.f32 %v2640, %v2649
      %v2653 = vmul.f32 %v2650, 1.442695
      %v2654 = vpow.pop %v2653
      %v2655 = vmul.f32 %v2651, 1.442695
      %v2656 = vpow.pop %v2655
      %v2657 = vmul.f32 %v2652, 1.442695
      %v2658 = vpow.pop %v2657
      %v2659 = vsel %vm508, %v2654, 0.0
      %2660 = vadd.xlane.f32.xlu0 %v2659
      %v2661 = vpop.xlane.xlu0 %2660
      %v2662 = vsel %vm508, %v2656, 0.0
      %2663 = vadd.xlane.f32.xlu0 %v2662
      %v2664 = vpop.xlane.xlu0 %2663
      %v2665 = vsel %vm508, %v2658, 0.0
      %2666 = vadd.xlane.f32.xlu0 %v2665
      %v2667 = vpop.xlane.xlu0 %2666
      %v2668 = vrcp.pop %v2661
      %v2669 = vrcp.pop %v2664
      %v2670 = vrcp.pop %v2667
      %v2671 = vmul.f32 %v2654, %v2668
      %v2672 = vmul.f32 %v2656, %v2669
      %v2673 = vmul.f32 %v2658, %v2670
      %v2674 = vpack.c.bf16 %v2671, %v2671
      %v2675 = vpack.c.bf16 %v2672, %v2672
      %v2676 = vpack.c.bf16 %v2673, %v2673
      %2677 = vrot.lane.b32.xlu0 %v2488, 64
      %v2678 = vpop.permute.xlu0 %2677
      %v2680 = vsel %vm508, %v2674, 0
      %v2683 = vsel %vm697, %v2678, 0
      %2685 = vmatprep.subr.bf16.mxu0 0
      %2686 = vmatpush1.bf16.msra.mxu0 0
      %2687 = vmatprep.subr.bf16.mxu0 0
      %2688 = vmatpush1.bf16.msra.mxu0 0
      %2689 = vmatprep.subr.bf16.mxu0 0
      %2690 = vmatpush1.bf16.msra.mxu0 0
      %2691 = vmatprep.subr.bf16.mxu0 0
      %2692 = vmatpush1.bf16.msra.mxu0 0
      %2693 = vmatprep.subr.bf16.mxu0 0
      %2694 = vmatpush1.bf16.msra.mxu0 0
      %2695 = vmatprep.subr.bf16.mxu0 0
      %2696 = vmatpush1.bf16.msra.mxu0 0
      %2697 = vmatprep.subr.bf16.mxu0 0
      %2698 = vmatpush1.bf16.msra.mxu0 0
      %2699 = vmatprep.subr.bf16.mxu0 0
      %2700 = vmatpush1.bf16.msra.mxu0 %v2683
      %2701 = vmatprep.subr.bf16.mxu0 0
      %2702 = vmatpush2.bf16.msra.mxu0 0
      %2703 = vmatprep.subr.bf16.mxu0 0
      %2704 = vmatpush2.bf16.msra.mxu0 0
      %2705 = vmatprep.subr.bf16.mxu0 0
      %2706 = vmatpush2.bf16.msra.mxu0 0
      %2707 = vmatprep.subr.bf16.mxu0 0
      %2708 = vmatpush2.bf16.msra.mxu0 0
      %2709 = vmatprep.subr.bf16.mxu0 0
      %2710 = vmatpush2.bf16.msra.mxu0 0
      %2711 = vmatprep.subr.bf16.mxu0 0
      %2712 = vmatpush2.bf16.msra.mxu0 0
      %2713 = vmatprep.subr.bf16.mxu0 0
      %2714 = vmatpush2.bf16.msra.mxu0 0
      %2715 = vmatprep.subr.bf16.mxu0 0
      %2716 = vmatpush2.bf16.msra.mxu0 0
      %2717 = vmatprep.mubr.bf16.mxu0 0
      %2718 = vmatmul.mubr.bf16.gmra.mxu0 %v2680
      %v2719 = vpop.f32.mrf.mxu0
      %v2720 = vadd.f32 0.0, %v2719
      %v2721 = vpop.f32.mrf.mxu0
      %v2722 = vpop.f32.mrf.mxu0
      %v2723 = vpop.f32.mrf.mxu0
      %2724 = vdwg.mxu0
      %2725 = vrot.lane.b32.xlu0 %v2489, 64
      %v2726 = vpop.permute.xlu0 %2725
      %v2728 = vsel %vm508, %v2675, 0
      %v2731 = vsel %vm697, %v2726, 0
      %2733 = vmatprep.subr.bf16.mxu0 0
      %2734 = vmatpush1.bf16.msra.mxu0 0
      %2735 = vmatprep.subr.bf16.mxu0 0
      %2736 = vmatpush1.bf16.msra.mxu0 0
      %2737 = vmatprep.subr.bf16.mxu0 0
      %2738 = vmatpush1.bf16.msra.mxu0 0
      %2739 = vmatprep.subr.bf16.mxu0 0
      %2740 = vmatpush1.bf16.msra.mxu0 0
      %2741 = vmatprep.subr.bf16.mxu0 0
      %2742 = vmatpush1.bf16.msra.mxu0 0
      %2743 = vmatprep.subr.bf16.mxu0 0
      %2744 = vmatpush1.bf16.msra.mxu0 0
      %2745 = vmatprep.subr.bf16.mxu0 0
      %2746 = vmatpush1.bf16.msra.mxu0 0
      %2747 = vmatprep.subr.bf16.mxu0 0
      %2748 = vmatpush1.bf16.msra.mxu0 %v2731
      %2749 = vmatprep.subr.bf16.mxu0 0
      %2750 = vmatpush2.bf16.msra.mxu0 0
      %2751 = vmatprep.subr.bf16.mxu0 0
      %2752 = vmatpush2.bf16.msra.mxu0 0
      %2753 = vmatprep.subr.bf16.mxu0 0
      %2754 = vmatpush2.bf16.msra.mxu0 0
      %2755 = vmatprep.subr.bf16.mxu0 0
      %2756 = vmatpush2.bf16.msra.mxu0 0
      %2757 = vmatprep.subr.bf16.mxu0 0
      %2758 = vmatpush2.bf16.msra.mxu0 0
      %2759 = vmatprep.subr.bf16.mxu0 0
      %2760 = vmatpush2.bf16.msra.mxu0 0
      %2761 = vmatprep.subr.bf16.mxu0 0
      %2762 = vmatpush2.bf16.msra.mxu0 0
      %2763 = vmatprep.subr.bf16.mxu0 0
      %2764 = vmatpush2.bf16.msra.mxu0 0
      %2765 = vmatprep.mubr.bf16.mxu0 0
      %2766 = vmatmul.mubr.bf16.gmra.mxu0 %v2728
      %v2767 = vpop.f32.mrf.mxu0
      %v2768 = vadd.f32 0.0, %v2767
      %v2769 = vpop.f32.mrf.mxu0
      %v2770 = vpop.f32.mrf.mxu0
      %v2771 = vpop.f32.mrf.mxu0
      %2772 = vdwg.mxu0
      %2773 = vrot.lane.b32.xlu0 %v2490, 64
      %v2774 = vpop.permute.xlu0 %2773
      %v2776 = vsel %vm508, %v2676, 0
      %v2779 = vsel %vm697, %v2774, 0
      %2781 = vmatprep.subr.bf16.mxu0 0
      %2782 = vmatpush1.bf16.msra.mxu0 0
      %2783 = vmatprep.subr.bf16.mxu0 0
      %2784 = vmatpush1.bf16.msra.mxu0 0
      %2785 = vmatprep.subr.bf16.mxu0 0
      %2786 = vmatpush1.bf16.msra.mxu0 0
      %2787 = vmatprep.subr.bf16.mxu0 0
      %2788 = vmatpush1.bf16.msra.mxu0 0
      %2789 = vmatprep.subr.bf16.mxu0 0
      %2790 = vmatpush1.bf16.msra.mxu0 0
      %2791 = vmatprep.subr.bf16.mxu0 0
      %2792 = vmatpush1.bf16.msra.mxu0 0
      %2793 = vmatprep.subr.bf16.mxu0 0
      %2794 = vmatpush1.bf16.msra.mxu0 0
      %2795 = vmatprep.subr.bf16.mxu0 0
      %2796 = vmatpush1.bf16.msra.mxu0 %v2779
      %2797 = vmatprep.subr.bf16.mxu0 0
      %2798 = vmatpush2.bf16.msra.mxu0 0
      %2799 = vmatprep.subr.bf16.mxu0 0
      %2800 = vmatpush2.bf16.msra.mxu0 0
      %2801 = vmatprep.subr.bf16.mxu0 0
      %2802 = vmatpush2.bf16.msra.mxu0 0
      %2803 = vmatprep.subr.bf16.mxu0 0
      %2804 = vmatpush2.bf16.msra.mxu0 0
      %2805 = vmatprep.subr.bf16.mxu0 0
      %2806 = vmatpush2.bf16.msra.mxu0 0
      %2807 = vmatprep.subr.bf16.mxu0 0
      %2808 = vmatpush2.bf16.msra.mxu0 0
      %2809 = vmatprep.subr.bf16.mxu0 0
      %2810 = vmatpush2.bf16.msra.mxu0 0
      %2811 = vmatprep.subr.bf16.mxu0 0
      %2812 = vmatpush2.bf16.msra.mxu0 0
      %2813 = vmatprep.mubr.bf16.mxu0 0
      %2814 = vmatmul.mubr.bf16.gmra.mxu0 %v2776
      %v2815 = vpop.f32.mrf.mxu0
      %v2816 = vadd.f32 0.0, %v2815
      %v2817 = vpop.f32.mrf.mxu0
      %v2818 = vpop.f32.mrf.mxu0
      %v2819 = vpop.f32.mrf.mxu0
      %2820 = vdwg.mxu0
      %v2821 = vpack.c.bf16 %v2768, %v2720
      %v2822 = vpack.c.bf16 %v2816, %v2816
      %2823 = vrot.lane.b32.xlu0 %v2488, 120
      %v2824 = vpop.permute.xlu0 %2823
      %2825 = vrot.lane.b32.xlu0 %v2488, 88
      %v2826 = vpop.permute.xlu0 %2825
      %v2828 = vsel %vm508, %v2824, 0
      %v2831 = vsel %vm508, %v2826, 0
      %2833 = vmatprep.subr.bf16.mxu0 0
      %2834 = vmatpush1.bf16.xpose.msra.mxu0 0
      %2835 = vmatprep.subr.bf16.mxu0 0
      %2836 = vmatpush1.bf16.xpose.msra.mxu0 0
      %2837 = vmatprep.subr.bf16.mxu0 0
      %2838 = vmatpush1.bf16.xpose.msra.mxu0 0
      %2839 = vmatprep.subr.bf16.mxu0 0
      %2840 = vmatpush1.bf16.xpose.msra.mxu0 0
      %2841 = vmatprep.subr.bf16.mxu0 0
      %2842 = vmatpush1.bf16.xpose.msra.mxu0 0
      %2843 = vmatprep.subr.bf16.mxu0 0
      %2844 = vmatpush1.bf16.xpose.msra.mxu0 0
      %2845 = vmatprep.subr.bf16.mxu0 0
      %2846 = vmatpush1.bf16.xpose.msra.mxu0 0
      %2847 = vmatprep.subr.bf16.mxu0 0
      %2848 = vmatpush1.bf16.xpose.msra.mxu0 %v2831
      %2849 = vmatprep.subr.bf16.mxu0 0
      %2850 = vmatpush2.bf16.xpose.msra.mxu0 0
      %2851 = vmatprep.subr.bf16.mxu0 0
      %2852 = vmatpush2.bf16.xpose.msra.mxu0 0
      %2853 = vmatprep.subr.bf16.mxu0 0
      %2854 = vmatpush2.bf16.xpose.msra.mxu0 0
      %2855 = vmatprep.subr.bf16.mxu0 0
      %2856 = vmatpush2.bf16.xpose.msra.mxu0 0
      %2857 = vmatprep.subr.bf16.mxu0 0
      %2858 = vmatpush2.bf16.xpose.msra.mxu0 0
      %2859 = vmatprep.subr.bf16.mxu0 0
      %2860 = vmatpush2.bf16.xpose.msra.mxu0 0
      %2861 = vmatprep.subr.bf16.mxu0 0
      %2862 = vmatpush2.bf16.xpose.msra.mxu0 0
      %2863 = vmatprep.subr.bf16.mxu0 0
      %2864 = vmatpush2.bf16.xpose.msra.mxu0 0
      %2865 = vmatprep.mubr.bf16.mxu0 0
      %2866 = vmatmul.mubr.bf16.gmra.mxu0 %v2828
      %v2867 = vpop.f32.mrf.mxu0
      %v2868 = vadd.f32 0.0, %v2867
      %v2869 = vpop.f32.mrf.mxu0
      %v2870 = vpop.f32.mrf.mxu0
      %v2871 = vpop.f32.mrf.mxu0
      %2872 = vdwg.mxu0
      %2873 = vrot.lane.b32.xlu0 %v2489, 120
      %v2874 = vpop.permute.xlu0 %2873
      %2875 = vrot.lane.b32.xlu0 %v2489, 88
      %v2876 = vpop.permute.xlu0 %2875
      %v2878 = vsel %vm508, %v2874, 0
      %v2881 = vsel %vm508, %v2876, 0
      %2883 = vmatprep.subr.bf16.mxu0 0
      %2884 = vmatpush1.bf16.xpose.msra.mxu0 0
      %2885 = vmatprep.subr.bf16.mxu0 0
      %2886 = vmatpush1.bf16.xpose.msra.mxu0 0
      %2887 = vmatprep.subr.bf16.mxu0 0
      %2888 = vmatpush1.bf16.xpose.msra.mxu0 0
      %2889 = vmatprep.subr.bf16.mxu0 0
      %2890 = vmatpush1.bf16.xpose.msra.mxu0 0
      %2891 = vmatprep.subr.bf16.mxu0 0
      %2892 = vmatpush1.bf16.xpose.msra.mxu0 0
      %2893 = vmatprep.subr.bf16.mxu0 0
      %2894 = vmatpush1.bf16.xpose.msra.mxu0 0
      %2895 = vmatprep.subr.bf16.mxu0 0
      %2896 = vmatpush1.bf16.xpose.msra.mxu0 0
      %2897 = vmatprep.subr.bf16.mxu0 0
      %2898 = vmatpush1.bf16.xpose.msra.mxu0 %v2881
      %2899 = vmatprep.subr.bf16.mxu0 0
      %2900 = vmatpush2.bf16.xpose.msra.mxu0 0
      %2901 = vmatprep.subr.bf16.mxu0 0
      %2902 = vmatpush2.bf16.xpose.msra.mxu0 0
      %2903 = vmatprep.subr.bf16.mxu0 0
      %2904 = vmatpush2.bf16.xpose.msra.mxu0 0
      %2905 = vmatprep.subr.bf16.mxu0 0
      %2906 = vmatpush2.bf16.xpose.msra.mxu0 0
      %2907 = vmatprep.subr.bf16.mxu0 0
      %2908 = vmatpush2.bf16.xpose.msra.mxu0 0
      %2909 = vmatprep.subr.bf16.mxu0 0
      %2910 = vmatpush2.bf16.xpose.msra.mxu0 0
      %2911 = vmatprep.subr.bf16.mxu0 0
      %2912 = vmatpush2.bf16.xpose.msra.mxu0 0
      %2913 = vmatprep.subr.bf16.mxu0 0
      %2914 = vmatpush2.bf16.xpose.msra.mxu0 0
      %2915 = vmatprep.mubr.bf16.mxu0 0
      %2916 = vmatmul.mubr.bf16.gmra.mxu0 %v2878
      %v2917 = vpop.f32.mrf.mxu0
      %v2918 = vadd.f32 0.0, %v2917
      %v2919 = vpop.f32.mrf.mxu0
      %v2920 = vpop.f32.mrf.mxu0
      %v2921 = vpop.f32.mrf.mxu0
      %2922 = vdwg.mxu0
      %2923 = vrot.lane.b32.xlu0 %v2490, 120
      %v2924 = vpop.permute.xlu0 %2923
      %2925 = vrot.lane.b32.xlu0 %v2490, 88
      %v2926 = vpop.permute.xlu0 %2925
      %v2928 = vsel %vm508, %v2924, 0
      %v2931 = vsel %vm508, %v2926, 0
      %2933 = vmatprep.subr.bf16.mxu0 0
      %2934 = vmatpush1.bf16.xpose.msra.mxu0 0
      %2935 = vmatprep.subr.bf16.mxu0 0
      %2936 = vmatpush1.bf16.xpose.msra.mxu0 0
      %2937 = vmatprep.subr.bf16.mxu0 0
      %2938 = vmatpush1.bf16.xpose.msra.mxu0 0
      %2939 = vmatprep.subr.bf16.mxu0 0
      %2940 = vmatpush1.bf16.xpose.msra.mxu0 0
      %2941 = vmatprep.subr.bf16.mxu0 0
      %2942 = vmatpush1.bf16.xpose.msra.mxu0 0
      %2943 = vmatprep.subr.bf16.mxu0 0
      %2944 = vmatpush1.bf16.xpose.msra.mxu0 0
      %2945 = vmatprep.subr.bf16.mxu0 0
      %2946 = vmatpush1.bf16.xpose.msra.mxu0 0
      %2947 = vmatprep.subr.bf16.mxu0 0
      %2948 = vmatpush1.bf16.xpose.msra.mxu0 %v2931
      %2949 = vmatprep.subr.bf16.mxu0 0
      %2950 = vmatpush2.bf16.xpose.msra.mxu0 0
      %2951 = vmatprep.subr.bf16.mxu0 0
      %2952 = vmatpush2.bf16.xpose.msra.mxu0 0
      %2953 = vmatprep.subr.bf16.mxu0 0
      %2954 = vmatpush2.bf16.xpose.msra.mxu0 0
      %2955 = vmatprep.subr.bf16.mxu0 0
      %2956 = vmatpush2.bf16.xpose.msra.mxu0 0
      %2957 = vmatprep.subr.bf16.mxu0 0
      %2958 = vmatpush2.bf16.xpose.msra.mxu0 0
      %2959 = vmatprep.subr.bf16.mxu0 0
      %2960 = vmatpush2.bf16.xpose.msra.mxu0 0
      %2961 = vmatprep.subr.bf16.mxu0 0
      %2962 = vmatpush2.bf16.xpose.msra.mxu0 0
      %2963 = vmatprep.subr.bf16.mxu0 0
      %2964 = vmatpush2.bf16.xpose.msra.mxu0 0
      %2965 = vmatprep.mubr.bf16.mxu0 0
      %2966 = vmatmul.mubr.bf16.gmra.mxu0 %v2928
      %v2967 = vpop.f32.mrf.mxu0
      %v2968 = vadd.f32 0.0, %v2967
      %v2969 = vpop.f32.mrf.mxu0
      %v2970 = vpop.f32.mrf.mxu0
      %v2971 = vpop.f32.mrf.mxu0
      %2972 = vdwg.mxu0
      %v2973 = vmul.f32 %v2868, 0.35355338
      %v2974 = vmul.f32 %v2918, 0.35355338
      %v2975 = vmul.f32 %v2968, 0.35355338
      %v2976 = vsel %vm508, %v2973, -inf
      %2977 = vmax.xlane.f32.xlu0 %v2976
      %v2978 = vpop.xlane.xlu0 %2977
      %v2979 = vsel %vm508, %v2974, -inf
      %2980 = vmax.xlane.f32.xlu0 %v2979
      %v2981 = vpop.xlane.xlu0 %2980
      %v2982 = vsel %vm508, %v2975, -inf
      %2983 = vmax.xlane.f32.xlu0 %v2982
      %v2984 = vpop.xlane.xlu0 %2983
      %v2985 = vsub.f32 %v2973, %v2978
      %v2986 = vsub.f32 %v2974, %v2981
      %v2987 = vsub.f32 %v2975, %v2984
      %v2988 = vmul.f32 %v2985, 1.442695
      %v2989 = vpow.pop %v2988
      %v2990 = vmul.f32 %v2986, 1.442695
      %v2991 = vpow.pop %v2990
      %v2992 = vmul.f32 %v2987, 1.442695
      %v2993 = vpow.pop %v2992
      %v2994 = vsel %vm508, %v2989, 0.0
      %2995 = vadd.xlane.f32.xlu0 %v2994
      %v2996 = vpop.xlane.xlu0 %2995
      %v2997 = vsel %vm508, %v2991, 0.0
      %2998 = vadd.xlane.f32.xlu0 %v2997
      %v2999 = vpop.xlane.xlu0 %2998
      %v3000 = vsel %vm508, %v2993, 0.0
      %3001 = vadd.xlane.f32.xlu0 %v3000
      %v3002 = vpop.xlane.xlu0 %3001
      %v3003 = vrcp.pop %v2996
      %v3004 = vrcp.pop %v2999
      %v3005 = vrcp.pop %v3002
      %v3006 = vmul.f32 %v2989, %v3003
      %v3007 = vmul.f32 %v2991, %v3004
      %v3008 = vmul.f32 %v2993, %v3005
      %v3009 = vpack.c.bf16 %v3006, %v3006
      %v3010 = vpack.c.bf16 %v3007, %v3007
      %v3011 = vpack.c.bf16 %v3008, %v3008
      %3012 = vrot.lane.b32.xlu0 %v2488, 56
      %v3013 = vpop.permute.xlu0 %3012
      %v3015 = vsel %vm508, %v3009, 0
      %v3018 = vsel %vm697, %v3013, 0
      %3020 = vmatprep.subr.bf16.mxu0 0
      %3021 = vmatpush1.bf16.msra.mxu0 0
      %3022 = vmatprep.subr.bf16.mxu0 0
      %3023 = vmatpush1.bf16.msra.mxu0 0
      %3024 = vmatprep.subr.bf16.mxu0 0
      %3025 = vmatpush1.bf16.msra.mxu0 0
      %3026 = vmatprep.subr.bf16.mxu0 0
      %3027 = vmatpush1.bf16.msra.mxu0 0
      %3028 = vmatprep.subr.bf16.mxu0 0
      %3029 = vmatpush1.bf16.msra.mxu0 0
      %3030 = vmatprep.subr.bf16.mxu0 0
      %3031 = vmatpush1.bf16.msra.mxu0 0
      %3032 = vmatprep.subr.bf16.mxu0 0
      %3033 = vmatpush1.bf16.msra.mxu0 0
      %3034 = vmatprep.subr.bf16.mxu0 0
      %3035 = vmatpush1.bf16.msra.mxu0 %v3018
      %3036 = vmatprep.subr.bf16.mxu0 0
      %3037 = vmatpush2.bf16.msra.mxu0 0
      %3038 = vmatprep.subr.bf16.mxu0 0
      %3039 = vmatpush2.bf16.msra.mxu0 0
      %3040 = vmatprep.subr.bf16.mxu0 0
      %3041 = vmatpush2.bf16.msra.mxu0 0
      %3042 = vmatprep.subr.bf16.mxu0 0
      %3043 = vmatpush2.bf16.msra.mxu0 0
      %3044 = vmatprep.subr.bf16.mxu0 0
      %3045 = vmatpush2.bf16.msra.mxu0 0
      %3046 = vmatprep.subr.bf16.mxu0 0
      %3047 = vmatpush2.bf16.msra.mxu0 0
      %3048 = vmatprep.subr.bf16.mxu0 0
      %3049 = vmatpush2.bf16.msra.mxu0 0
      %3050 = vmatprep.subr.bf16.mxu0 0
      %3051 = vmatpush2.bf16.msra.mxu0 0
      %3052 = vmatprep.mubr.bf16.mxu0 0
      %3053 = vmatmul.mubr.bf16.gmra.mxu0 %v3015
      %v3054 = vpop.f32.mrf.mxu0
      %v3055 = vadd.f32 0.0, %v3054
      %v3056 = vpop.f32.mrf.mxu0
      %v3057 = vpop.f32.mrf.mxu0
      %v3058 = vpop.f32.mrf.mxu0
      %3059 = vdwg.mxu0
      %3060 = vrot.lane.b32.xlu0 %v2489, 56
      %v3061 = vpop.permute.xlu0 %3060
      %v3063 = vsel %vm508, %v3010, 0
      %v3066 = vsel %vm697, %v3061, 0
      %3068 = vmatprep.subr.bf16.mxu0 0
      %3069 = vmatpush1.bf16.msra.mxu0 0
      %3070 = vmatprep.subr.bf16.mxu0 0
      %3071 = vmatpush1.bf16.msra.mxu0 0
      %3072 = vmatprep.subr.bf16.mxu0 0
      %3073 = vmatpush1.bf16.msra.mxu0 0
      %3074 = vmatprep.subr.bf16.mxu0 0
      %3075 = vmatpush1.bf16.msra.mxu0 0
      %3076 = vmatprep.subr.bf16.mxu0 0
      %3077 = vmatpush1.bf16.msra.mxu0 0
      %3078 = vmatprep.subr.bf16.mxu0 0
      %3079 = vmatpush1.bf16.msra.mxu0 0
      %3080 = vmatprep.subr.bf16.mxu0 0
      %3081 = vmatpush1.bf16.msra.mxu0 0
      %3082 = vmatprep.subr.bf16.mxu0 0
      %3083 = vmatpush1.bf16.msra.mxu0 %v3066
      %3084 = vmatprep.subr.bf16.mxu0 0
      %3085 = vmatpush2.bf16.msra.mxu0 0
      %3086 = vmatprep.subr.bf16.mxu0 0
      %3087 = vmatpush2.bf16.msra.mxu0 0
      %3088 = vmatprep.subr.bf16.mxu0 0
      %3089 = vmatpush2.bf16.msra.mxu0 0
      %3090 = vmatprep.subr.bf16.mxu0 0
      %3091 = vmatpush2.bf16.msra.mxu0 0
      %3092 = vmatprep.subr.bf16.mxu0 0
      %3093 = vmatpush2.bf16.msra.mxu0 0
      %3094 = vmatprep.subr.bf16.mxu0 0
      %3095 = vmatpush2.bf16.msra.mxu0 0
      %3096 = vmatprep.subr.bf16.mxu0 0
      %3097 = vmatpush2.bf16.msra.mxu0 0
      %3098 = vmatprep.subr.bf16.mxu0 0
      %3099 = vmatpush2.bf16.msra.mxu0 0
      %3100 = vmatprep.mubr.bf16.mxu0 0
      %3101 = vmatmul.mubr.bf16.gmra.mxu0 %v3063
      %v3102 = vpop.f32.mrf.mxu0
      %v3103 = vadd.f32 0.0, %v3102
      %v3104 = vpop.f32.mrf.mxu0
      %v3105 = vpop.f32.mrf.mxu0
      %v3106 = vpop.f32.mrf.mxu0
      %3107 = vdwg.mxu0
      %3108 = vrot.lane.b32.xlu0 %v2490, 56
      %v3109 = vpop.permute.xlu0 %3108
      %v3111 = vsel %vm508, %v3011, 0
      %v3114 = vsel %vm697, %v3109, 0
      %3116 = vmatprep.subr.bf16.mxu0 0
      %3117 = vmatpush1.bf16.msra.mxu0 0
      %3118 = vmatprep.subr.bf16.mxu0 0
      %3119 = vmatpush1.bf16.msra.mxu0 0
      %3120 = vmatprep.subr.bf16.mxu0 0
      %3121 = vmatpush1.bf16.msra.mxu0 0
      %3122 = vmatprep.subr.bf16.mxu0 0
      %3123 = vmatpush1.bf16.msra.mxu0 0
      %3124 = vmatprep.subr.bf16.mxu0 0
      %3125 = vmatpush1.bf16.msra.mxu0 0
      %3126 = vmatprep.subr.bf16.mxu0 0
      %3127 = vmatpush1.bf16.msra.mxu0 0
      %3128 = vmatprep.subr.bf16.mxu0 0
      %3129 = vmatpush1.bf16.msra.mxu0 0
      %3130 = vmatprep.subr.bf16.mxu0 0
      %3131 = vmatpush1.bf16.msra.mxu0 %v3114
      %3132 = vmatprep.subr.bf16.mxu0 0
      %3133 = vmatpush2.bf16.msra.mxu0 0
      %3134 = vmatprep.subr.bf16.mxu0 0
      %3135 = vmatpush2.bf16.msra.mxu0 0
      %3136 = vmatprep.subr.bf16.mxu0 0
      %3137 = vmatpush2.bf16.msra.mxu0 0
      %3138 = vmatprep.subr.bf16.mxu0 0
      %3139 = vmatpush2.bf16.msra.mxu0 0
      %3140 = vmatprep.subr.bf16.mxu0 0
      %3141 = vmatpush2.bf16.msra.mxu0 0
      %3142 = vmatprep.subr.bf16.mxu0 0
      %3143 = vmatpush2.bf16.msra.mxu0 0
      %3144 = vmatprep.subr.bf16.mxu0 0
      %3145 = vmatpush2.bf16.msra.mxu0 0
      %3146 = vmatprep.subr.bf16.mxu0 0
      %3147 = vmatpush2.bf16.msra.mxu0 0
      %3148 = vmatprep.mubr.bf16.mxu0 0
      %3149 = vmatmul.mubr.bf16.gmra.mxu0 %v3111
      %v3150 = vpop.f32.mrf.mxu0
      %v3151 = vadd.f32 0.0, %v3150
      %v3152 = vpop.f32.mrf.mxu0
      %v3153 = vpop.f32.mrf.mxu0
      %v3154 = vpop.f32.mrf.mxu0
      %3155 = vdwg.mxu0
      %v3156 = vpack.c.bf16 %v3103, %v3055
      %v3157 = vpack.c.bf16 %v3151, %v3151
      %v3159 = vsel %vm508, %v3156, 0
      %v3162 = vsel %vm508, %v3157, 0
      %v3165 = vsel %vm697, %v2391, 0
      %3167 = vmatprep.subr.bf16.mxu0 0
      %3168 = vmatpush1.bf16.msra.mxu0 0
      %3169 = vmatprep.subr.bf16.mxu0 0
      %3170 = vmatpush1.bf16.msra.mxu0 0
      %3171 = vmatprep.subr.bf16.mxu0 0
      %3172 = vmatpush1.bf16.msra.mxu0 0
      %3173 = vmatprep.subr.bf16.mxu0 0
      %3174 = vmatpush1.bf16.msra.mxu0 0
      %3175 = vmatprep.subr.bf16.mxu0 0
      %3176 = vmatpush1.bf16.msra.mxu0 0
      %3177 = vmatprep.subr.bf16.mxu0 0
      %3178 = vmatpush1.bf16.msra.mxu0 0
      %3179 = vmatprep.subr.bf16.mxu0 0
      %3180 = vmatpush1.bf16.msra.mxu0 0
      %3181 = vmatprep.subr.bf16.mxu0 0
      %3182 = vmatpush1.bf16.msra.mxu0 %v3165
      %3183 = vmatprep.subr.bf16.mxu0 0
      %3184 = vmatpush2.bf16.msra.mxu0 0
      %3185 = vmatprep.subr.bf16.mxu0 0
      %3186 = vmatpush2.bf16.msra.mxu0 0
      %3187 = vmatprep.subr.bf16.mxu0 0
      %3188 = vmatpush2.bf16.msra.mxu0 0
      %3189 = vmatprep.subr.bf16.mxu0 0
      %3190 = vmatpush2.bf16.msra.mxu0 0
      %3191 = vmatprep.subr.bf16.mxu0 0
      %3192 = vmatpush2.bf16.msra.mxu0 0
      %3193 = vmatprep.subr.bf16.mxu0 0
      %3194 = vmatpush2.bf16.msra.mxu0 0
      %3195 = vmatprep.subr.bf16.mxu0 0
      %3196 = vmatpush2.bf16.msra.mxu0 0
      %3197 = vmatprep.subr.bf16.mxu0 0
      %3198 = vmatpush2.bf16.msra.mxu0 0
      %3199 = vmatprep.mubr.bf16.mxu0 0
      %3200 = vmatmul.mubr.bf16.gmra.mxu0 %v3159
      %v3201 = vpop.f32.mrf.mxu0
      %v3202 = vadd.f32 0.0, %v3201
      %v3203 = vpop.f32.mrf.mxu0
      %v3204 = vpop.f32.mrf.mxu0
      %v3205 = vadd.f32 0.0, %v3204
      %v3206 = vpop.f32.mrf.mxu0
      %3207 = vmatprep.mubr.bf16.mxu0 0
      %3208 = vmatmul.mubr.bf16.gmra.mxu0 %v3162
      %v3209 = vpop.f32.mrf.mxu0
      %v3210 = vadd.f32 0.0, %v3209
      %v3211 = vpop.f32.mrf.mxu0
      %v3212 = vpop.f32.mrf.mxu0
      %v3213 = vpop.f32.mrf.mxu0
      %3214 = vdwg.mxu0
      %v3216 = vsel %vm508, %v2821, 0
      %v3219 = vsel %vm508, %v2822, 0
      %v3222 = vsel %vm697, %v2390, 0
      %3224 = vmatprep.subr.bf16.mxu0 0
      %3225 = vmatpush1.bf16.msra.mxu0 0
      %3226 = vmatprep.subr.bf16.mxu0 0
      %3227 = vmatpush1.bf16.msra.mxu0 0
      %3228 = vmatprep.subr.bf16.mxu0 0
      %3229 = vmatpush1.bf16.msra.mxu0 0
      %3230 = vmatprep.subr.bf16.mxu0 0
      %3231 = vmatpush1.bf16.msra.mxu0 0
      %3232 = vmatprep.subr.bf16.mxu0 0
      %3233 = vmatpush1.bf16.msra.mxu0 0
      %3234 = vmatprep.subr.bf16.mxu0 0
      %3235 = vmatpush1.bf16.msra.mxu0 0
      %3236 = vmatprep.subr.bf16.mxu0 0
      %3237 = vmatpush1.bf16.msra.mxu0 0
      %3238 = vmatprep.subr.bf16.mxu0 0
      %3239 = vmatpush1.bf16.msra.mxu0 %v3222
      %3240 = vmatprep.subr.bf16.mxu0 0
      %3241 = vmatpush2.bf16.msra.mxu0 0
      %3242 = vmatprep.subr.bf16.mxu0 0
      %3243 = vmatpush2.bf16.msra.mxu0 0
      %3244 = vmatprep.subr.bf16.mxu0 0
      %3245 = vmatpush2.bf16.msra.mxu0 0
      %3246 = vmatprep.subr.bf16.mxu0 0
      %3247 = vmatpush2.bf16.msra.mxu0 0
      %3248 = vmatprep.subr.bf16.mxu0 0
      %3249 = vmatpush2.bf16.msra.mxu0 0
      %3250 = vmatprep.subr.bf16.mxu0 0
      %3251 = vmatpush2.bf16.msra.mxu0 0
      %3252 = vmatprep.subr.bf16.mxu0 0
      %3253 = vmatpush2.bf16.msra.mxu0 0
      %3254 = vmatprep.subr.bf16.mxu0 0
      %3255 = vmatpush2.bf16.msra.mxu0 0
      %3256 = vmatprep.mubr.bf16.mxu0 0
      %3257 = vmatmul.mubr.bf16.gmra.mxu0 %v3216
      %v3258 = vpop.f32.mrf.mxu0
      %v3259 = vadd.f32 %v3202, %v3258
      %v3260 = vpop.f32.mrf.mxu0
      %v3261 = vpop.f32.mrf.mxu0
      %v3262 = vadd.f32 %v3205, %v3261
      %v3263 = vpop.f32.mrf.mxu0
      %3264 = vmatprep.mubr.bf16.mxu0 0
      %3265 = vmatmul.mubr.bf16.gmra.mxu0 %v3219
      %v3266 = vpop.f32.mrf.mxu0
      %v3267 = vadd.f32 %v3210, %v3266
      %v3268 = vpop.f32.mrf.mxu0
      %v3269 = vpop.f32.mrf.mxu0
      %v3270 = vpop.f32.mrf.mxu0
      %3271 = vdwg.mxu0
      %3272 = vrot.lane.b32.xlu0 %v2488, 112
      %v3273 = vpop.permute.xlu0 %3272
      %3274 = vrot.lane.b32.xlu0 %v2488, 80
      %v3275 = vpop.permute.xlu0 %3274
      %v3277 = vsel %vm508, %v3273, 0
      %v3280 = vsel %vm508, %v3275, 0
      %3282 = vmatprep.subr.bf16.mxu0 0
      %3283 = vmatpush1.bf16.xpose.msra.mxu0 0
      %3284 = vmatprep.subr.bf16.mxu0 0
      %3285 = vmatpush1.bf16.xpose.msra.mxu0 0
      %3286 = vmatprep.subr.bf16.mxu0 0
      %3287 = vmatpush1.bf16.xpose.msra.mxu0 0
      %3288 = vmatprep.subr.bf16.mxu0 0
      %3289 = vmatpush1.bf16.xpose.msra.mxu0 0
      %3290 = vmatprep.subr.bf16.mxu0 0
      %3291 = vmatpush1.bf16.xpose.msra.mxu0 0
      %3292 = vmatprep.subr.bf16.mxu0 0
      %3293 = vmatpush1.bf16.xpose.msra.mxu0 0
      %3294 = vmatprep.subr.bf16.mxu0 0
      %3295 = vmatpush1.bf16.xpose.msra.mxu0 0
      %3296 = vmatprep.subr.bf16.mxu0 0
      %3297 = vmatpush1.bf16.xpose.msra.mxu0 %v3280
      %3298 = vmatprep.subr.bf16.mxu0 0
      %3299 = vmatpush2.bf16.xpose.msra.mxu0 0
      %3300 = vmatprep.subr.bf16.mxu0 0
      %3301 = vmatpush2.bf16.xpose.msra.mxu0 0
      %3302 = vmatprep.subr.bf16.mxu0 0
      %3303 = vmatpush2.bf16.xpose.msra.mxu0 0
      %3304 = vmatprep.subr.bf16.mxu0 0
      %3305 = vmatpush2.bf16.xpose.msra.mxu0 0
      %3306 = vmatprep.subr.bf16.mxu0 0
      %3307 = vmatpush2.bf16.xpose.msra.mxu0 0
      %3308 = vmatprep.subr.bf16.mxu0 0
      %3309 = vmatpush2.bf16.xpose.msra.mxu0 0
      %3310 = vmatprep.subr.bf16.mxu0 0
      %3311 = vmatpush2.bf16.xpose.msra.mxu0 0
      %3312 = vmatprep.subr.bf16.mxu0 0
      %3313 = vmatpush2.bf16.xpose.msra.mxu0 0
      %3314 = vmatprep.mubr.bf16.mxu0 0
      %3315 = vmatmul.mubr.bf16.gmra.mxu0 %v3277
      %v3316 = vpop.f32.mrf.mxu0
      %v3317 = vadd.f32 0.0, %v3316
      %v3318 = vpop.f32.mrf.mxu0
      %v3319 = vpop.f32.mrf.mxu0
      %v3320 = vpop.f32.mrf.mxu0
      %3321 = vdwg.mxu0
      %3322 = vrot.lane.b32.xlu0 %v2489, 112
      %v3323 = vpop.permute.xlu0 %3322
      %3324 = vrot.lane.b32.xlu0 %v2489, 80
      %v3325 = vpop.permute.xlu0 %3324
      %v3327 = vsel %vm508, %v3323, 0
      %v3330 = vsel %vm508, %v3325, 0
      %3332 = vmatprep.subr.bf16.mxu0 0
      %3333 = vmatpush1.bf16.xpose.msra.mxu0 0
      %3334 = vmatprep.subr.bf16.mxu0 0
      %3335 = vmatpush1.bf16.xpose.msra.mxu0 0
      %3336 = vmatprep.subr.bf16.mxu0 0
      %3337 = vmatpush1.bf16.xpose.msra.mxu0 0
      %3338 = vmatprep.subr.bf16.mxu0 0
      %3339 = vmatpush1.bf16.xpose.msra.mxu0 0
      %3340 = vmatprep.subr.bf16.mxu0 0
      %3341 = vmatpush1.bf16.xpose.msra.mxu0 0
      %3342 = vmatprep.subr.bf16.mxu0 0
      %3343 = vmatpush1.bf16.xpose.msra.mxu0 0
      %3344 = vmatprep.subr.bf16.mxu0 0
      %3345 = vmatpush1.bf16.xpose.msra.mxu0 0
      %3346 = vmatprep.subr.bf16.mxu0 0
      %3347 = vmatpush1.bf16.xpose.msra.mxu0 %v3330
      %3348 = vmatprep.subr.bf16.mxu0 0
      %3349 = vmatpush2.bf16.xpose.msra.mxu0 0
      %3350 = vmatprep.subr.bf16.mxu0 0
      %3351 = vmatpush2.bf16.xpose.msra.mxu0 0
      %3352 = vmatprep.subr.bf16.mxu0 0
      %3353 = vmatpush2.bf16.xpose.msra.mxu0 0
      %3354 = vmatprep.subr.bf16.mxu0 0
      %3355 = vmatpush2.bf16.xpose.msra.mxu0 0
      %3356 = vmatprep.subr.bf16.mxu0 0
      %3357 = vmatpush2.bf16.xpose.msra.mxu0 0
      %3358 = vmatprep.subr.bf16.mxu0 0
      %3359 = vmatpush2.bf16.xpose.msra.mxu0 0
      %3360 = vmatprep.subr.bf16.mxu0 0
      %3361 = vmatpush2.bf16.xpose.msra.mxu0 0
      %3362 = vmatprep.subr.bf16.mxu0 0
      %3363 = vmatpush2.bf16.xpose.msra.mxu0 0
      %3364 = vmatprep.mubr.bf16.mxu0 0
      %3365 = vmatmul.mubr.bf16.gmra.mxu0 %v3327
      %v3366 = vpop.f32.mrf.mxu0
      %v3367 = vadd.f32 0.0, %v3366
      %v3368 = vpop.f32.mrf.mxu0
      %v3369 = vpop.f32.mrf.mxu0
      %v3370 = vpop.f32.mrf.mxu0
      %3371 = vdwg.mxu0
      %3372 = vrot.lane.b32.xlu0 %v2490, 112
      %v3373 = vpop.permute.xlu0 %3372
      %3374 = vrot.lane.b32.xlu0 %v2490, 80
      %v3375 = vpop.permute.xlu0 %3374
      %v3377 = vsel %vm508, %v3373, 0
      %v3380 = vsel %vm508, %v3375, 0
      %3382 = vmatprep.subr.bf16.mxu0 0
      %3383 = vmatpush1.bf16.xpose.msra.mxu0 0
      %3384 = vmatprep.subr.bf16.mxu0 0
      %3385 = vmatpush1.bf16.xpose.msra.mxu0 0
      %3386 = vmatprep.subr.bf16.mxu0 0
      %3387 = vmatpush1.bf16.xpose.msra.mxu0 0
      %3388 = vmatprep.subr.bf16.mxu0 0
      %3389 = vmatpush1.bf16.xpose.msra.mxu0 0
      %3390 = vmatprep.subr.bf16.mxu0 0
      %3391 = vmatpush1.bf16.xpose.msra.mxu0 0
      %3392 = vmatprep.subr.bf16.mxu0 0
      %3393 = vmatpush1.bf16.xpose.msra.mxu0 0
      %3394 = vmatprep.subr.bf16.mxu0 0
      %3395 = vmatpush1.bf16.xpose.msra.mxu0 0
      %3396 = vmatprep.subr.bf16.mxu0 0
      %3397 = vmatpush1.bf16.xpose.msra.mxu0 %v3380
      %3398 = vmatprep.subr.bf16.mxu0 0
      %3399 = vmatpush2.bf16.xpose.msra.mxu0 0
      %3400 = vmatprep.subr.bf16.mxu0 0
      %3401 = vmatpush2.bf16.xpose.msra.mxu0 0
      %3402 = vmatprep.subr.bf16.mxu0 0
      %3403 = vmatpush2.bf16.xpose.msra.mxu0 0
      %3404 = vmatprep.subr.bf16.mxu0 0
      %3405 = vmatpush2.bf16.xpose.msra.mxu0 0
      %3406 = vmatprep.subr.bf16.mxu0 0
      %3407 = vmatpush2.bf16.xpose.msra.mxu0 0
      %3408 = vmatprep.subr.bf16.mxu0 0
      %3409 = vmatpush2.bf16.xpose.msra.mxu0 0
      %3410 = vmatprep.subr.bf16.mxu0 0
      %3411 = vmatpush2.bf16.xpose.msra.mxu0 0
      %3412 = vmatprep.subr.bf16.mxu0 0
      %3413 = vmatpush2.bf16.xpose.msra.mxu0 0
      %3414 = vmatprep.mubr.bf16.mxu0 0
      %3415 = vmatmul.mubr.bf16.gmra.mxu0 %v3377
      %v3416 = vpop.f32.mrf.mxu0
      %v3417 = vadd.f32 0.0, %v3416
      %v3418 = vpop.f32.mrf.mxu0
      %v3419 = vpop.f32.mrf.mxu0
      %v3420 = vpop.f32.mrf.mxu0
      %3421 = vdwg.mxu0
      %v3422 = vmul.f32 %v3317, 0.35355338
      %v3423 = vmul.f32 %v3367, 0.35355338
      %v3424 = vmul.f32 %v3417, 0.35355338
      %v3425 = vsel %vm508, %v3422, -inf
      %3426 = vmax.xlane.f32.xlu0 %v3425
      %v3427 = vpop.xlane.xlu0 %3426
      %v3428 = vsel %vm508, %v3423, -inf
      %3429 = vmax.xlane.f32.xlu0 %v3428
      %v3430 = vpop.xlane.xlu0 %3429
      %v3431 = vsel %vm508, %v3424, -inf
      %3432 = vmax.xlane.f32.xlu0 %v3431
      %v3433 = vpop.xlane.xlu0 %3432
      %v3434 = vsub.f32 %v3422, %v3427
      %v3435 = vsub.f32 %v3423, %v3430
      %v3436 = vsub.f32 %v3424, %v3433
      %v3437 = vmul.f32 %v3434, 1.442695
      %v3438 = vpow.pop %v3437
      %v3439 = vmul.f32 %v3435, 1.442695
      %v3440 = vpow.pop %v3439
      %v3441 = vmul.f32 %v3436, 1.442695
      %v3442 = vpow.pop %v3441
      %v3443 = vsel %vm508, %v3438, 0.0
      %3444 = vadd.xlane.f32.xlu0 %v3443
      %v3445 = vpop.xlane.xlu0 %3444
      %v3446 = vsel %vm508, %v3440, 0.0
      %3447 = vadd.xlane.f32.xlu0 %v3446
      %v3448 = vpop.xlane.xlu0 %3447
      %v3449 = vsel %vm508, %v3442, 0.0
      %3450 = vadd.xlane.f32.xlu0 %v3449
      %v3451 = vpop.xlane.xlu0 %3450
      %v3452 = vrcp.pop %v3445
      %v3453 = vrcp.pop %v3448
      %v3454 = vrcp.pop %v3451
      %v3455 = vmul.f32 %v3438, %v3452
      %v3456 = vmul.f32 %v3440, %v3453
      %v3457 = vmul.f32 %v3442, %v3454
      %v3458 = vpack.c.bf16 %v3455, %v3455
      %v3459 = vpack.c.bf16 %v3456, %v3456
      %v3460 = vpack.c.bf16 %v3457, %v3457
      %3461 = vrot.lane.b32.xlu0 %v2488, 48
      %v3462 = vpop.permute.xlu0 %3461
      %v3464 = vsel %vm508, %v3458, 0
      %v3467 = vsel %vm697, %v3462, 0
      %3469 = vmatprep.subr.bf16.mxu0 0
      %3470 = vmatpush1.bf16.msra.mxu0 0
      %3471 = vmatprep.subr.bf16.mxu0 0
      %3472 = vmatpush1.bf16.msra.mxu0 0
      %3473 = vmatprep.subr.bf16.mxu0 0
      %3474 = vmatpush1.bf16.msra.mxu0 0
      %3475 = vmatprep.subr.bf16.mxu0 0
      %3476 = vmatpush1.bf16.msra.mxu0 0
      %3477 = vmatprep.subr.bf16.mxu0 0
      %3478 = vmatpush1.bf16.msra.mxu0 0
      %3479 = vmatprep.subr.bf16.mxu0 0
      %3480 = vmatpush1.bf16.msra.mxu0 0
      %3481 = vmatprep.subr.bf16.mxu0 0
      %3482 = vmatpush1.bf16.msra.mxu0 0
      %3483 = vmatprep.subr.bf16.mxu0 0
      %3484 = vmatpush1.bf16.msra.mxu0 %v3467
      %3485 = vmatprep.subr.bf16.mxu0 0
      %3486 = vmatpush2.bf16.msra.mxu0 0
      %3487 = vmatprep.subr.bf16.mxu0 0
      %3488 = vmatpush2.bf16.msra.mxu0 0
      %3489 = vmatprep.subr.bf16.mxu0 0
      %3490 = vmatpush2.bf16.msra.mxu0 0
      %3491 = vmatprep.subr.bf16.mxu0 0
      %3492 = vmatpush2.bf16.msra.mxu0 0
      %3493 = vmatprep.subr.bf16.mxu0 0
      %3494 = vmatpush2.bf16.msra.mxu0 0
      %3495 = vmatprep.subr.bf16.mxu0 0
      %3496 = vmatpush2.bf16.msra.mxu0 0
      %3497 = vmatprep.subr.bf16.mxu0 0
      %3498 = vmatpush2.bf16.msra.mxu0 0
      %3499 = vmatprep.subr.bf16.mxu0 0
      %3500 = vmatpush2.bf16.msra.mxu0 0
      %3501 = vmatprep.mubr.bf16.mxu0 0
      %3502 = vmatmul.mubr.bf16.gmra.mxu0 %v3464
      %v3503 = vpop.f32.mrf.mxu0
      %v3504 = vadd.f32 0.0, %v3503
      %v3505 = vpop.f32.mrf.mxu0
      %v3506 = vpop.f32.mrf.mxu0
      %v3507 = vpop.f32.mrf.mxu0
      %3508 = vdwg.mxu0
      %3509 = vrot.lane.b32.xlu0 %v2489, 48
      %v3510 = vpop.permute.xlu0 %3509
      %v3512 = vsel %vm508, %v3459, 0
      %v3515 = vsel %vm697, %v3510, 0
      %3517 = vmatprep.subr.bf16.mxu0 0
      %3518 = vmatpush1.bf16.msra.mxu0 0
      %3519 = vmatprep.subr.bf16.mxu0 0
      %3520 = vmatpush1.bf16.msra.mxu0 0
      %3521 = vmatprep.subr.bf16.mxu0 0
      %3522 = vmatpush1.bf16.msra.mxu0 0
      %3523 = vmatprep.subr.bf16.mxu0 0
      %3524 = vmatpush1.bf16.msra.mxu0 0
      %3525 = vmatprep.subr.bf16.mxu0 0
      %3526 = vmatpush1.bf16.msra.mxu0 0
      %3527 = vmatprep.subr.bf16.mxu0 0
      %3528 = vmatpush1.bf16.msra.mxu0 0
      %3529 = vmatprep.subr.bf16.mxu0 0
      %3530 = vmatpush1.bf16.msra.mxu0 0
      %3531 = vmatprep.subr.bf16.mxu0 0
      %3532 = vmatpush1.bf16.msra.mxu0 %v3515
      %3533 = vmatprep.subr.bf16.mxu0 0
      %3534 = vmatpush2.bf16.msra.mxu0 0
      %3535 = vmatprep.subr.bf16.mxu0 0
      %3536 = vmatpush2.bf16.msra.mxu0 0
      %3537 = vmatprep.subr.bf16.mxu0 0
      %3538 = vmatpush2.bf16.msra.mxu0 0
      %3539 = vmatprep.subr.bf16.mxu0 0
      %3540 = vmatpush2.bf16.msra.mxu0 0
      %3541 = vmatprep.subr.bf16.mxu0 0
      %3542 = vmatpush2.bf16.msra.mxu0 0
      %3543 = vmatprep.subr.bf16.mxu0 0
      %3544 = vmatpush2.bf16.msra.mxu0 0
      %3545 = vmatprep.subr.bf16.mxu0 0
      %3546 = vmatpush2.bf16.msra.mxu0 0
      %3547 = vmatprep.subr.bf16.mxu0 0
      %3548 = vmatpush2.bf16.msra.mxu0 0
      %3549 = vmatprep.mubr.bf16.mxu0 0
      %3550 = vmatmul.mubr.bf16.gmra.mxu0 %v3512
      %v3551 = vpop.f32.mrf.mxu0
      %v3552 = vadd.f32 0.0, %v3551
      %v3553 = vpop.f32.mrf.mxu0
      %v3554 = vpop.f32.mrf.mxu0
      %v3555 = vpop.f32.mrf.mxu0
      %3556 = vdwg.mxu0
      %3557 = vrot.lane.b32.xlu0 %v2490, 48
      %v3558 = vpop.permute.xlu0 %3557
      %v3560 = vsel %vm508, %v3460, 0
      %v3563 = vsel %vm697, %v3558, 0
      %3565 = vmatprep.subr.bf16.mxu0 0
      %3566 = vmatpush1.bf16.msra.mxu0 0
      %3567 = vmatprep.subr.bf16.mxu0 0
      %3568 = vmatpush1.bf16.msra.mxu0 0
      %3569 = vmatprep.subr.bf16.mxu0 0
      %3570 = vmatpush1.bf16.msra.mxu0 0
      %3571 = vmatprep.subr.bf16.mxu0 0
      %3572 = vmatpush1.bf16.msra.mxu0 0
      %3573 = vmatprep.subr.bf16.mxu0 0
      %3574 = vmatpush1.bf16.msra.mxu0 0
      %3575 = vmatprep.subr.bf16.mxu0 0
      %3576 = vmatpush1.bf16.msra.mxu0 0
      %3577 = vmatprep.subr.bf16.mxu0 0
      %3578 = vmatpush1.bf16.msra.mxu0 0
      %3579 = vmatprep.subr.bf16.mxu0 0
      %3580 = vmatpush1.bf16.msra.mxu0 %v3563
      %3581 = vmatprep.subr.bf16.mxu0 0
      %3582 = vmatpush2.bf16.msra.mxu0 0
      %3583 = vmatprep.subr.bf16.mxu0 0
      %3584 = vmatpush2.bf16.msra.mxu0 0
      %3585 = vmatprep.subr.bf16.mxu0 0
      %3586 = vmatpush2.bf16.msra.mxu0 0
      %3587 = vmatprep.subr.bf16.mxu0 0
      %3588 = vmatpush2.bf16.msra.mxu0 0
      %3589 = vmatprep.subr.bf16.mxu0 0
      %3590 = vmatpush2.bf16.msra.mxu0 0
      %3591 = vmatprep.subr.bf16.mxu0 0
      %3592 = vmatpush2.bf16.msra.mxu0 0
      %3593 = vmatprep.subr.bf16.mxu0 0
      %3594 = vmatpush2.bf16.msra.mxu0 0
      %3595 = vmatprep.subr.bf16.mxu0 0
      %3596 = vmatpush2.bf16.msra.mxu0 0
      %3597 = vmatprep.mubr.bf16.mxu0 0
      %3598 = vmatmul.mubr.bf16.gmra.mxu0 %v3560
      %v3599 = vpop.f32.mrf.mxu0
      %v3600 = vadd.f32 0.0, %v3599
      %v3601 = vpop.f32.mrf.mxu0
      %v3602 = vpop.f32.mrf.mxu0
      %v3603 = vpop.f32.mrf.mxu0
      %3604 = vdwg.mxu0
      %v3605 = vpack.c.bf16 %v3552, %v3504
      %v3606 = vpack.c.bf16 %v3600, %v3600
      %v3608 = vsel %vm508, %v3605, 0
      %v3611 = vsel %vm508, %v3606, 0
      %v3614 = vsel %vm697, %v2392, 0
      %3616 = vmatprep.subr.bf16.mxu0 0
      %3617 = vmatpush1.bf16.msra.mxu0 0
      %3618 = vmatprep.subr.bf16.mxu0 0
      %3619 = vmatpush1.bf16.msra.mxu0 0
      %3620 = vmatprep.subr.bf16.mxu0 0
      %3621 = vmatpush1.bf16.msra.mxu0 0
      %3622 = vmatprep.subr.bf16.mxu0 0
      %3623 = vmatpush1.bf16.msra.mxu0 0
      %3624 = vmatprep.subr.bf16.mxu0 0
      %3625 = vmatpush1.bf16.msra.mxu0 0
      %3626 = vmatprep.subr.bf16.mxu0 0
      %3627 = vmatpush1.bf16.msra.mxu0 0
      %3628 = vmatprep.subr.bf16.mxu0 0
      %3629 = vmatpush1.bf16.msra.mxu0 0
      %3630 = vmatprep.subr.bf16.mxu0 0
      %3631 = vmatpush1.bf16.msra.mxu0 %v3614
      %3632 = vmatprep.subr.bf16.mxu0 0
      %3633 = vmatpush2.bf16.msra.mxu0 0
      %3634 = vmatprep.subr.bf16.mxu0 0
      %3635 = vmatpush2.bf16.msra.mxu0 0
      %3636 = vmatprep.subr.bf16.mxu0 0
      %3637 = vmatpush2.bf16.msra.mxu0 0
      %3638 = vmatprep.subr.bf16.mxu0 0
      %3639 = vmatpush2.bf16.msra.mxu0 0
      %3640 = vmatprep.subr.bf16.mxu0 0
      %3641 = vmatpush2.bf16.msra.mxu0 0
      %3642 = vmatprep.subr.bf16.mxu0 0
      %3643 = vmatpush2.bf16.msra.mxu0 0
      %3644 = vmatprep.subr.bf16.mxu0 0
      %3645 = vmatpush2.bf16.msra.mxu0 0
      %3646 = vmatprep.subr.bf16.mxu0 0
      %3647 = vmatpush2.bf16.msra.mxu0 0
      %3648 = vmatprep.mubr.bf16.mxu0 0
      %3649 = vmatmul.mubr.bf16.gmra.mxu0 %v3608
      %v3650 = vpop.f32.mrf.mxu0
      %v3651 = vadd.f32 0.0, %v3650
      %v3652 = vpop.f32.mrf.mxu0
      %v3653 = vpop.f32.mrf.mxu0
      %v3654 = vadd.f32 0.0, %v3653
      %v3655 = vpop.f32.mrf.mxu0
      %3656 = vmatprep.mubr.bf16.mxu0 0
      %3657 = vmatmul.mubr.bf16.gmra.mxu0 %v3611
      %v3658 = vpop.f32.mrf.mxu0
      %v3659 = vadd.f32 0.0, %v3658
      %v3660 = vpop.f32.mrf.mxu0
      %v3661 = vpop.f32.mrf.mxu0
      %v3662 = vpop.f32.mrf.mxu0
      %3663 = vdwg.mxu0
      %v3664 = vadd.f32 %v3259, %v3651
      %v3665 = vadd.f32 %v3262, %v3654
      %v3666 = vadd.f32 %v3267, %v3659
      %3667 = vrot.lane.b32.xlu0 %v2488, 104
      %v3668 = vpop.permute.xlu0 %3667
      %3669 = vrot.lane.b32.xlu0 %v2488, 72
      %v3670 = vpop.permute.xlu0 %3669
      %v3672 = vsel %vm508, %v3668, 0
      %v3675 = vsel %vm508, %v3670, 0
      %3677 = vmatprep.subr.bf16.mxu0 0
      %3678 = vmatpush1.bf16.xpose.msra.mxu0 0
      %3679 = vmatprep.subr.bf16.mxu0 0
      %3680 = vmatpush1.bf16.xpose.msra.mxu0 0
      %3681 = vmatprep.subr.bf16.mxu0 0
      %3682 = vmatpush1.bf16.xpose.msra.mxu0 0
      %3683 = vmatprep.subr.bf16.mxu0 0
      %3684 = vmatpush1.bf16.xpose.msra.mxu0 0
      %3685 = vmatprep.subr.bf16.mxu0 0
      %3686 = vmatpush1.bf16.xpose.msra.mxu0 0
      %3687 = vmatprep.subr.bf16.mxu0 0
      %3688 = vmatpush1.bf16.xpose.msra.mxu0 0
      %3689 = vmatprep.subr.bf16.mxu0 0
      %3690 = vmatpush1.bf16.xpose.msra.mxu0 0
      %3691 = vmatprep.subr.bf16.mxu0 0
      %3692 = vmatpush1.bf16.xpose.msra.mxu0 %v3675
      %3693 = vmatprep.subr.bf16.mxu0 0
      %3694 = vmatpush2.bf16.xpose.msra.mxu0 0
      %3695 = vmatprep.subr.bf16.mxu0 0
      %3696 = vmatpush2.bf16.xpose.msra.mxu0 0
      %3697 = vmatprep.subr.bf16.mxu0 0
      %3698 = vmatpush2.bf16.xpose.msra.mxu0 0
      %3699 = vmatprep.subr.bf16.mxu0 0
      %3700 = vmatpush2.bf16.xpose.msra.mxu0 0
      %3701 = vmatprep.subr.bf16.mxu0 0
      %3702 = vmatpush2.bf16.xpose.msra.mxu0 0
      %3703 = vmatprep.subr.bf16.mxu0 0
      %3704 = vmatpush2.bf16.xpose.msra.mxu0 0
      %3705 = vmatprep.subr.bf16.mxu0 0
      %3706 = vmatpush2.bf16.xpose.msra.mxu0 0
      %3707 = vmatprep.subr.bf16.mxu0 0
      %3708 = vmatpush2.bf16.xpose.msra.mxu0 0
      %3709 = vmatprep.mubr.bf16.mxu0 0
      %3710 = vmatmul.mubr.bf16.gmra.mxu0 %v3672
      %v3711 = vpop.f32.mrf.mxu0
      %v3712 = vadd.f32 0.0, %v3711
      %v3713 = vpop.f32.mrf.mxu0
      %v3714 = vpop.f32.mrf.mxu0
      %v3715 = vpop.f32.mrf.mxu0
      %3716 = vdwg.mxu0
      %3717 = vrot.lane.b32.xlu0 %v2489, 104
      %v3718 = vpop.permute.xlu0 %3717
      %3719 = vrot.lane.b32.xlu0 %v2489, 72
      %v3720 = vpop.permute.xlu0 %3719
      %v3722 = vsel %vm508, %v3718, 0
      %v3725 = vsel %vm508, %v3720, 0
      %3727 = vmatprep.subr.bf16.mxu0 0
      %3728 = vmatpush1.bf16.xpose.msra.mxu0 0
      %3729 = vmatprep.subr.bf16.mxu0 0
      %3730 = vmatpush1.bf16.xpose.msra.mxu0 0
      %3731 = vmatprep.subr.bf16.mxu0 0
      %3732 = vmatpush1.bf16.xpose.msra.mxu0 0
      %3733 = vmatprep.subr.bf16.mxu0 0
      %3734 = vmatpush1.bf16.xpose.msra.mxu0 0
      %3735 = vmatprep.subr.bf16.mxu0 0
      %3736 = vmatpush1.bf16.xpose.msra.mxu0 0
      %3737 = vmatprep.subr.bf16.mxu0 0
      %3738 = vmatpush1.bf16.xpose.msra.mxu0 0
      %3739 = vmatprep.subr.bf16.mxu0 0
      %3740 = vmatpush1.bf16.xpose.msra.mxu0 0
      %3741 = vmatprep.subr.bf16.mxu0 0
      %3742 = vmatpush1.bf16.xpose.msra.mxu0 %v3725
      %3743 = vmatprep.subr.bf16.mxu0 0
      %3744 = vmatpush2.bf16.xpose.msra.mxu0 0
      %3745 = vmatprep.subr.bf16.mxu0 0
      %3746 = vmatpush2.bf16.xpose.msra.mxu0 0
      %3747 = vmatprep.subr.bf16.mxu0 0
      %3748 = vmatpush2.bf16.xpose.msra.mxu0 0
      %3749 = vmatprep.subr.bf16.mxu0 0
      %3750 = vmatpush2.bf16.xpose.msra.mxu0 0
      %3751 = vmatprep.subr.bf16.mxu0 0
      %3752 = vmatpush2.bf16.xpose.msra.mxu0 0
      %3753 = vmatprep.subr.bf16.mxu0 0
      %3754 = vmatpush2.bf16.xpose.msra.mxu0 0
      %3755 = vmatprep.subr.bf16.mxu0 0
      %3756 = vmatpush2.bf16.xpose.msra.mxu0 0
      %3757 = vmatprep.subr.bf16.mxu0 0
      %3758 = vmatpush2.bf16.xpose.msra.mxu0 0
      %3759 = vmatprep.mubr.bf16.mxu0 0
      %3760 = vmatmul.mubr.bf16.gmra.mxu0 %v3722
      %v3761 = vpop.f32.mrf.mxu0
      %v3762 = vadd.f32 0.0, %v3761
      %v3763 = vpop.f32.mrf.mxu0
      %v3764 = vpop.f32.mrf.mxu0
      %v3765 = vpop.f32.mrf.mxu0
      %3766 = vdwg.mxu0
      %3767 = vrot.lane.b32.xlu0 %v2490, 104
      %v3768 = vpop.permute.xlu0 %3767
      %3769 = vrot.lane.b32.xlu0 %v2490, 72
      %v3770 = vpop.permute.xlu0 %3769
      %v3772 = vsel %vm508, %v3768, 0
      %v3775 = vsel %vm508, %v3770, 0
      %3777 = vmatprep.subr.bf16.mxu0 0
      %3778 = vmatpush1.bf16.xpose.msra.mxu0 0
      %3779 = vmatprep.subr.bf16.mxu0 0
      %3780 = vmatpush1.bf16.xpose.msra.mxu0 0
      %3781 = vmatprep.subr.bf16.mxu0 0
      %3782 = vmatpush1.bf16.xpose.msra.mxu0 0
      %3783 = vmatprep.subr.bf16.mxu0 0
      %3784 = vmatpush1.bf16.xpose.msra.mxu0 0
      %3785 = vmatprep.subr.bf16.mxu0 0
      %3786 = vmatpush1.bf16.xpose.msra.mxu0 0
      %3787 = vmatprep.subr.bf16.mxu0 0
      %3788 = vmatpush1.bf16.xpose.msra.mxu0 0
      %3789 = vmatprep.subr.bf16.mxu0 0
      %3790 = vmatpush1.bf16.xpose.msra.mxu0 0
      %3791 = vmatprep.subr.bf16.mxu0 0
      %3792 = vmatpush1.bf16.xpose.msra.mxu0 %v3775
      %3793 = vmatprep.subr.bf16.mxu0 0
      %3794 = vmatpush2.bf16.xpose.msra.mxu0 0
      %3795 = vmatprep.subr.bf16.mxu0 0
      %3796 = vmatpush2.bf16.xpose.msra.mxu0 0
      %3797 = vmatprep.subr.bf16.mxu0 0
      %3798 = vmatpush2.bf16.xpose.msra.mxu0 0
      %3799 = vmatprep.subr.bf16.mxu0 0
      %3800 = vmatpush2.bf16.xpose.msra.mxu0 0
      %3801 = vmatprep.subr.bf16.mxu0 0
      %3802 = vmatpush2.bf16.xpose.msra.mxu0 0
      %3803 = vmatprep.subr.bf16.mxu0 0
      %3804 = vmatpush2.bf16.xpose.msra.mxu0 0
      %3805 = vmatprep.subr.bf16.mxu0 0
      %3806 = vmatpush2.bf16.xpose.msra.mxu0 0
      %3807 = vmatprep.subr.bf16.mxu0 0
      %3808 = vmatpush2.bf16.xpose.msra.mxu0 0
      %3809 = vmatprep.mubr.bf16.mxu0 0
      %3810 = vmatmul.mubr.bf16.gmra.mxu0 %v3772
      %v3811 = vpop.f32.mrf.mxu0
      %v3812 = vadd.f32 0.0, %v3811
      %v3813 = vpop.f32.mrf.mxu0
      %v3814 = vpop.f32.mrf.mxu0
      %v3815 = vpop.f32.mrf.mxu0
      %3816 = vdwg.mxu0
      %v3817 = vmul.f32 %v3712, 0.35355338
      %v3818 = vmul.f32 %v3762, 0.35355338
      %v3819 = vmul.f32 %v3812, 0.35355338
      %v3820 = vsel %vm508, %v3817, -inf
      %3821 = vmax.xlane.f32.xlu0 %v3820
      %v3822 = vpop.xlane.xlu0 %3821
      %v3823 = vsel %vm508, %v3818, -inf
      %3824 = vmax.xlane.f32.xlu0 %v3823
      %v3825 = vpop.xlane.xlu0 %3824
      %v3826 = vsel %vm508, %v3819, -inf
      %3827 = vmax.xlane.f32.xlu0 %v3826
      %v3828 = vpop.xlane.xlu0 %3827
      %v3829 = vsub.f32 %v3817, %v3822
      %v3830 = vsub.f32 %v3818, %v3825
      %v3831 = vsub.f32 %v3819, %v3828
      %v3832 = vmul.f32 %v3829, 1.442695
      %v3833 = vpow.pop %v3832
      %v3834 = vmul.f32 %v3830, 1.442695
      %v3835 = vpow.pop %v3834
      %v3836 = vmul.f32 %v3831, 1.442695
      %v3837 = vpow.pop %v3836
      %v3838 = vsel %vm508, %v3833, 0.0
      %3839 = vadd.xlane.f32.xlu0 %v3838
      %v3840 = vpop.xlane.xlu0 %3839
      %v3841 = vsel %vm508, %v3835, 0.0
      %3842 = vadd.xlane.f32.xlu0 %v3841
      %v3843 = vpop.xlane.xlu0 %3842
      %v3844 = vsel %vm508, %v3837, 0.0
      %3845 = vadd.xlane.f32.xlu0 %v3844
      %v3846 = vpop.xlane.xlu0 %3845
      %v3847 = vrcp.pop %v3840
      %v3848 = vrcp.pop %v3843
      %v3849 = vrcp.pop %v3846
      %v3850 = vmul.f32 %v3833, %v3847
      %v3851 = vmul.f32 %v3835, %v3848
      %v3852 = vmul.f32 %v3837, %v3849
      %v3853 = vpack.c.bf16 %v3850, %v3850
      %v3854 = vpack.c.bf16 %v3851, %v3851
      %v3855 = vpack.c.bf16 %v3852, %v3852
      %3856 = vrot.lane.b32.xlu0 %v2488, 40
      %v3857 = vpop.permute.xlu0 %3856
      %v3859 = vsel %vm508, %v3853, 0
      %v3862 = vsel %vm697, %v3857, 0
      %3864 = vmatprep.subr.bf16.mxu0 0
      %3865 = vmatpush1.bf16.msra.mxu0 0
      %3866 = vmatprep.subr.bf16.mxu0 0
      %3867 = vmatpush1.bf16.msra.mxu0 0
      %3868 = vmatprep.subr.bf16.mxu0 0
      %3869 = vmatpush1.bf16.msra.mxu0 0
      %3870 = vmatprep.subr.bf16.mxu0 0
      %3871 = vmatpush1.bf16.msra.mxu0 0
      %3872 = vmatprep.subr.bf16.mxu0 0
      %3873 = vmatpush1.bf16.msra.mxu0 0
      %3874 = vmatprep.subr.bf16.mxu0 0
      %3875 = vmatpush1.bf16.msra.mxu0 0
      %3876 = vmatprep.subr.bf16.mxu0 0
      %3877 = vmatpush1.bf16.msra.mxu0 0
      %3878 = vmatprep.subr.bf16.mxu0 0
      %3879 = vmatpush1.bf16.msra.mxu0 %v3862
      %3880 = vmatprep.subr.bf16.mxu0 0
      %3881 = vmatpush2.bf16.msra.mxu0 0
      %3882 = vmatprep.subr.bf16.mxu0 0
      %3883 = vmatpush2.bf16.msra.mxu0 0
      %3884 = vmatprep.subr.bf16.mxu0 0
      %3885 = vmatpush2.bf16.msra.mxu0 0
      %3886 = vmatprep.subr.bf16.mxu0 0
      %3887 = vmatpush2.bf16.msra.mxu0 0
      %3888 = vmatprep.subr.bf16.mxu0 0
      %3889 = vmatpush2.bf16.msra.mxu0 0
      %3890 = vmatprep.subr.bf16.mxu0 0
      %3891 = vmatpush2.bf16.msra.mxu0 0
      %3892 = vmatprep.subr.bf16.mxu0 0
      %3893 = vmatpush2.bf16.msra.mxu0 0
      %3894 = vmatprep.subr.bf16.mxu0 0
      %3895 = vmatpush2.bf16.msra.mxu0 0
      %3896 = vmatprep.mubr.bf16.mxu0 0
      %3897 = vmatmul.mubr.bf16.gmra.mxu0 %v3859
      %v3898 = vpop.f32.mrf.mxu0
      %v3899 = vadd.f32 0.0, %v3898
      %v3900 = vpop.f32.mrf.mxu0
      %v3901 = vpop.f32.mrf.mxu0
      %v3902 = vpop.f32.mrf.mxu0
      %3903 = vdwg.mxu0
      %3904 = vrot.lane.b32.xlu0 %v2489, 40
      %v3905 = vpop.permute.xlu0 %3904
      %v3907 = vsel %vm508, %v3854, 0
      %v3910 = vsel %vm697, %v3905, 0
      %3912 = vmatprep.subr.bf16.mxu0 0
      %3913 = vmatpush1.bf16.msra.mxu0 0
      %3914 = vmatprep.subr.bf16.mxu0 0
      %3915 = vmatpush1.bf16.msra.mxu0 0
      %3916 = vmatprep.subr.bf16.mxu0 0
      %3917 = vmatpush1.bf16.msra.mxu0 0
      %3918 = vmatprep.subr.bf16.mxu0 0
      %3919 = vmatpush1.bf16.msra.mxu0 0
      %3920 = vmatprep.subr.bf16.mxu0 0
      %3921 = vmatpush1.bf16.msra.mxu0 0
      %3922 = vmatprep.subr.bf16.mxu0 0
      %3923 = vmatpush1.bf16.msra.mxu0 0
      %3924 = vmatprep.subr.bf16.mxu0 0
      %3925 = vmatpush1.bf16.msra.mxu0 0
      %3926 = vmatprep.subr.bf16.mxu0 0
      %3927 = vmatpush1.bf16.msra.mxu0 %v3910
      %3928 = vmatprep.subr.bf16.mxu0 0
      %3929 = vmatpush2.bf16.msra.mxu0 0
      %3930 = vmatprep.subr.bf16.mxu0 0
      %3931 = vmatpush2.bf16.msra.mxu0 0
      %3932 = vmatprep.subr.bf16.mxu0 0
      %3933 = vmatpush2.bf16.msra.mxu0 0
      %3934 = vmatprep.subr.bf16.mxu0 0
      %3935 = vmatpush2.bf16.msra.mxu0 0
      %3936 = vmatprep.subr.bf16.mxu0 0
      %3937 = vmatpush2.bf16.msra.mxu0 0
      %3938 = vmatprep.subr.bf16.mxu0 0
      %3939 = vmatpush2.bf16.msra.mxu0 0
      %3940 = vmatprep.subr.bf16.mxu0 0
      %3941 = vmatpush2.bf16.msra.mxu0 0
      %3942 = vmatprep.subr.bf16.mxu0 0
      %3943 = vmatpush2.bf16.msra.mxu0 0
      %3944 = vmatprep.mubr.bf16.mxu0 0
      %3945 = vmatmul.mubr.bf16.gmra.mxu0 %v3907
      %v3946 = vpop.f32.mrf.mxu0
      %v3947 = vadd.f32 0.0, %v3946
      %v3948 = vpop.f32.mrf.mxu0
      %v3949 = vpop.f32.mrf.mxu0
      %v3950 = vpop.f32.mrf.mxu0
      %3951 = vdwg.mxu0
      %3952 = vrot.lane.b32.xlu0 %v2490, 40
      %v3953 = vpop.permute.xlu0 %3952
      %v3955 = vsel %vm508, %v3855, 0
      %v3958 = vsel %vm697, %v3953, 0
      %3960 = vmatprep.subr.bf16.mxu0 0
      %3961 = vmatpush1.bf16.msra.mxu0 0
      %3962 = vmatprep.subr.bf16.mxu0 0
      %3963 = vmatpush1.bf16.msra.mxu0 0
      %3964 = vmatprep.subr.bf16.mxu0 0
      %3965 = vmatpush1.bf16.msra.mxu0 0
      %3966 = vmatprep.subr.bf16.mxu0 0
      %3967 = vmatpush1.bf16.msra.mxu0 0
      %3968 = vmatprep.subr.bf16.mxu0 0
      %3969 = vmatpush1.bf16.msra.mxu0 0
      %3970 = vmatprep.subr.bf16.mxu0 0
      %3971 = vmatpush1.bf16.msra.mxu0 0
      %3972 = vmatprep.subr.bf16.mxu0 0
      %3973 = vmatpush1.bf16.msra.mxu0 0
      %3974 = vmatprep.subr.bf16.mxu0 0
      %3975 = vmatpush1.bf16.msra.mxu0 %v3958
      %3976 = vmatprep.subr.bf16.mxu0 0
      %3977 = vmatpush2.bf16.msra.mxu0 0
      %3978 = vmatprep.subr.bf16.mxu0 0
      %3979 = vmatpush2.bf16.msra.mxu0 0
      %3980 = vmatprep.subr.bf16.mxu0 0
      %3981 = vmatpush2.bf16.msra.mxu0 0
      %3982 = vmatprep.subr.bf16.mxu0 0
      %3983 = vmatpush2.bf16.msra.mxu0 0
      %3984 = vmatprep.subr.bf16.mxu0 0
      %3985 = vmatpush2.bf16.msra.mxu0 0
      %3986 = vmatprep.subr.bf16.mxu0 0
      %3987 = vmatpush2.bf16.msra.mxu0 0
      %3988 = vmatprep.subr.bf16.mxu0 0
      %3989 = vmatpush2.bf16.msra.mxu0 0
      %3990 = vmatprep.subr.bf16.mxu0 0
      %3991 = vmatpush2.bf16.msra.mxu0 0
      %3992 = vmatprep.mubr.bf16.mxu0 0
      %3993 = vmatmul.mubr.bf16.gmra.mxu0 %v3955
      %v3994 = vpop.f32.mrf.mxu0
      %v3995 = vadd.f32 0.0, %v3994
      %v3996 = vpop.f32.mrf.mxu0
      %v3997 = vpop.f32.mrf.mxu0
      %v3998 = vpop.f32.mrf.mxu0
      %3999 = vdwg.mxu0
      %v4000 = vpack.c.bf16 %v3947, %v3899
      %v4001 = vpack.c.bf16 %v3995, %v3995
      %v4003 = vsel %vm508, %v4000, 0
      %v4006 = vsel %vm508, %v4001, 0
      %v4009 = vsel %vm697, %v2393, 0
      %4011 = vmatprep.subr.bf16.mxu0 0
      %4012 = vmatpush1.bf16.msra.mxu0 0
      %4013 = vmatprep.subr.bf16.mxu0 0
      %4014 = vmatpush1.bf16.msra.mxu0 0
      %4015 = vmatprep.subr.bf16.mxu0 0
      %4016 = vmatpush1.bf16.msra.mxu0 0
      %4017 = vmatprep.subr.bf16.mxu0 0
      %4018 = vmatpush1.bf16.msra.mxu0 0
      %4019 = vmatprep.subr.bf16.mxu0 0
      %4020 = vmatpush1.bf16.msra.mxu0 0
      %4021 = vmatprep.subr.bf16.mxu0 0
      %4022 = vmatpush1.bf16.msra.mxu0 0
      %4023 = vmatprep.subr.bf16.mxu0 0
      %4024 = vmatpush1.bf16.msra.mxu0 0
      %4025 = vmatprep.subr.bf16.mxu0 0
      %4026 = vmatpush1.bf16.msra.mxu0 %v4009
      %4027 = vmatprep.subr.bf16.mxu0 0
      %4028 = vmatpush2.bf16.msra.mxu0 0
      %4029 = vmatprep.subr.bf16.mxu0 0
      %4030 = vmatpush2.bf16.msra.mxu0 0
      %4031 = vmatprep.subr.bf16.mxu0 0
      %4032 = vmatpush2.bf16.msra.mxu0 0
      %4033 = vmatprep.subr.bf16.mxu0 0
      %4034 = vmatpush2.bf16.msra.mxu0 0
      %4035 = vmatprep.subr.bf16.mxu0 0
      %4036 = vmatpush2.bf16.msra.mxu0 0
      %4037 = vmatprep.subr.bf16.mxu0 0
      %4038 = vmatpush2.bf16.msra.mxu0 0
      %4039 = vmatprep.subr.bf16.mxu0 0
      %4040 = vmatpush2.bf16.msra.mxu0 0
      %4041 = vmatprep.subr.bf16.mxu0 0
      %4042 = vmatpush2.bf16.msra.mxu0 0
      %4043 = vmatprep.mubr.bf16.mxu0 0
      %4044 = vmatmul.mubr.bf16.gmra.mxu0 %v4003
      %v4045 = vpop.f32.mrf.mxu0
      %v4046 = vadd.f32 0.0, %v4045
      %v4047 = vpop.f32.mrf.mxu0
      %v4048 = vpop.f32.mrf.mxu0
      %v4049 = vadd.f32 0.0, %v4048
      %v4050 = vpop.f32.mrf.mxu0
      %4051 = vmatprep.mubr.bf16.mxu0 0
      %4052 = vmatmul.mubr.bf16.gmra.mxu0 %v4006
      %v4053 = vpop.f32.mrf.mxu0
      %v4054 = vadd.f32 0.0, %v4053
      %v4055 = vpop.f32.mrf.mxu0
      %v4056 = vpop.f32.mrf.mxu0
      %v4057 = vpop.f32.mrf.mxu0
      %4058 = vdwg.mxu0
      %v4059 = vadd.f32 %v3664, %v4046
      %v4060 = vadd.f32 %v3665, %v4049
      %v4061 = vadd.f32 %v3666, %v4054
      %v4062 = vlaneseq
      %v4063 = vshrl.u32 %v4062, 7
      %v4064 = vsub.s32 0, %v4063
      %v4065 = vrot.slane %v2411, %v4064
      %v4066 = vadd.f32 %v4059, %v4065
      %v4067 = vadd.f32 %v4060, %v4065
      %v4068 = vadd.f32 %v4061, %v4065
      %v4069 = vadd.f32 %v2381, %v4066
      %v4070 = vadd.f32 %v2382, %v4067
      %v4071 = vadd.f32 %v2383, %v4068
      %v4072 = vsel %vm447, %v4069, 0.0
      %4073 = vadd.xlane.f32.xlu0 %v4072
      %v4074 = vpop.xlane.xlu0 %4073
      %v4075 = vsel %vm447, %v4070, 0.0
      %4076 = vadd.xlane.f32.xlu0 %v4075
      %v4077 = vpop.xlane.xlu0 %4076
      %v4078 = vsel %vm447, %v4071, 0.0
      %4079 = vadd.xlane.f32.xlu0 %v4078
      %v4080 = vpop.xlane.xlu0 %4079
      %v4081 = vmul.f32 %v4074, %v2097
      %v4082 = vmul.f32 %v4077, %v2097
      %v4083 = vmul.f32 %v4080, %v2097
      %v4084 = vsub.f32 %v4069, %v4081
      %v4085 = vsub.f32 %v4070, %v4082
      %v4086 = vsub.f32 %v4071, %v4083
      %v4087 = vmul.f32 %v4084, %v4084
      %v4088 = vmul.f32 %v4085, %v4085
      %v4089 = vmul.f32 %v4086, %v4086
      %v4090 = vsel %vm447, %v4087, 0.0
      %4091 = vadd.xlane.f32.xlu0 %v4090
      %v4092 = vpop.xlane.xlu0 %4091
      %v4093 = vsel %vm447, %v4088, 0.0
      %4094 = vadd.xlane.f32.xlu0 %v4093
      %v4095 = vpop.xlane.xlu0 %4094
      %v4096 = vsel %vm447, %v4089, 0.0
      %4097 = vadd.xlane.f32.xlu0 %v4096
      %v4098 = vpop.xlane.xlu0 %4097
      %v4099 = vmul.f32 %v4092, %v2097
      %v4100 = vmul.f32 %v4095, %v2097
      %v4101 = vmul.f32 %v4098, %v2097
      %v4102 = vadd.f32 %v4099, 1e-12
      %v4103 = vadd.f32 %v4100, 1e-12
      %v4104 = vadd.f32 %v4101, 1e-12
      %v4105 = vrsqrt.pop %v4102
      %v4106 = vrsqrt.pop %v4103
      %v4107 = vrsqrt.pop %v4104
      %v4108 = vmul.f32 %v4084, %v4105
      %v4109 = vmul.f32 %v4085, %v4106
      %v4110 = vmul.f32 %v4086, %v4107
      %v4111 = vlaneseq
      %v4112 = vshrl.u32 %v4111, 7
      %v4113 = vsub.s32 1, %v4112
      %v4114 = vrot.slane %v2411, %v4113
      %v4115 = vmul.f32 %v4108, %v4114
      %v4116 = vmul.f32 %v4109, %v4114
      %v4117 = vmul.f32 %v4110, %v4114
      %v4118 = vlaneseq
      %v4119 = vshrl.u32 %v4118, 7
      %v4120 = vsub.s32 2, %v4119
      %v4121 = vrot.slane %v2411, %v4120
      %v4122 = vadd.f32 %v4115, %v4121
      %v4123 = vadd.f32 %v4116, %v4121
      %v4124 = vadd.f32 %v4117, %v4121
      %v4125 = vpack.c.bf16 %v4123, %v4122
      %v4126 = vpack.c.bf16 %v4124, %v4124
      %v4128 = vlaneseq
      %v4129 = vshrl.u32 %v4128, 7
      %v4130 = vsub.s32 0, %v4129
      %v4131 = vrot.slane %v2413, %v4130
      %v4137 = vunpack.c.l.b16 %v2395
      %v4138 = vunpack.c.l.b16 %v2396
      %v4139 = vunpack.c.l.b16 %v2397
      %v4140 = vunpack.c.l.b16 %v2398
      %v4141 = vpack.c.b16 %v4138, %v4137
      %v4142 = vpack.c.b16 %v4140, %v4139
      %v4146 = vsel %vm447, %v4125, 0
      %v4149 = vsel %vm447, %v4126, 0
      %4151 = vmatprep.subr.bf16.mxu0 0
      %4152 = vmatpush1.bf16.msra.mxu0 0
      %4153 = vmatprep.subr.bf16.mxu0 0
      %4154 = vmatpush1.bf16.msra.mxu0 0
      %4155 = vmatprep.subr.bf16.mxu0 0
      %4156 = vmatpush1.bf16.msra.mxu0 0
      %4157 = vmatprep.subr.bf16.mxu0 0
      %4158 = vmatpush1.bf16.msra.mxu0 0
      %4159 = vmatprep.subr.bf16.mxu0 0
      %4160 = vmatpush1.bf16.msra.mxu0 0
      %4161 = vmatprep.subr.bf16.mxu0 0
      %4162 = vmatpush1.bf16.msra.mxu0 0
      %4163 = vmatprep.subr.bf16.mxu0 0
      %4164 = vmatpush1.bf16.msra.mxu0 %v4142
      %4165 = vmatprep.subr.bf16.mxu0 0
      %4166 = vmatpush1.bf16.msra.mxu0 %v4141
      %4167 = vmatprep.subr.bf16.mxu0 0
      %4168 = vmatpush2.bf16.msra.mxu0 0
      %4169 = vmatprep.subr.bf16.mxu0 0
      %4170 = vmatpush2.bf16.msra.mxu0 0
      %4171 = vmatprep.subr.bf16.mxu0 0
      %4172 = vmatpush2.bf16.msra.mxu0 0
      %4173 = vmatprep.subr.bf16.mxu0 0
      %4174 = vmatpush2.bf16.msra.mxu0 0
      %4175 = vmatprep.subr.bf16.mxu0 0
      %4176 = vmatpush2.bf16.msra.mxu0 0
      %4177 = vmatprep.subr.bf16.mxu0 0
      %4178 = vmatpush2.bf16.msra.mxu0 0
      %4179 = vmatprep.subr.bf16.mxu0 0
      %4180 = vmatpush2.bf16.msra.mxu0 0
      %4181 = vmatprep.subr.bf16.mxu0 0
      %4182 = vmatpush2.bf16.msra.mxu0 0
      %4183 = vmatprep.mubr.bf16.mxu0 0
      %4184 = vmatmul.mubr.bf16.gmra.mxu0 %v4146
      %v4185 = vpop.f32.mrf.mxu0
      %v4186 = vadd.f32 %v4131, %v4185
      %v4187 = vpop.f32.mrf.mxu0
      %v4188 = vpop.f32.mrf.mxu0
      %v4189 = vadd.f32 %v4131, %v4188
      %v4190 = vpop.f32.mrf.mxu0
      %4191 = vmatprep.mubr.bf16.mxu0 0
      %4192 = vmatmul.mubr.bf16.gmra.mxu0 %v4149
      %v4193 = vpop.f32.mrf.mxu0
      %v4194 = vadd.f32 %v4131, %v4193
      %v4195 = vpop.f32.mrf.mxu0
      %v4196 = vpop.f32.mrf.mxu0
      %v4197 = vpop.f32.mrf.mxu0
      %4198 = vdwg.mxu0
      %v4199 = vmul.f32 %v4186, %v4186
      %v4200 = vmul.f32 %v4189, %v4189
      %v4201 = vmul.f32 %v4194, %v4194
      %v4202 = vmul.f32 %v4186, %v4199
      %v4203 = vmul.f32 %v4189, %v4200
      %v4204 = vmul.f32 %v4194, %v4201
      %v4205 = vmul.f32 %v4202, 0.044715
      %v4206 = vmul.f32 %v4203, 0.044715
      %v4207 = vmul.f32 %v4204, 0.044715
      %v4208 = vadd.f32 %v4186, %v4205
      %v4209 = vadd.f32 %v4189, %v4206
      %v4210 = vadd.f32 %v4194, %v4207
      %v4211 = vmul.f32 %v4208, 0.7978846
      %v4212 = vmul.f32 %v4209, 0.7978846
      %v4213 = vmul.f32 %v4210, 0.7978846
      %v4214 = vtanh.pop %v4211
      %v4215 = vtanh.pop %v4212
      %v4216 = vtanh.pop %v4213
      %v4217 = vadd.f32 %v4214, 1.0
      %v4218 = vadd.f32 %v4215, 1.0
      %v4219 = vadd.f32 %v4216, 1.0
      %v4220 = vmul.f32 %v4217, 0.5
      %v4221 = vmul.f32 %v4218, 0.5
      %v4222 = vmul.f32 %v4219, 0.5
      %v4223 = vmul.f32 %v4186, %v4220
      %v4224 = vmul.f32 %v4189, %v4221
      %v4225 = vmul.f32 %v4194, %v4222
      %v4226 = vpack.c.bf16 %v4224, %v4223
      %v4227 = vpack.c.bf16 %v4225, %v4225
      %v4228 = vlaneseq
      %v4229 = vshrl.u32 %v4228, 7
      %v4230 = vsub.s32 3, %v4229
      %v4231 = vrot.slane %v2411, %v4230
      %v4240 = vunpack.c.l.b16 %v2400
      %v4241 = vunpack.c.l.b16 %v2401
      %v4242 = vunpack.c.l.b16 %v2402
      %v4243 = vunpack.c.l.b16 %v2403
      %v4244 = vunpack.c.l.b16 %v2404
      %v4245 = vunpack.c.l.b16 %v2405
      %v4246 = vunpack.c.l.b16 %v2406
      %v4247 = vunpack.c.l.b16 %v2407
      %v4248 = vpack.c.b16 %v4241, %v4240
      %v4249 = vpack.c.b16 %v4243, %v4242
      %v4250 = vpack.c.b16 %v4245, %v4244
      %v4251 = vpack.c.b16 %v4247, %v4246
      %v4257 = vsel %vm2273, %v4226, 0
      %v4260 = vsel %vm2273, %v4227, 0
      %4262 = vmatprep.subr.bf16.mxu0 0
      %4263 = vmatpush1.bf16.msra.mxu0 0
      %4264 = vmatprep.subr.bf16.mxu0 0
      %4265 = vmatpush1.bf16.msra.mxu0 0
      %4266 = vmatprep.subr.bf16.mxu0 0
      %4267 = vmatpush1.bf16.msra.mxu0 0
      %4268 = vmatprep.subr.bf16.mxu0 0
      %4269 = vmatpush1.bf16.msra.mxu0 0
      %4270 = vmatprep.subr.bf16.mxu0 0
      %4271 = vmatpush1.bf16.msra.mxu0 %v4251
      %4272 = vmatprep.subr.bf16.mxu0 0
      %4273 = vmatpush1.bf16.msra.mxu0 %v4250
      %4274 = vmatprep.subr.bf16.mxu0 0
      %4275 = vmatpush1.bf16.msra.mxu0 %v4249
      %4276 = vmatprep.subr.bf16.mxu0 0
      %4277 = vmatpush1.bf16.msra.mxu0 %v4248
      %4278 = vmatprep.subr.bf16.mxu0 0
      %4279 = vmatpush2.bf16.msra.mxu0 0
      %4280 = vmatprep.subr.bf16.mxu0 0
      %4281 = vmatpush2.bf16.msra.mxu0 0
      %4282 = vmatprep.subr.bf16.mxu0 0
      %4283 = vmatpush2.bf16.msra.mxu0 0
      %4284 = vmatprep.subr.bf16.mxu0 0
      %4285 = vmatpush2.bf16.msra.mxu0 0
      %4286 = vmatprep.subr.bf16.mxu0 0
      %4287 = vmatpush2.bf16.msra.mxu0 0
      %4288 = vmatprep.subr.bf16.mxu0 0
      %4289 = vmatpush2.bf16.msra.mxu0 0
      %4290 = vmatprep.subr.bf16.mxu0 0
      %4291 = vmatpush2.bf16.msra.mxu0 0
      %4292 = vmatprep.subr.bf16.mxu0 0
      %4293 = vmatpush2.bf16.msra.mxu0 0
      %4294 = vmatprep.mubr.bf16.mxu0 0
      %4295 = vmatmul.mubr.bf16.gmra.mxu0 %v4257
      %v4296 = vpop.f32.mrf.mxu0
      %v4297 = vadd.f32 %v4231, %v4296
      %v4298 = vpop.f32.mrf.mxu0
      %v4299 = vpop.f32.mrf.mxu0
      %v4300 = vadd.f32 %v4231, %v4299
      %v4301 = vpop.f32.mrf.mxu0
      %4302 = vmatprep.mubr.bf16.mxu0 0
      %4303 = vmatmul.mubr.bf16.gmra.mxu0 %v4260
      %v4304 = vpop.f32.mrf.mxu0
      %v4305 = vadd.f32 %v4231, %v4304
      %v4306 = vpop.f32.mrf.mxu0
      %v4307 = vpop.f32.mrf.mxu0
      %v4308 = vpop.f32.mrf.mxu0
      %4309 = vdwg.mxu0
      %v4310 = vadd.f32 %v4122, %v4297
      %v4311 = vadd.f32 %v4123, %v4300
      %v4312 = vadd.f32 %v4124, %v4305
      %v4313 = vsel %vm447, %v4310, 0.0
      %4314 = vadd.xlane.f32.xlu0 %v4313
      %v4315 = vpop.xlane.xlu0 %4314
      %v4316 = vsel %vm447, %v4311, 0.0
      %4317 = vadd.xlane.f32.xlu0 %v4316
      %v4318 = vpop.xlane.xlu0 %4317
      %v4319 = vsel %vm447, %v4312, 0.0
      %4320 = vadd.xlane.f32.xlu0 %v4319
      %v4321 = vpop.xlane.xlu0 %4320
      %v4322 = vmul.f32 %v4315, %v2097
      %v4323 = vmul.f32 %v4318, %v2097
      %v4324 = vmul.f32 %v4321, %v2097
      %v4325 = vsub.f32 %v4310, %v4322
      %v4326 = vsub.f32 %v4311, %v4323
      %v4327 = vsub.f32 %v4312, %v4324
      %v4328 = vmul.f32 %v4325, %v4325
      %v4329 = vmul.f32 %v4326, %v4326
      %v4330 = vmul.f32 %v4327, %v4327
      %v4331 = vsel %vm447, %v4328, 0.0
      %4332 = vadd.xlane.f32.xlu0 %v4331
      %v4333 = vpop.xlane.xlu0 %4332
      %v4334 = vsel %vm447, %v4329, 0.0
      %4335 = vadd.xlane.f32.xlu0 %v4334
      %v4336 = vpop.xlane.xlu0 %4335
      %v4337 = vsel %vm447, %v4330, 0.0
      %4338 = vadd.xlane.f32.xlu0 %v4337
      %v4339 = vpop.xlane.xlu0 %4338
      %v4340 = vmul.f32 %v4333, %v2097
      %v4341 = vmul.f32 %v4336, %v2097
      %v4342 = vmul.f32 %v4339, %v2097
      %v4343 = vadd.f32 %v4340, 1e-12
      %v4344 = vadd.f32 %v4341, 1e-12
      %v4345 = vadd.f32 %v4342, 1e-12
      %v4346 = vrsqrt.pop %v4343
      %v4347 = vrsqrt.pop %v4344
      %v4348 = vrsqrt.pop %v4345
      %v4349 = vmul.f32 %v4325, %v4346
      %v4350 = vmul.f32 %v4326, %v4347
      %v4351 = vmul.f32 %v4327, %v4348
      %v4352 = vlaneseq
      %v4353 = vshrl.u32 %v4352, 7
      %v4354 = vsub.s32 4, %v4353
      %v4355 = vrot.slane %v2411, %v4354
      %v4356 = vmul.f32 %v4349, %v4355
      %v4357 = vmul.f32 %v4350, %v4355
      %v4358 = vmul.f32 %v4351, %v4355
      %v4359 = vlaneseq
      %v4360 = vshrl.u32 %v4359, 7
      %v4361 = vsub.s32 5, %v4360
      %v4362 = vrot.slane %v2411, %v4361
      %v4363 = vadd.f32 %v4356, %v4362
      %v4364 = vadd.f32 %v4357, %v4362
      %v4365 = vadd.f32 %v4358, %v4362
      %v4366 = vpack.c.bf16 %v4364, %v4363
      %v4367 = vpack.c.bf16 %v4365, %v4365
      %v4368 = vld [vmem:[%s8] sm:$0xf]
      %v4369 = vld [vmem:[%s8 + $0x4] sm:$0xf]
      %v4370 = vld [vmem:[%s8 + $0x8] sm:$0xf]
      %v4371 = vld [vmem:[%s8 + $0xc] sm:$0xf]
      %v4372 = vld [vmem:[%s9] sm:$0x1]
      %v4374 = vlaneseq
      %v4375 = vshrl.u32 %v4374, 7
      %v4376 = vsub.s32 0, %v4375
      %v4377 = vrot.slane %v4372, %v4376
      %v4383 = vunpack.c.l.b16 %v4368
      %v4384 = vunpack.c.l.b16 %v4369
      %v4385 = vunpack.c.l.b16 %v4370
      %v4386 = vunpack.c.l.b16 %v4371
      %v4387 = vpack.c.b16 %v4384, %v4383
      %v4388 = vpack.c.b16 %v4386, %v4385
      %v4392 = vsel %vm447, %v4366, 0
      %v4395 = vsel %vm447, %v4367, 0
      %4397 = vmatprep.subr.bf16.mxu0 0
      %4398 = vmatpush1.bf16.msra.mxu0 0
      %4399 = vmatprep.subr.bf16.mxu0 0
      %4400 = vmatpush1.bf16.msra.mxu0 0
      %4401 = vmatprep.subr.bf16.mxu0 0
      %4402 = vmatpush1.bf16.msra.mxu0 0
      %4403 = vmatprep.subr.bf16.mxu0 0
      %4404 = vmatpush1.bf16.msra.mxu0 0
      %4405 = vmatprep.subr.bf16.mxu0 0
      %4406 = vmatpush1.bf16.msra.mxu0 0
      %4407 = vmatprep.subr.bf16.mxu0 0
      %4408 = vmatpush1.bf16.msra.mxu0 0
      %4409 = vmatprep.subr.bf16.mxu0 0
      %4410 = vmatpush1.bf16.msra.mxu0 %v4388
      %4411 = vmatprep.subr.bf16.mxu0 0
      %4412 = vmatpush1.bf16.msra.mxu0 %v4387
      %4413 = vmatprep.subr.bf16.mxu0 0
      %4414 = vmatpush2.bf16.msra.mxu0 0
      %4415 = vmatprep.subr.bf16.mxu0 0
      %4416 = vmatpush2.bf16.msra.mxu0 0
      %4417 = vmatprep.subr.bf16.mxu0 0
      %4418 = vmatpush2.bf16.msra.mxu0 0
      %4419 = vmatprep.subr.bf16.mxu0 0
      %4420 = vmatpush2.bf16.msra.mxu0 0
      %4421 = vmatprep.subr.bf16.mxu0 0
      %4422 = vmatpush2.bf16.msra.mxu0 0
      %4423 = vmatprep.subr.bf16.mxu0 0
      %4424 = vmatpush2.bf16.msra.mxu0 0
      %4425 = vmatprep.subr.bf16.mxu0 0
      %4426 = vmatpush2.bf16.msra.mxu0 0
      %4427 = vmatprep.subr.bf16.mxu0 0
      %4428 = vmatpush2.bf16.msra.mxu0 0
      %4429 = vmatprep.mubr.bf16.mxu0 0
      %4430 = vmatmul.mubr.bf16.gmra.mxu0 %v4392
      %v4431 = vpop.f32.mrf.mxu0
      %v4432 = vadd.f32 %v4377, %v4431
      %v4433 = vpop.f32.mrf.mxu0
      %v4434 = vpop.f32.mrf.mxu0
      %v4435 = vadd.f32 %v4377, %v4434
      %v4436 = vpop.f32.mrf.mxu0
      %4437 = vmatprep.mubr.bf16.mxu0 0
      %4438 = vmatmul.mubr.bf16.gmra.mxu0 %v4395
      %v4439 = vpop.f32.mrf.mxu0
      %v4440 = vadd.f32 %v4377, %v4439
      %v4441 = vpop.f32.mrf.mxu0
      %v4442 = vpop.f32.mrf.mxu0
      %v4443 = vpop.f32.mrf.mxu0
      %4444 = vdwg.mxu0
      %vm4445 = vcmask 7168
      %v4446 = vsel %vm4445, %v4432, -inf
      %v4447 = vrot.slane %v4446, 4
      %v4448 = vmax.f32 %v4446, %v4447
      %v4449 = vrot.slane %v4448, 2
      %v4450 = vmax.f32 %v4448, %v4449
      %v4451 = vrot.slane %v4450, 1
      %v4452 = vmax.f32 %v4450, %v4451
      %v4453 = vsel %vm4445, %v4435, -inf
      %v4454 = vrot.slane %v4453, 4
      %v4455 = vmax.f32 %v4453, %v4454
      %v4456 = vrot.slane %v4455, 2
      %v4457 = vmax.f32 %v4455, %v4456
      %v4458 = vrot.slane %v4457, 1
      %v4459 = vmax.f32 %v4457, %v4458
      %v4460 = vsel %vm4445, %v4440, -inf
      %v4461 = vrot.slane %v4460, 4
      %v4462 = vmax.f32 %v4460, %v4461
      %v4463 = vrot.slane %v4462, 2
      %v4464 = vmax.f32 %v4462, %v4463
      %v4465 = vrot.slane %v4464, 1
      %v4466 = vmax.f32 %v4464, %v4465
      %v4467 = vsub.f32 %v4432, %v4452
      %v4468 = vsub.f32 %v4435, %v4459
      %v4469 = vsub.f32 %v4440, %v4466
      %v4470 = vmul.f32 %v4467, 1.442695
      %v4471 = vpow.pop %v4470
      %v4472 = vmul.f32 %v4468, 1.442695
      %v4473 = vpow.pop %v4472
      %v4474 = vmul.f32 %v4469, 1.442695
      %v4475 = vpow.pop %v4474
      %v4476 = vsel %vm4445, %v4471, 0.0
      %v4477 = vrot.slane %v4476, 4
      %v4478 = vadd.f32 %v4476, %v4477
      %v4479 = vrot.slane %v4478, 2
      %v4480 = vadd.f32 %v4478, %v4479
      %v4481 = vrot.slane %v4480, 1
      %v4482 = vadd.f32 %v4480, %v4481
      %v4483 = vsel %vm4445, %v4473, 0.0
      %v4484 = vrot.slane %v4483, 4
      %v4485 = vadd.f32 %v4483, %v4484
      %v4486 = vrot.slane %v4485, 2
      %v4487 = vadd.f32 %v4485, %v4486
      %v4488 = vrot.slane %v4487, 1
      %v4489 = vadd.f32 %v4487, %v4488
      %v4490 = vsel %vm4445, %v4475, 0.0
      %v4491 = vrot.slane %v4490, 4
      %v4492 = vadd.f32 %v4490, %v4491
      %v4493 = vrot.slane %v4492, 2
      %v4494 = vadd.f32 %v4492, %v4493
      %v4495 = vrot.slane %v4494, 1
      %v4496 = vadd.f32 %v4494, %v4495
      %v4497 = vrcp.pop %v4482
      %v4498 = vmul.f32 %v4471, %v4497
      %v4499 = vrcp.pop %v4489
      %v4500 = vmul.f32 %v4473, %v4499
      %v4501 = vrcp.pop %v4496
      %v4502 = vmul.f32 %v4475, %v4501
      %vm4503 = vcmask 15368
      %v4504 = vsel %vm4503, %v4432, -inf
      %v4505 = vrot.slane %v4504, 4
      %v4506 = vmax.f32 %v4504, %v4505
      %v4507 = vrot.slane %v4506, 2
      %v4508 = vmax.f32 %v4506, %v4507
      %v4509 = vrot.slane %v4508, 1
      %v4510 = vmax.f32 %v4508, %v4509
      %v4511 = vsel %vm4503, %v4435, -inf
      %v4512 = vrot.slane %v4511, 4
      %v4513 = vmax.f32 %v4511, %v4512
      %v4514 = vrot.slane %v4513, 2
      %v4515 = vmax.f32 %v4513, %v4514
      %v4516 = vrot.slane %v4515, 1
      %v4517 = vmax.f32 %v4515, %v4516
      %v4518 = vsel %vm4503, %v4440, -inf
      %v4519 = vrot.slane %v4518, 4
      %v4520 = vmax.f32 %v4518, %v4519
      %v4521 = vrot.slane %v4520, 2
      %v4522 = vmax.f32 %v4520, %v4521
      %v4523 = vrot.slane %v4522, 1
      %v4524 = vmax.f32 %v4522, %v4523
      %v4525 = vsub.f32 %v4432, %v4510
      %v4526 = vsub.f32 %v4435, %v4517
      %v4527 = vsub.f32 %v4440, %v4524
      %v4528 = vmul.f32 %v4525, 1.442695
      %v4529 = vpow.pop %v4528
      %v4530 = vmul.f32 %v4526, 1.442695
      %v4531 = vpow.pop %v4530
      %v4532 = vmul.f32 %v4527, 1.442695
      %v4533 = vpow.pop %v4532
      %v4534 = vsel %vm4503, %v4529, 0.0
      %v4535 = vrot.slane %v4534, 4
      %v4536 = vadd.f32 %v4534, %v4535
      %v4537 = vrot.slane %v4536, 2
      %v4538 = vadd.f32 %v4536, %v4537
      %v4539 = vrot.slane %v4538, 1
      %v4540 = vadd.f32 %v4538, %v4539
      %v4541 = vsel %vm4503, %v4531, 0.0
      %v4542 = vrot.slane %v4541, 4
      %v4543 = vadd.f32 %v4541, %v4542
      %v4544 = vrot.slane %v4543, 2
      %v4545 = vadd.f32 %v4543, %v4544
      %v4546 = vrot.slane %v4545, 1
      %v4547 = vadd.f32 %v4545, %v4546
      %v4548 = vsel %vm4503, %v4533, 0.0
      %v4549 = vrot.slane %v4548, 4
      %v4550 = vadd.f32 %v4548, %v4549
      %v4551 = vrot.slane %v4550, 2
      %v4552 = vadd.f32 %v4550, %v4551
      %v4553 = vrot.slane %v4552, 1
      %v4554 = vadd.f32 %v4552, %v4553
      %v4555 = vrcp.pop %v4540
      %v4556 = vmul.f32 %v4529, %v4555
      %v4557 = vrcp.pop %v4547
      %v4558 = vmul.f32 %v4531, %v4557
      %v4559 = vrcp.pop %v4554
      %v4560 = vmul.f32 %v4533, %v4559
      %4562 = vrot.lane.b32.xlu0 %v4556, 127
      %v4563 = vpop.permute.xlu0 %4562
      %v4565 = vsel %vm4445, %v4498, 0
      %v4567 = vsel %vm4445, %v4563, 0
      %4569 = vmatprep.subr.mxu0 0.0
      %4570 = vmatpush1.xpose.msra.mxu0 0.0
      %4571 = vmatprep.subr.mxu0 0.0
      %4572 = vmatpush1.xpose.msra.mxu0 0.0
      %4573 = vmatprep.subr.mxu0 0.0
      %4574 = vmatpush1.xpose.msra.mxu0 0.0
      %4575 = vmatprep.subr.mxu0 0.0
      %4576 = vmatpush1.xpose.msra.mxu0 0.0
      %4577 = vmatprep.subr.mxu0 0.0
      %4578 = vmatpush1.xpose.msra.mxu0 0.0
      %4579 = vmatprep.subr.mxu0 0.0
      %4580 = vmatpush1.xpose.msra.mxu0 0.0
      %4581 = vmatprep.subr.mxu0 0.0
      %4582 = vmatpush1.xpose.msra.mxu0 0.0
      %4583 = vmatprep.subr.mxu0 0.0
      %4584 = vmatpush1.xpose.msra.mxu0 0.0
      %4585 = vmatprep.subr.mxu0 0.0
      %4586 = vmatpush1.xpose.msra.mxu0 0.0
      %4587 = vmatprep.subr.mxu0 0.0
      %4588 = vmatpush1.xpose.msra.mxu0 0.0
      %4589 = vmatprep.subr.mxu0 0.0
      %4590 = vmatpush1.xpose.msra.mxu0 0.0
      %4591 = vmatprep.subr.mxu0 0.0
      %4592 = vmatpush1.xpose.msra.mxu0 0.0
      %4593 = vmatprep.subr.mxu0 0.0
      %4594 = vmatpush1.xpose.msra.mxu0 0.0
      %4595 = vmatprep.subr.mxu0 0.0
      %4596 = vmatpush1.xpose.msra.mxu0 0.0
      %4597 = vmatprep.subr.mxu0 0.0
      %4598 = vmatpush1.xpose.msra.mxu0 0.0
      %4599 = vmatprep.subr.mxu0 0.0
      %4600 = vmatpush1.xpose.msra.mxu0 %v4567
      %4601 = vmatprep.subr.mxu0 0.0
      %4602 = vmatpush2.xpose.msra.mxu0 0.0
      %4603 = vmatprep.subr.mxu0 0.0
      %4604 = vmatpush2.xpose.msra.mxu0 0.0
      %4605 = vmatprep.subr.mxu0 0.0
      %4606 = vmatpush2.xpose.msra.mxu0 0.0
      %4607 = vmatprep.subr.mxu0 0.0
      %4608 = vmatpush2.xpose.msra.mxu0 0.0
      %4609 = vmatprep.subr.mxu0 0.0
      %4610 = vmatpush2.xpose.msra.mxu0 0.0
      %4611 = vmatprep.subr.mxu0 0.0
      %4612 = vmatpush2.xpose.msra.mxu0 0.0
      %4613 = vmatprep.subr.mxu0 0.0
      %4614 = vmatpush2.xpose.msra.mxu0 0.0
      %4615 = vmatprep.subr.mxu0 0.0
      %4616 = vmatpush2.xpose.msra.mxu0 0.0
      %4617 = vmatprep.subr.mxu0 0.0
      %4618 = vmatpush2.xpose.msra.mxu0 0.0
      %4619 = vmatprep.subr.mxu0 0.0
      %4620 = vmatpush2.xpose.msra.mxu0 0.0
      %4621 = vmatprep.subr.mxu0 0.0
      %4622 = vmatpush2.xpose.msra.mxu0 0.0
      %4623 = vmatprep.subr.mxu0 0.0
      %4624 = vmatpush2.xpose.msra.mxu0 0.0
      %4625 = vmatprep.subr.mxu0 0.0
      %4626 = vmatpush2.xpose.msra.mxu0 0.0
      %4627 = vmatprep.subr.mxu0 0.0
      %4628 = vmatpush2.xpose.msra.mxu0 0.0
      %4629 = vmatprep.subr.mxu0 0.0
      %4630 = vmatpush2.xpose.msra.mxu0 0.0
      %4631 = vmatprep.subr.mxu0 0.0
      %4632 = vmatpush2.xpose.msra.mxu0 0.0
      %4633 = vmatprep.mubr.f32.mxu0 0.0
      %4634 = vmatmul.mubr.f32.gmra.mxu0 %v4565
      %v4635 = vpop.f32.mrf.mxu0
      %v4636 = vadd.f32 0.0, %v4635
      %v4637 = vpop.f32.mrf.mxu0
      %4638 = vdwg.mxu0
      %4640 = vrot.lane.b32.xlu0 %v4558, 127
      %v4641 = vpop.permute.xlu0 %4640
      %v4643 = vsel %vm4445, %v4500, 0
      %v4645 = vsel %vm4445, %v4641, 0
      %4647 = vmatprep.subr.mxu0 0.0
      %4648 = vmatpush1.xpose.msra.mxu0 0.0
      %4649 = vmatprep.subr.mxu0 0.0
      %4650 = vmatpush1.xpose.msra.mxu0 0.0
      %4651 = vmatprep.subr.mxu0 0.0
      %4652 = vmatpush1.xpose.msra.mxu0 0.0
      %4653 = vmatprep.subr.mxu0 0.0
      %4654 = vmatpush1.xpose.msra.mxu0 0.0
      %4655 = vmatprep.subr.mxu0 0.0
      %4656 = vmatpush1.xpose.msra.mxu0 0.0
      %4657 = vmatprep.subr.mxu0 0.0
      %4658 = vmatpush1.xpose.msra.mxu0 0.0
      %4659 = vmatprep.subr.mxu0 0.0
      %4660 = vmatpush1.xpose.msra.mxu0 0.0
      %4661 = vmatprep.subr.mxu0 0.0
      %4662 = vmatpush1.xpose.msra.mxu0 0.0
      %4663 = vmatprep.subr.mxu0 0.0
      %4664 = vmatpush1.xpose.msra.mxu0 0.0
      %4665 = vmatprep.subr.mxu0 0.0
      %4666 = vmatpush1.xpose.msra.mxu0 0.0
      %4667 = vmatprep.subr.mxu0 0.0
      %4668 = vmatpush1.xpose.msra.mxu0 0.0
      %4669 = vmatprep.subr.mxu0 0.0
      %4670 = vmatpush1.xpose.msra.mxu0 0.0
      %4671 = vmatprep.subr.mxu0 0.0
      %4672 = vmatpush1.xpose.msra.mxu0 0.0
      %4673 = vmatprep.subr.mxu0 0.0
      %4674 = vmatpush1.xpose.msra.mxu0 0.0
      %4675 = vmatprep.subr.mxu0 0.0
      %4676 = vmatpush1.xpose.msra.mxu0 0.0
      %4677 = vmatprep.subr.mxu0 0.0
      %4678 = vmatpush1.xpose.msra.mxu0 %v4645
      %4679 = vmatprep.subr.mxu0 0.0
      %4680 = vmatpush2.xpose.msra.mxu0 0.0
      %4681 = vmatprep.subr.mxu0 0.0
      %4682 = vmatpush2.xpose.msra.mxu0 0.0
      %4683 = vmatprep.subr.mxu0 0.0
      %4684 = vmatpush2.xpose.msra.mxu0 0.0
      %4685 = vmatprep.subr.mxu0 0.0
      %4686 = vmatpush2.xpose.msra.mxu0 0.0
      %4687 = vmatprep.subr.mxu0 0.0
      %4688 = vmatpush2.xpose.msra.mxu0 0.0
      %4689 = vmatprep.subr.mxu0 0.0
      %4690 = vmatpush2.xpose.msra.mxu0 0.0
      %4691 = vmatprep.subr.mxu0 0.0
      %4692 = vmatpush2.xpose.msra.mxu0 0.0
      %4693 = vmatprep.subr.mxu0 0.0
      %4694 = vmatpush2.xpose.msra.mxu0 0.0
      %4695 = vmatprep.subr.mxu0 0.0
      %4696 = vmatpush2.xpose.msra.mxu0 0.0
      %4697 = vmatprep.subr.mxu0 0.0
      %4698 = vmatpush2.xpose.msra.mxu0 0.0
      %4699 = vmatprep.subr.mxu0 0.0
      %4700 = vmatpush2.xpose.msra.mxu0 0.0
      %4701 = vmatprep.subr.mxu0 0.0
      %4702 = vmatpush2.xpose.msra.mxu0 0.0
      %4703 = vmatprep.subr.mxu0 0.0
      %4704 = vmatpush2.xpose.msra.mxu0 0.0
      %4705 = vmatprep.subr.mxu0 0.0
      %4706 = vmatpush2.xpose.msra.mxu0 0.0
      %4707 = vmatprep.subr.mxu0 0.0
      %4708 = vmatpush2.xpose.msra.mxu0 0.0
      %4709 = vmatprep.subr.mxu0 0.0
      %4710 = vmatpush2.xpose.msra.mxu0 0.0
      %4711 = vmatprep.mubr.f32.mxu0 0.0
      %4712 = vmatmul.mubr.f32.gmra.mxu0 %v4643
      %v4713 = vpop.f32.mrf.mxu0
      %v4714 = vadd.f32 0.0, %v4713
      %v4715 = vpop.f32.mrf.mxu0
      %4716 = vdwg.mxu0
      %4718 = vrot.lane.b32.xlu0 %v4560, 127
      %v4719 = vpop.permute.xlu0 %4718
      %v4721 = vsel %vm4445, %v4502, 0
      %v4723 = vsel %vm4445, %v4719, 0
      %4725 = vmatprep.subr.mxu0 0.0
      %4726 = vmatpush1.xpose.msra.mxu0 0.0
      %4727 = vmatprep.subr.mxu0 0.0
      %4728 = vmatpush1.xpose.msra.mxu0 0.0
      %4729 = vmatprep.subr.mxu0 0.0
      %4730 = vmatpush1.xpose.msra.mxu0 0.0
      %4731 = vmatprep.subr.mxu0 0.0
      %4732 = vmatpush1.xpose.msra.mxu0 0.0
      %4733 = vmatprep.subr.mxu0 0.0
      %4734 = vmatpush1.xpose.msra.mxu0 0.0
      %4735 = vmatprep.subr.mxu0 0.0
      %4736 = vmatpush1.xpose.msra.mxu0 0.0
      %4737 = vmatprep.subr.mxu0 0.0
      %4738 = vmatpush1.xpose.msra.mxu0 0.0
      %4739 = vmatprep.subr.mxu0 0.0
      %4740 = vmatpush1.xpose.msra.mxu0 0.0
      %4741 = vmatprep.subr.mxu0 0.0
      %4742 = vmatpush1.xpose.msra.mxu0 0.0
      %4743 = vmatprep.subr.mxu0 0.0
      %4744 = vmatpush1.xpose.msra.mxu0 0.0
      %4745 = vmatprep.subr.mxu0 0.0
      %4746 = vmatpush1.xpose.msra.mxu0 0.0
      %4747 = vmatprep.subr.mxu0 0.0
      %4748 = vmatpush1.xpose.msra.mxu0 0.0
      %4749 = vmatprep.subr.mxu0 0.0
      %4750 = vmatpush1.xpose.msra.mxu0 0.0
      %4751 = vmatprep.subr.mxu0 0.0
      %4752 = vmatpush1.xpose.msra.mxu0 0.0
      %4753 = vmatprep.subr.mxu0 0.0
      %4754 = vmatpush1.xpose.msra.mxu0 0.0
      %4755 = vmatprep.subr.mxu0 0.0
      %4756 = vmatpush1.xpose.msra.mxu0 %v4723
      %4757 = vmatprep.subr.mxu0 0.0
      %4758 = vmatpush2.xpose.msra.mxu0 0.0
      %4759 = vmatprep.subr.mxu0 0.0
      %4760 = vmatpush2.xpose.msra.mxu0 0.0
      %4761 = vmatprep.subr.mxu0 0.0
      %4762 = vmatpush2.xpose.msra.mxu0 0.0
      %4763 = vmatprep.subr.mxu0 0.0
      %4764 = vmatpush2.xpose.msra.mxu0 0.0
      %4765 = vmatprep.subr.mxu0 0.0
      %4766 = vmatpush2.xpose.msra.mxu0 0.0
      %4767 = vmatprep.subr.mxu0 0.0
      %4768 = vmatpush2.xpose.msra.mxu0 0.0
      %4769 = vmatprep.subr.mxu0 0.0
      %4770 = vmatpush2.xpose.msra.mxu0 0.0
      %4771 = vmatprep.subr.mxu0 0.0
      %4772 = vmatpush2.xpose.msra.mxu0 0.0
      %4773 = vmatprep.subr.mxu0 0.0
      %4774 = vmatpush2.xpose.msra.mxu0 0.0
      %4775 = vmatprep.subr.mxu0 0.0
      %4776 = vmatpush2.xpose.msra.mxu0 0.0
      %4777 = vmatprep.subr.mxu0 0.0
      %4778 = vmatpush2.xpose.msra.mxu0 0.0
      %4779 = vmatprep.subr.mxu0 0.0
      %4780 = vmatpush2.xpose.msra.mxu0 0.0
      %4781 = vmatprep.subr.mxu0 0.0
      %4782 = vmatpush2.xpose.msra.mxu0 0.0
      %4783 = vmatprep.subr.mxu0 0.0
      %4784 = vmatpush2.xpose.msra.mxu0 0.0
      %4785 = vmatprep.subr.mxu0 0.0
      %4786 = vmatpush2.xpose.msra.mxu0 0.0
      %4787 = vmatprep.subr.mxu0 0.0
      %4788 = vmatpush2.xpose.msra.mxu0 0.0
      %4789 = vmatprep.mubr.f32.mxu0 0.0
      %4790 = vmatmul.mubr.f32.gmra.mxu0 %v4721
      %v4791 = vpop.f32.mrf.mxu0
      %v4792 = vadd.f32 0.0, %v4791
      %v4793 = vpop.f32.mrf.mxu0
      %4794 = vdwg.mxu0
      %v4795 = vlaneseq
      %v4796 = vshrl.u32 %v4795, 7
      %v4797 = vlaneseq
      %v4798 = vand.u32 %v4797, 127
      %vm4799 = vcmp.ge.s32.totalorder %v4798, %v4796
      %v4800 = vsel %vm4799, %v4636, 0.0
      %v4801 = vsel %vm4799, %v4714, 0.0
      %v4802 = vsel %vm4799, %v4792, 0.0
      %v4803 = vsel %vm508, %v4800, -inf
      %4804 = vmax.xlane.f32.xlu0 %v4803
      %v4805 = vpop.xlane.xlu0 %4804
      %v4806 = vsel %vm508, %v4801, -inf
      %4807 = vmax.xlane.f32.xlu0 %v4806
      %v4808 = vpop.xlane.xlu0 %4807
      %v4809 = vsel %vm508, %v4802, -inf
      %4810 = vmax.xlane.f32.xlu0 %v4809
      %v4811 = vpop.xlane.xlu0 %4810
      %v4812 = vrot.slane %v4805, 4
      %v4813 = vmax.f32 %v4805, %v4812
      %v4814 = vrot.slane %v4813, 2
      %v4815 = vmax.f32 %v4813, %v4814
      %v4816 = vrot.slane %v4815, 1
      %v4817 = vmax.f32 %v4815, %v4816
      %v4818 = vrot.slane %v4808, 4
      %v4819 = vmax.f32 %v4808, %v4818
      %v4820 = vrot.slane %v4819, 2
      %v4821 = vmax.f32 %v4819, %v4820
      %v4822 = vrot.slane %v4821, 1
      %v4823 = vmax.f32 %v4821, %v4822
      %v4824 = vrot.slane %v4811, 4
      %v4825 = vmax.f32 %v4811, %v4824
      %v4826 = vrot.slane %v4825, 2
      %v4827 = vmax.f32 %v4825, %v4826
      %v4828 = vrot.slane %v4827, 1
      %v4829 = vmax.f32 %v4827, %v4828
      %v4830 = vmul.u32 %v4796, 8
      %v4831 = vadd.s32 %v4830, %v4798
      %vm4832 = vcmp.ge.f32.partialorder %v4800, %v4817
      %vm4833 = vcmp.ge.f32.partialorder %v4801, %v4823
      %vm4834 = vcmp.ge.f32.partialorder %v4802, %v4829
      %v4835 = vsel %vm4832, %v4831, 64
      %v4836 = vsel %vm4833, %v4831, 64
      %v4837 = vsel %vm4834, %v4831, 64
      %v4838 = vsel %vm508, %v4835, 2147483647
      %v4839 = vand.u32 %v4838, 65535
      %v4840 = vshra.s32 %v4838, 16
      %v4841 = vcvt.s32.f32 %v4839
      %v4842 = vcvt.s32.f32 %v4840
      %4843 = vmin.xlane.f32.xlu0 %v4842
      %v4844 = vpop.xlane.xlu0 %4843
      %vm4845 = vcmp.eq.f32.partialorder %v4842, %v4844
      %v4846 = vsel %vm4845, %v4841, inf
      %4847 = vmin.xlane.f32.xlu0 %v4846
      %v4848 = vpop.xlane.xlu0 %4847
      %v4849 = vcvt.f32.s32 %v4848
      %v4850 = vcvt.f32.s32 %v4844
      %v4851 = vshll.u32 %v4850, 16
      %v4852 = vadd.s32 %v4851, %v4849
      %v4853 = vsel %vm508, %v4836, 2147483647
      %v4854 = vand.u32 %v4853, 65535
      %v4855 = vshra.s32 %v4853, 16
      %v4856 = vcvt.s32.f32 %v4854
      %v4857 = vcvt.s32.f32 %v4855
      %4858 = vmin.xlane.f32.xlu0 %v4857
      %v4859 = vpop.xlane.xlu0 %4858
      %vm4860 = vcmp.eq.f32.partialorder %v4857, %v4859
      %v4861 = vsel %vm4860, %v4856, inf
      %4862 = vmin.xlane.f32.xlu0 %v4861
      %v4863 = vpop.xlane.xlu0 %4862
      %v4864 = vcvt.f32.s32 %v4863
      %v4865 = vcvt.f32.s32 %v4859
      %v4866 = vshll.u32 %v4865, 16
      %v4867 = vadd.s32 %v4866, %v4864
      %v4868 = vsel %vm508, %v4837, 2147483647
      %v4869 = vand.u32 %v4868, 65535
      %v4870 = vshra.s32 %v4868, 16
      %v4871 = vcvt.s32.f32 %v4869
      %v4872 = vcvt.s32.f32 %v4870
      %4873 = vmin.xlane.f32.xlu0 %v4872
      %v4874 = vpop.xlane.xlu0 %4873
      %vm4875 = vcmp.eq.f32.partialorder %v4872, %v4874
      %v4876 = vsel %vm4875, %v4871, inf
      %4877 = vmin.xlane.f32.xlu0 %v4876
      %v4878 = vpop.xlane.xlu0 %4877
      %v4879 = vcvt.f32.s32 %v4878
      %v4880 = vcvt.f32.s32 %v4874
      %v4881 = vshll.u32 %v4880, 16
      %v4882 = vadd.s32 %v4881, %v4879
      %v4883 = vrot.slane %v4852, 4
      %vm4884 = vcmp.lt.s32.totalorder %v4852, %v4883
      %v4885 = vsel %vm4884, %v4852, %v4883
      %v4886 = vrot.slane %v4885, 2
      %vm4887 = vcmp.lt.s32.totalorder %v4885, %v4886
      %v4888 = vsel %vm4887, %v4885, %v4886
      %v4889 = vrot.slane %v4888, 1
      %vm4890 = vcmp.lt.s32.totalorder %v4888, %v4889
      %v4891 = vsel %vm4890, %v4888, %v4889
      %v4892 = vrot.slane %v4867, 4
      %vm4893 = vcmp.lt.s32.totalorder %v4867, %v4892
      %v4894 = vsel %vm4893, %v4867, %v4892
      %v4895 = vrot.slane %v4894, 2
      %vm4896 = vcmp.lt.s32.totalorder %v4894, %v4895
      %v4897 = vsel %vm4896, %v4894, %v4895
      %v4898 = vrot.slane %v4897, 1
      %vm4899 = vcmp.lt.s32.totalorder %v4897, %v4898
      %v4900 = vsel %vm4899, %v4897, %v4898
      %v4901 = vrot.slane %v4882, 4
      %vm4902 = vcmp.lt.s32.totalorder %v4882, %v4901
      %v4903 = vsel %vm4902, %v4882, %v4901
      %v4904 = vrot.slane %v4903, 2
      %vm4905 = vcmp.lt.s32.totalorder %v4903, %v4904
      %v4906 = vsel %vm4905, %v4903, %v4904
      %v4907 = vrot.slane %v4906, 1
      %vm4908 = vcmp.lt.s32.totalorder %v4906, %v4907
      %v4909 = vsel %vm4908, %v4906, %v4907
      %vm4910 = vcmask 0
      %4911 = vst.msk [vmem:[%s393] sm:$0x1] %vm4910, %v4817
      %4912 = vst.msk [vmem:[%s393 + $0x1] sm:$0x1] %vm4910, %v4823
      %4913 = vst.msk [vmem:[%s393 + $0x2] sm:$0x1] %vm4910, %v4829
      %4914 = vst.msk [vmem:[%s398] sm:$0x1] %vm4910, %v4891
      %4915 = vst.msk [vmem:[%s398 + $0x1] sm:$0x1] %vm4910, %v4900
      %4916 = vst.msk [vmem:[%s398 + $0x2] sm:$0x1] %vm4910, %v4909
      %s4917 = smul.u32 3, %s23
      %p4918 = scmp.lt.s32.totalorder %s4917, 5
      %s4919 = scalar_select %p4918, %s4917, 5
      %s4920 = scalar_lea.vmem %s10, %s4919
      %s4921 = smul.u32 3, %s23
      %p4922 = scmp.lt.s32.totalorder %s4921, 5
      %s4923 = scalar_select %p4922, %s4921, 5
      %s4924 = scalar_lea.vmem %s11, %s4923
      // Predicated region
      $region61: #{_device_forward.1} parent=59 // pred_check
        %p4925 = pneg %p256
      $region62: #{_device_forward.1} parent=59 // pred_check_branch
        %4927 = sbr.rel (%p4925) target = $region64
      $region63: #{_device_forward.1} parent=59 // pred_region
        %s4928 = smul.u32 3, %s23
      $region64: #{_device_forward.1} parent=59 // pred_fallthru
        _
      // Predicated region
      $region65: #{_device_forward.1} parent=59 // pred_check
        %p4929 = pneg %p282
      $region66: #{_device_forward.1} parent=59 // pred_check_branch
        %4931 = sbr.rel (%p4929) target = $region68
      $region67: #{_device_forward.1} parent=59 // pred_region
        %s4932 = smul.u32 3, %s23
      $region68: #{_device_forward.1} parent=59 // pred_fallthru
        _
    $region60: #{_device_forward.1} parent=5 // pred_fallthru
      _
    %p4933 = scmp.le.s32.totalorder 2, %s18
    // Predicated region
    $region69: #{_device_forward.1} parent=5 // pred_check
      %p4934 = pneg %p4933
    $region70: #{_device_forward.1} parent=5 // pred_check_branch
      %4936 = sbr.rel (%p4934) target = $region72
    $region71: #{_device_forward.1} parent=5 // pred_region
      %s4937 = ssub.s32 %s18, 2
      // Predicated region
      $region73: #{_device_forward.1} parent=71 // pred_check
        %p4938 = pneg %p262
      $region74: #{_device_forward.1} parent=71 // pred_check_branch
        %4940 = sbr.rel (%p4938) target = $region76
      $region75: #{_device_forward.1} parent=71 // pred_region
        %s4941 = smul.u32 3, %s24
        %p4942 = scmp.lt.s32.totalorder %s4941, 5
        %s4943 = scalar_select %p4942, %s4941, 5
        %s4944 = scalar_lea.vmem %s10, %s4943
      $region76: #{_device_forward.1} parent=71 // pred_fallthru
        _
      // Predicated region
      $region77: #{_device_forward.1} parent=71 // pred_check
        %p4945 = pneg %p288
      $region78: #{_device_forward.1} parent=71 // pred_check_branch
        %4947 = sbr.rel (%p4945) target = $region80
      $region79: #{_device_forward.1} parent=71 // pred_region
        %s4948 = smul.u32 3, %s24
        %p4949 = scmp.lt.s32.totalorder %s4948, 5
        %s4950 = scalar_select %p4949, %s4948, 5
        %s4951 = scalar_lea.vmem %s11, %s4950
      $region80: #{_device_forward.1} parent=71 // pred_fallthru
        _
    $region72: #{_device_forward.1} parent=5 // pred_fallthru
      _
  $region6: #{_device_forward.1} parent=0 // loop_footer
    %s22 = sadd.s32 1, %s18
  $region7: #{_device_forward.1} parent=0 // loop_footer_branch
    %17 = sbr.rel target = $region3
  $region8: #{_device_forward.1} parent=0 // loop_exit
    _

</llo_original>
